<compile_context>
chip_gen: v6e
topology: v6e:2x2x1
jax: 0.10.0
libtpu: 0.0.40
codegen_flags: <defaults>
</compile_context>

<pallas_src>
import jax
import jax.numpy as jnp
from jax.experimental import pallas as pl
from jax.experimental.pallas import tpu as pltpu

BN_EPS = 1e-5
TARGET_TILE_ROWS = 2048     # target output pixels (implicit-GEMM rows) per grid step


def _round_up(x, m):
    return (x + m - 1) // m * m


def _cdiv(a, b):
    return -(-a // b)


def _vmem_limit_bytes():
    cap = 64 * 1024 * 1024
    try:
        cap = int(getattr(pltpu.get_tpu_info(), "vmem_capacity_bytes", cap))
    except Exception:
        pass
    # ~5/8 of per-core VMEM: 80 MiB on v5e/v6e, 40 MiB on v7x.
    return max(32 * 1024 * 1024, min(cap * 5 // 8, 96 * 1024 * 1024))


# -------- Pass 1: fused conv (3x3, s2, p1, no bias) + masked BN partial sums ------------
def _conv_stats_kernel(x_ref, xh_ref, w_ref, m_ref, y_ref, sum_ref, sq_ref):
    """x_ref : (1, TOH, 2*QW, 2*Cin) bf16  main row-pair block
       xh_ref: (1, 1,   2*QW, 2*Cin) bf16  halo row-pair (q = (r+1)*TOH)
       w_ref : (6, 2*Cin, OC)        bf16  folded weights, index = kh*2 + col_shift
       m_ref : (TOH*OW_k, 1)         f32   validity mask (1 inside the true OHxOW window)
       y_ref : (1, TOH*OW_k, OC)     bf16  raw conv output tile
       sum_ref/sq_ref: (1, 1, 1, OC) f32   per-tile masked partial sums of y / y^2."""
    toh = x_ref.shape[1]
    qw = x_ref.shape[2] // 2          # width of one column-parity segment
    c2 = x_ref.shape[3]
    oc = w_ref.shape[2]
    rows = y_ref.shape[1]
    ow_k = rows // toh

    acc = jnp.zeros((rows, oc), jnp.float32)
    for kh in range(3):
        p = 1 if kh == 1 else 0       # row parity of this tap
        down = (kh == 2)              # tap reads the next row-pair (q -> q+1)
        for b in range(2):            # b=0: kw in {0,1} (channel-folded); b=1: kw == 2
            s = p * qw + b
            if not down:
                xs = x_ref[0, :, s:s + ow_k, :]
            else:
                bot = xh_ref[0, :, s:s + ow_k, :]
                if toh > 1:
                    top = x_ref[0, 1:toh, s:s + ow_k, :]
                    xs = jnp.concatenate([top, bot], axis=0)
                else:
                    xs = bot
            lhs = xs.reshape(rows, c2)
            acc = acc + jnp.dot(lhs, w_ref[kh * 2 + b],
                                preferred_element_type=jnp.float32)

    y_ref[0] = acc.astype(y_ref.dtype)
    accm = acc * m_ref[...]
    sum_ref[0, 0] = jnp.sum(accm, axis=0, keepdims=True)
    sq_ref[0, 0] = jnp.sum(accm * acc, axis=0, keepdims=True)


# -------- Pass 2 (final layer only): fused BN scale/shift + ReLU ------------------------
def _bn_relu_kernel(y_ref, s_ref, t_ref, o_ref):
    """y_ref: (1, rows, OC) bf16 raw conv; s/t_ref: (1, 1, OC) f32; o_ref: (1, rows, OC)."""
    y = y_ref[0].astype(jnp.float32) * s_ref[0] + t_ref[0]
    o_ref[0] = jnp.maximum(y, 0.0).astype(o_ref.dtype)


def conv_block(x_nhwc, weight, gamma, beta, *, bn_in_pallas):
    """One ConvBlock: conv(k3,s2,p1, bias-free) -> BatchNorm2d (batch stats) -> ReLU.
    x_nhwc: (N, H, W, Cin); weight: (OC, Cin, 3, 3) (PyTorch layout).
    Non-final layers return the BN+ReLU'd activation via XLA glue (which fuses into the
    next layer's pad); the final layer applies BN+ReLU with a Pallas streaming pass."""
    N, H, W, Cin = x_nhwc.shape
    OC = weight.shape[0]
    OH = (H - 1) // 2 + 1
    OW = (W - 1) // 2 + 1

    OW_k = _round_up(OW, 8)                       # 8-aligned output cols per tile row
    toh_cap = max(1, min(OH, TARGET_TILE_ROWS // OW_k))
    R = _cdiv(OH, toh_cap)                        # row-tile count (minimal padding waste)
    TOH = _cdiv(OH, R)
    OH_pad = R * TOH
    QW = OW_k + 1                                 # +1 column-pair for the kw==2 shift
    Qpad = OH_pad + 1                             # +1 row-pair for the kh==2 halo
    Hp, Wp = 2 * Qpad, 2 * QW
    C2 = 2 * Cin
    rows = TOH * OW_k
    grid = (N, R)

    # Glue: zero-pad (conv padding + tile padding) + PURE reshape to the pair layout.
    xp = jnp.pad(x_nhwc.astype(jnp.bfloat16),
                 ((0, 0), (1, Hp - H - 1), (1, Wp - W - 1), (0, 0)))
    xr = xp.reshape(N, Qpad, 2 * QW, C2)

    # Folded weights: (6, 2*Cin, OC), index kh*2 + b.
    w_kc = jnp.transpose(weight.astype(jnp.float32), (2, 3, 1, 0))   # (kh, kw, Cin, OC)
    wb0 = w_kc[:, 0:2].reshape(3, C2, OC)                            # kw in {0,1}
    wb1 = jnp.concatenate([w_kc[:, 2], jnp.zeros((3, Cin, OC), jnp.float32)], axis=1)
    wt = jnp.stack([wb0, wb1], axis=1).reshape(6, C2, OC).astype(jnp.bfloat16)

    # Validity mask over the padded output grid (for the BN partial sums only).
    valid = (jnp.arange(OH_pad) < OH)[:, None] & (jnp.arange(OW_k) < OW)[None, :]
    mask = valid.astype(jnp.float32).reshape(OH_pad * OW_k, 1)

    vmem_limit = _vmem_limit_bytes()
    cost = pl.CostEstimate(
        flops=2 * N * OH_pad * OW_k * (6 * C2) * OC,
        transcendentals=0,
        bytes_accessed=int(xr.size) * 2 + int(wt.size) * 2
        + N * OH_pad * OW_k * OC * 2 + int(mask.size) * 4,
    )
    y_full, psum, psq = pl.pallas_call(
        _conv_stats_kernel,
        out_shape=(
            jax.ShapeDtypeStruct((N, OH_pad * OW_k, OC), jnp.bfloat16),
            jax.ShapeDtypeStruct((N, R, 1, OC), jnp.float32),
            jax.ShapeDtypeStruct((N, R, 1, OC), jnp.float32),
        ),
        grid=grid,
        in_specs=[
            pl.BlockSpec((1, TOH, 2 * QW, C2), lambda n, r: (n, r, 0, 0)),
            pl.BlockSpec((1, 1, 2 * QW, C2), lambda n, r: (n, (r + 1) * TOH, 0, 0)),
            pl.BlockSpec((6, C2, OC), lambda n, r: (0, 0, 0)),      # weights stay resident
            pl.BlockSpec((rows, 1), lambda n, r: (r, 0)),
        ],
        out_specs=(
            pl.BlockSpec((1, rows, OC), lambda n, r: (n, r, 0)),
            pl.BlockSpec((1, 1, 1, OC), lambda n, r: (n, r, 0, 0)),
            pl.BlockSpec((1, 1, 1, OC), lambda n, r: (n, r, 0, 0)),
        ),
        compiler_params=pltpu.CompilerParams(
            dimension_semantics=("parallel", "parallel"),
            vmem_limit_bytes=vmem_limit,
        ),
        cost_estimate=cost,
    )(xr, xr, wt, mask)

    # Glue: global batch statistics (training-mode BN, biased variance) -> affine params.
    # Padded rows/cols were masked out of the sums, so divide by the true count.
    cnt = float(N * OH * OW)
    ssum = jnp.sum(psum, axis=(0, 1, 2))
    ssq = jnp.sum(psq, axis=(0, 1, 2))
    mean = ssum / cnt
    var = jnp.maximum(ssq / cnt - mean * mean, 0.0)
    scale = gamma.astype(jnp.float32) * jax.lax.rsqrt(var + BN_EPS)
    shift = beta.astype(jnp.float32) - mean * scale

    if bn_in_pallas:
        out_full = pl.pallas_call(
            _bn_relu_kernel,
            out_shape=jax.ShapeDtypeStruct((N, OH_pad * OW_k, OC), jnp.float32),
            grid=grid,
            in_specs=[
                pl.BlockSpec((1, rows, OC), lambda n, r: (n, r, 0)),
                pl.BlockSpec((1, 1, OC), lambda n, r: (0, 0, 0)),
                pl.BlockSpec((1, 1, OC), lambda n, r: (0, 0, 0)),
            ],
            out_specs=pl.BlockSpec((1, rows, OC), lambda n, r: (n, r, 0)),
            compiler_params=pltpu.CompilerParams(
                dimension_semantics=("parallel", "parallel"),
                vmem_limit_bytes=vmem_limit,
            ),
        )(y_full, scale.reshape(1, 1, OC), shift.reshape(1, 1, OC))
        return out_full.reshape(N, OH_pad, OW_k, OC)[:, :OH, :OW, :]

    # Non-final layer: apply BN affine + ReLU in XLA glue; it fuses into the next layer's
    # pad/reshape, removing the standalone (M x OC) streaming pass for layers 1 and 2.
    y = y_full.reshape(N, OH_pad, OW_k, OC)[:, :OH, :OW, :]
    y = jnp.maximum(y.astype(jnp.float32) * scale + shift, 0.0)
    return y.astype(jnp.bfloat16)


def init_convblock_params(key, cin, cout, ksize=3):
    """Deterministic init mirroring ConvBlock.__init__:
    kaiming_normal_(a=1) => gain=1, std = 1/sqrt(fan_in); conv bias = 0;
    BatchNorm2d default: gamma = 1, beta = 0."""
    fan_in = cin * ksize * ksize
    std = 1.0 / (fan_in ** 0.5)
    w = jax.random.normal(key, (cout, cin, ksize, ksize), jnp.float32) * std
    b = jnp.zeros((cout,), jnp.float32)   # kept for interface parity; cancelled by BN
    gamma = jnp.ones((cout,), jnp.float32)
    beta = jnp.zeros((cout,), jnp.float32)
    return w, b, gamma, beta


def make_spatial_path_params(key):
    k1, k2, k3 = jax.random.split(key, 3)
    return (
        init_convblock_params(k1, 6, 64),
        init_convblock_params(k2, 64, 128),
        init_convblock_params(k3, 128, 256),
    )


@jax.jit
def spatial_path(x_nchw, params):
    """Spatial_path forward. Input NCHW (PyTorch convention), output NCHW (f32)."""
    x = jnp.transpose(x_nchw, (0, 2, 3, 1))        # NCHW -> NHWC
    n_layers = len(params)
    for li, (w, _b, g, beta) in enumerate(params):
        x = conv_block(x, w, g, beta, bn_in_pallas=(li == n_layers - 1))
    return jnp.transpose(x, (0, 3, 1, 2))          # NHWC -> NCHW


if __name__ == "__main__":
    key = jax.random.PRNGKey(0)
    pkey, xkey = jax.random.split(key)

    params = make_spatial_path_params(pkey)
    # Small input consistent with Spatial_path: 6 input channels, 16x16 spatial, batch 2.
    x = jax.random.normal(xkey, (2, 6, 16, 16), jnp.float32)

    out = jax.block_until_ready(spatial_path(x, params))

    assert out.shape == (2, 256, 2, 2), out.shape
    assert bool(jnp.all(jnp.isfinite(out)))
    assert bool(jnp.all(out >= 0.0))  # ReLU output is non-negative

    print("KERNEL_OK")
</pallas_src>

<mosaic_0001>
module attributes {stable_mosaic.version = 11 : i64} {
  func.func @_conv_stats_kernel(%arg0: i32, %arg1: i32, %arg2: memref<1x8x18x12xbf16, #tpu.memory_space<vmem>>, %arg3: memref<1x1x18x12xbf16, #tpu.memory_space<vmem>>, %arg4: memref<6x12x64xbf16, #tpu.memory_space<vmem>>, %arg5: memref<64x1xf32, #tpu.memory_space<vmem>>, %arg6: memref<1x64x64xbf16, #tpu.memory_space<vmem>>, %arg7: memref<1x1x1x64xf32, #tpu.memory_space<vmem>>, %arg8: memref<1x1x1x64xf32, #tpu.memory_space<vmem>>) attributes {dimension_semantics = [#tpu.dimension_semantics<parallel>, #tpu.dimension_semantics<parallel>], iteration_bounds = array<i64: 2, 1>, scalar_prefetch = 0 : i64, scratch_operands = 0 : i64, tpu.core_type = #tpu.core_type<tc>, window_params = [{transform_indices = @transform_0, window_bounds = array<i64: 1, 8, 18, 12>}, {transform_indices = @transform_1, window_bounds = array<i64: 1, 1, 18, 12>}, {pipeline_mode = #tpu.pipeline_mode<synchronous>, transform_indices = @transform_2, window_bounds = array<i64: 6, 12, 64>}, {transform_indices = @transform_3, window_bounds = array<i64: 64, 1>}, {transform_indices = @transform_4, window_bounds = array<i64: 1, 64, 64>}, {transform_indices = @transform_5, window_bounds = array<i64: 1, 1, 1, 64>}, {transform_indices = @transform_6, window_bounds = array<i64: 1, 1, 1, 64>}]} {
    %cst = arith.constant 0.000000e+00 : f32
    %0 = vector.broadcast %cst : f32 to vector<64x64xf32>
    %c0 = arith.constant 0 : index
    %c0_0 = arith.constant 0 : index
    %c0_1 = arith.constant 0 : index
    %c0_2 = arith.constant 0 : index
    %1 = vector.load %arg2[%c0, %c0_0, %c0_1, %c0_2] : memref<1x8x18x12xbf16, #tpu.memory_space<vmem>>, vector<1x8x8x12xbf16>
    %2 = vector.shape_cast %1 : vector<1x8x8x12xbf16> to vector<8x8x12xbf16>
    %3 = vector.shape_cast %2 : vector<8x8x12xbf16> to vector<64x12xbf16>
    %c0_3 = arith.constant 0 : index
    %c0_4 = arith.constant 0 : index
    %c0_5 = arith.constant 0 : index
    %4 = vector.load %arg4[%c0_3, %c0_4, %c0_5] : memref<6x12x64xbf16, #tpu.memory_space<vmem>>, vector<1x12x64xbf16>
    %5 = vector.shape_cast %4 : vector<1x12x64xbf16> to vector<12x64xbf16>
    %cst_6 = arith.constant dense<0.000000e+00> : vector<64x64xf32>
    %6 = tpu.matmul %3, %5, %cst_6 {dimension_numbers = #tpu.dot_dimension_numbers<[1], [0], [0], [1], [0, 0, 1, 1], [], []>} : vector<64x12xbf16>, vector<12x64xbf16>, vector<64x64xf32> -> vector<64x64xf32>
    %7 = arith.addf %0, %6 : vector<64x64xf32>
    %c0_7 = arith.constant 0 : index
    %c0_8 = arith.constant 0 : index
    %c1 = arith.constant 1 : index
    %c0_9 = arith.constant 0 : index
    %8 = vector.load %arg2[%c0_7, %c0_8, %c1, %c0_9] : memref<1x8x18x12xbf16, #tpu.memory_space<vmem>>, vector<1x8x8x12xbf16>
    %9 = vector.shape_cast %8 : vector<1x8x8x12xbf16> to vector<8x8x12xbf16>
    %10 = vector.shape_cast %9 : vector<8x8x12xbf16> to vector<64x12xbf16>
    %c1_10 = arith.constant 1 : index
    %c0_11 = arith.constant 0 : index
    %c0_12 = arith.constant 0 : index
    %11 = vector.load %arg4[%c1_10, %c0_11, %c0_12] : memref<6x12x64xbf16, #tpu.memory_space<vmem>>, vector<1x12x64xbf16>
    %12 = vector.shape_cast %11 : vector<1x12x64xbf16> to vector<12x64xbf16>
    %cst_13 = arith.constant dense<0.000000e+00> : vector<64x64xf32>
    %13 = tpu.matmul %10, %12, %cst_13 {dimension_numbers = #tpu.dot_dimension_numbers<[1], [0], [0], [1], [0, 0, 1, 1], [], []>} : vector<64x12xbf16>, vector<12x64xbf16>, vector<64x64xf32> -> vector<64x64xf32>
    %14 = arith.addf %7, %13 : vector<64x64xf32>
    %c0_14 = arith.constant 0 : index
    %c0_15 = arith.constant 0 : index
    %c9 = arith.constant 9 : index
    %c0_16 = arith.constant 0 : index
    %15 = vector.load %arg2[%c0_14, %c0_15, %c9, %c0_16] : memref<1x8x18x12xbf16, #tpu.memory_space<vmem>>, vector<1x8x8x12xbf16>
    %16 = vector.shape_cast %15 : vector<1x8x8x12xbf16> to vector<8x8x12xbf16>
    %17 = vector.shape_cast %16 : vector<8x8x12xbf16> to vector<64x12xbf16>
    %c2 = arith.constant 2 : index
    %c0_17 = arith.constant 0 : index
    %c0_18 = arith.constant 0 : index
    %18 = vector.load %arg4[%c2, %c0_17, %c0_18] : memref<6x12x64xbf16, #tpu.memory_space<vmem>>, vector<1x12x64xbf16>
    %19 = vector.shape_cast %18 : vector<1x12x64xbf16> to vector<12x64xbf16>
    %cst_19 = arith.constant dense<0.000000e+00> : vector<64x64xf32>
    %20 = tpu.matmul %17, %19, %cst_19 {dimension_numbers = #tpu.dot_dimension_numbers<[1], [0], [0], [1], [0, 0, 1, 1], [], []>} : vector<64x12xbf16>, vector<12x64xbf16>, vector<64x64xf32> -> vector<64x64xf32>
    %21 = arith.addf %14, %20 : vector<64x64xf32>
    %c0_20 = arith.constant 0 : index
    %c0_21 = arith.constant 0 : index
    %c10 = arith.constant 10 : index
    %c0_22 = arith.constant 0 : index
    %22 = vector.load %arg2[%c0_20, %c0_21, %c10, %c0_22] : memref<1x8x18x12xbf16, #tpu.memory_space<vmem>>, vector<1x8x8x12xbf16>
    %23 = vector.shape_cast %22 : vector<1x8x8x12xbf16> to vector<8x8x12xbf16>
    %24 = vector.shape_cast %23 : vector<8x8x12xbf16> to vector<64x12xbf16>
    %c3 = arith.constant 3 : index
    %c0_23 = arith.constant 0 : index
    %c0_24 = arith.constant 0 : index
    %25 = vector.load %arg4[%c3, %c0_23, %c0_24] : memref<6x12x64xbf16, #tpu.memory_space<vmem>>, vector<1x12x64xbf16>
    %26 = vector.shape_cast %25 : vector<1x12x64xbf16> to vector<12x64xbf16>
    %cst_25 = arith.constant dense<0.000000e+00> : vector<64x64xf32>
    %27 = tpu.matmul %24, %26, %cst_25 {dimension_numbers = #tpu.dot_dimension_numbers<[1], [0], [0], [1], [0, 0, 1, 1], [], []>} : vector<64x12xbf16>, vector<12x64xbf16>, vector<64x64xf32> -> vector<64x64xf32>
    %28 = arith.addf %21, %27 : vector<64x64xf32>
    %c0_26 = arith.constant 0 : index
    %c0_27 = arith.constant 0 : index
    %c0_28 = arith.constant 0 : index
    %c0_29 = arith.constant 0 : index
    %29 = vector.load %arg3[%c0_26, %c0_27, %c0_28, %c0_29] : memref<1x1x18x12xbf16, #tpu.memory_space<vmem>>, vector<1x1x8x12xbf16>
    %30 = vector.shape_cast %29 : vector<1x1x8x12xbf16> to vector<1x8x12xbf16>
    %c0_30 = arith.constant 0 : index
    %c1_31 = arith.constant 1 : index
    %c0_32 = arith.constant 0 : index
    %c0_33 = arith.constant 0 : index
    %31 = vector.load %arg2[%c0_30, %c1_31, %c0_32, %c0_33] : memref<1x8x18x12xbf16, #tpu.memory_space<vmem>>, vector<1x7x8x12xbf16>
    %32 = vector.shape_cast %31 : vector<1x7x8x12xbf16> to vector<7x8x12xbf16>
    %33 = tpu.concatenate %32, %30 in 0 : vector<7x8x12xbf16>, vector<1x8x12xbf16> -> vector<8x8x12xbf16>
    %34 = vector.shape_cast %33 : vector<8x8x12xbf16> to vector<64x12xbf16>
    %c4 = arith.constant 4 : index
    %c0_34 = arith.constant 0 : index
    %c0_35 = arith.constant 0 : index
    %35 = vector.load %arg4[%c4, %c0_34, %c0_35] : memref<6x12x64xbf16, #tpu.memory_space<vmem>>, vector<1x12x64xbf16>
    %36 = vector.shape_cast %35 : vector<1x12x64xbf16> to vector<12x64xbf16>
    %cst_36 = arith.constant dense<0.000000e+00> : vector<64x64xf32>
    %37 = tpu.matmul %34, %36, %cst_36 {dimension_numbers = #tpu.dot_dimension_numbers<[1], [0], [0], [1], [0, 0, 1, 1], [], []>} : vector<64x12xbf16>, vector<12x64xbf16>, vector<64x64xf32> -> vector<64x64xf32>
    %38 = arith.addf %28, %37 : vector<64x64xf32>
    %c0_37 = arith.constant 0 : index
    %c0_38 = arith.constant 0 : index
    %c1_39 = arith.constant 1 : index
    %c0_40 = arith.constant 0 : index
    %39 = vector.load %arg3[%c0_37, %c0_38, %c1_39, %c0_40] : memref<1x1x18x12xbf16, #tpu.memory_space<vmem>>, vector<1x1x8x12xbf16>
    %40 = vector.shape_cast %39 : vector<1x1x8x12xbf16> to vector<1x8x12xbf16>
    %c0_41 = arith.constant 0 : index
    %c1_42 = arith.constant 1 : index
    %c1_43 = arith.constant 1 : index
    %c0_44 = arith.constant 0 : index
    %41 = vector.load %arg2[%c0_41, %c1_42, %c1_43, %c0_44] : memref<1x8x18x12xbf16, #tpu.memory_space<vmem>>, vector<1x7x8x12xbf16>
    %42 = vector.shape_cast %41 : vector<1x7x8x12xbf16> to vector<7x8x12xbf16>
    %43 = tpu.concatenate %42, %40 in 0 : vector<7x8x12xbf16>, vector<1x8x12xbf16> -> vector<8x8x12xbf16>
    %44 = vector.shape_cast %43 : vector<8x8x12xbf16> to vector<64x12xbf16>
    %c5 = arith.constant 5 : index
    %c0_45 = arith.constant 0 : index
    %c0_46 = arith.constant 0 : index
    %45 = vector.load %arg4[%c5, %c0_45, %c0_46] : memref<6x12x64xbf16, #tpu.memory_space<vmem>>, vector<1x12x64xbf16>
    %46 = vector.shape_cast %45 : vector<1x12x64xbf16> to vector<12x64xbf16>
    %cst_47 = arith.constant dense<0.000000e+00> : vector<64x64xf32>
    %47 = tpu.matmul %44, %46, %cst_47 {dimension_numbers = #tpu.dot_dimension_numbers<[1], [0], [0], [1], [0, 0, 1, 1], [], []>} : vector<64x12xbf16>, vector<12x64xbf16>, vector<64x64xf32> -> vector<64x64xf32>
    %48 = arith.addf %38, %47 : vector<64x64xf32>
    %49 = arith.truncf %48 : vector<64x64xf32> to vector<64x64xbf16>
    %c0_48 = arith.constant 0 : index
    %c0_49 = arith.constant 0 : index
    %c0_50 = arith.constant 0 : index
    %50 = vector.load %arg6[%c0_48, %c0_49, %c0_50] : memref<1x64x64xbf16, #tpu.memory_space<vmem>>, vector<1x64x64xbf16>
    %51 = vector.shape_cast %50 : vector<1x64x64xbf16> to vector<64x64xbf16>
    %52 = vector.shape_cast %49 : vector<64x64xbf16> to vector<1x64x64xbf16>
    tpu.vector_store %arg6[%c0_48, %c0_49, %c0_50], %52 {strides = array<i32>} : memref<1x64x64xbf16, #tpu.memory_space<vmem>>, vector<1x64x64xbf16>,
    %c0_51 = arith.constant 0 : index
    %c0_52 = arith.constant 0 : index
    %53 = vector.load %arg5[%c0_51, %c0_52] : memref<64x1xf32, #tpu.memory_space<vmem>>, vector<64x1xf32>
    %54 = vector.broadcast %53 : vector<64x1xf32> to vector<64x64xf32>
    %55 = arith.mulf %48, %54 : vector<64x64xf32>
    %cst_53 = arith.constant dense<0.000000e+00> : vector<64xf32>
    %56 = vector.multi_reduction <add>, %55, %cst_53 [0] : vector<64x64xf32> to vector<64xf32>
    %57 = vector.shape_cast %56 : vector<64xf32> to vector<1x64xf32>
    %c0_54 = arith.constant 0 : index
    %c0_55 = arith.constant 0 : index
    %c0_56 = arith.constant 0 : index
    %c0_57 = arith.constant 0 : index
    %58 = vector.load %arg7[%c0_54, %c0_55, %c0_56, %c0_57] : memref<1x1x1x64xf32, #tpu.memory_space<vmem>>, vector<1x1x1x64xf32>
    %59 = vector.shape_cast %58 : vector<1x1x1x64xf32> to vector<1x64xf32>
    %60 = vector.shape_cast %57 : vector<1x64xf32> to vector<1x1x1x64xf32>
    tpu.vector_store %arg7[%c0_54, %c0_55, %c0_56, %c0_57], %60 {strides = array<i32>} : memref<1x1x1x64xf32, #tpu.memory_space<vmem>>, vector<1x1x1x64xf32>,
    %61 = arith.mulf %55, %48 : vector<64x64xf32>
    %cst_58 = arith.constant dense<0.000000e+00> : vector<64xf32>
    %62 = vector.multi_reduction <add>, %61, %cst_58 [0] : vector<64x64xf32> to vector<64xf32>
    %63 = vector.shape_cast %62 : vector<64xf32> to vector<1x64xf32>
    %c0_59 = arith.constant 0 : index
    %c0_60 = arith.constant 0 : index
    %c0_61 = arith.constant 0 : index
    %c0_62 = arith.constant 0 : index
    %64 = vector.load %arg8[%c0_59, %c0_60, %c0_61, %c0_62] : memref<1x1x1x64xf32, #tpu.memory_space<vmem>>, vector<1x1x1x64xf32>
    %65 = vector.shape_cast %64 : vector<1x1x1x64xf32> to vector<1x64xf32>
    %66 = vector.shape_cast %63 : vector<1x64xf32> to vector<1x1x1x64xf32>
    tpu.vector_store %arg8[%c0_59, %c0_60, %c0_61, %c0_62], %66 {strides = array<i32>} : memref<1x1x1x64xf32, #tpu.memory_space<vmem>>, vector<1x1x1x64xf32>,
    return
  }
  func.func @transform_0(%arg0: i32, %arg1: i32) -> (i32, i32, i32, i32) {
    %c0_i32 = arith.constant 0 : i32
    %c0_i32_0 = arith.constant 0 : i32
    %c0_i32_1 = arith.constant 0 : i32
    return %arg0, %arg1, %c0_i32, %c0_i32_0 : i32, i32, i32, i32
  }
  func.func @transform_1(%arg0: i32, %arg1: i32) -> (i32, i32, i32, i32) {
    %c1_i32 = arith.constant 1 : i32
    %0 = arith.addi %arg1, %c1_i32 : i32
    %c8_i32 = arith.constant 8 : i32
    %1 = arith.muli %0, %c8_i32 : i32
    %c0_i32 = arith.constant 0 : i32
    %c0_i32_0 = arith.constant 0 : i32
    %c0_i32_1 = arith.constant 0 : i32
    return %arg0, %1, %c0_i32, %c0_i32_0 : i32, i32, i32, i32
  }
  func.func @transform_2(%arg0: i32, %arg1: i32) -> (i32, i32, i32) {
    %c0_i32 = arith.constant 0 : i32
    %c0_i32_0 = arith.constant 0 : i32
    %c0_i32_1 = arith.constant 0 : i32
    %c0_i32_2 = arith.constant 0 : i32
    return %c0_i32, %c0_i32_0, %c0_i32_1 : i32, i32, i32
  }
  func.func @transform_3(%arg0: i32, %arg1: i32) -> (i32, i32) {
    %c0_i32 = arith.constant 0 : i32
    %c0_i32_0 = arith.constant 0 : i32
    return %arg1, %c0_i32 : i32, i32
  }
  func.func @transform_4(%arg0: i32, %arg1: i32) -> (i32, i32, i32) {
    %c0_i32 = arith.constant 0 : i32
    %c0_i32_0 = arith.constant 0 : i32
    return %arg0, %arg1, %c0_i32 : i32, i32, i32
  }
  func.func @transform_5(%arg0: i32, %arg1: i32) -> (i32, i32, i32, i32) {
    %c0_i32 = arith.constant 0 : i32
    %c0_i32_0 = arith.constant 0 : i32
    %c0_i32_1 = arith.constant 0 : i32
    return %arg0, %arg1, %c0_i32, %c0_i32_0 : i32, i32, i32, i32
  }
  func.func @transform_6(%arg0: i32, %arg1: i32) -> (i32, i32, i32, i32) {
    %c0_i32 = arith.constant 0 : i32
    %c0_i32_0 = arith.constant 0 : i32
    %c0_i32_1 = arith.constant 0 : i32
    return %arg0, %arg1, %c0_i32, %c0_i32_0 : i32, i32, i32, i32
  }
}

module attributes {stable_mosaic.version = 11 : i64} {
  func.func @_conv_stats_kernel(%arg0: i32, %arg1: i32, %arg2: memref<1x4x18x128xbf16, #tpu.memory_space<vmem>>, %arg3: memref<1x1x18x128xbf16, #tpu.memory_space<vmem>>, %arg4: memref<6x128x128xbf16, #tpu.memory_space<vmem>>, %arg5: memref<32x1xf32, #tpu.memory_space<vmem>>, %arg6: memref<1x32x128xbf16, #tpu.memory_space<vmem>>, %arg7: memref<1x1x1x128xf32, #tpu.memory_space<vmem>>, %arg8: memref<1x1x1x128xf32, #tpu.memory_space<vmem>>) attributes {dimension_semantics = [#tpu.dimension_semantics<parallel>, #tpu.dimension_semantics<parallel>], iteration_bounds = array<i64: 2, 1>, scalar_prefetch = 0 : i64, scratch_operands = 0 : i64, tpu.core_type = #tpu.core_type<tc>, window_params = [{transform_indices = @transform_0, window_bounds = array<i64: 1, 4, 18, 128>}, {transform_indices = @transform_1, window_bounds = array<i64: 1, 1, 18, 128>}, {pipeline_mode = #tpu.pipeline_mode<synchronous>, transform_indices = @transform_2, window_bounds = array<i64: 6, 128, 128>}, {transform_indices = @transform_3, window_bounds = array<i64: 32, 1>}, {transform_indices = @transform_4, window_bounds = array<i64: 1, 32, 128>}, {transform_indices = @transform_5, window_bounds = array<i64: 1, 1, 1, 128>}, {transform_indices = @transform_6, window_bounds = array<i64: 1, 1, 1, 128>}]} {
    %cst = arith.constant 0.000000e+00 : f32
    %0 = vector.broadcast %cst : f32 to vector<32x128xf32>
    %c0 = arith.constant 0 : index
    %c0_0 = arith.constant 0 : index
    %c0_1 = arith.constant 0 : index
    %c0_2 = arith.constant 0 : index
    %1 = vector.load %arg2[%c0, %c0_0, %c0_1, %c0_2] : memref<1x4x18x128xbf16, #tpu.memory_space<vmem>>, vector<1x4x8x128xbf16>
    %2 = vector.shape_cast %1 : vector<1x4x8x128xbf16> to vector<4x8x128xbf16>
    %3 = vector.shape_cast %2 : vector<4x8x128xbf16> to vector<32x128xbf16>
    %c0_3 = arith.constant 0 : index
    %c0_4 = arith.constant 0 : index
    %c0_5 = arith.constant 0 : index
    %4 = vector.load %arg4[%c0_3, %c0_4, %c0_5] : memref<6x128x128xbf16, #tpu.memory_space<vmem>>, vector<1x128x128xbf16>
    %5 = vector.shape_cast %4 : vector<1x128x128xbf16> to vector<128x128xbf16>
    %cst_6 = arith.constant dense<0.000000e+00> : vector<32x128xf32>
    %6 = tpu.matmul %3, %5, %cst_6 {dimension_numbers = #tpu.dot_dimension_numbers<[1], [0], [0], [1], [0, 0, 1, 1], [], []>} : vector<32x128xbf16>, vector<128x128xbf16>, vector<32x128xf32> -> vector<32x128xf32>
    %7 = arith.addf %0, %6 : vector<32x128xf32>
    %c0_7 = arith.constant 0 : index
    %c0_8 = arith.constant 0 : index
    %c1 = arith.constant 1 : index
    %c0_9 = arith.constant 0 : index
    %8 = vector.load %arg2[%c0_7, %c0_8, %c1, %c0_9] : memref<1x4x18x128xbf16, #tpu.memory_space<vmem>>, vector<1x4x8x128xbf16>
    %9 = vector.shape_cast %8 : vector<1x4x8x128xbf16> to vector<4x8x128xbf16>
    %10 = vector.shape_cast %9 : vector<4x8x128xbf16> to vector<32x128xbf16>
    %c1_10 = arith.constant 1 : index
    %c0_11 = arith.constant 0 : index
    %c0_12 = arith.constant 0 : index
    %11 = vector.load %arg4[%c1_10, %c0_11, %c0_12] : memref<6x128x128xbf16, #tpu.memory_space<vmem>>, vector<1x128x128xbf16>
    %12 = vector.shape_cast %11 : vector<1x128x128xbf16> to vector<128x128xbf16>
    %cst_13 = arith.constant dense<0.000000e+00> : vector<32x128xf32>
    %13 = tpu.matmul %10, %12, %cst_13 {dimension_numbers = #tpu.dot_dimension_numbers<[1], [0], [0], [1], [0, 0, 1, 1], [], []>} : vector<32x128xbf16>, vector<128x128xbf16>, vector<32x128xf32> -> vector<32x128xf32>
    %14 = arith.addf %7, %13 : vector<32x128xf32>
    %c0_14 = arith.constant 0 : index
    %c0_15 = arith.constant 0 : index
    %c9 = arith.constant 9 : index
    %c0_16 = arith.constant 0 : index
    %15 = vector.load %arg2[%c0_14, %c0_15, %c9, %c0_16] : memref<1x4x18x128xbf16, #tpu.memory_space<vmem>>, vector<1x4x8x128xbf16>
    %16 = vector.shape_cast %15 : vector<1x4x8x128xbf16> to vector<4x8x128xbf16>
    %17 = vector.shape_cast %16 : vector<4x8x128xbf16> to vector<32x128xbf16>
    %c2 = arith.constant 2 : index
    %c0_17 = arith.constant 0 : index
    %c0_18 = arith.constant 0 : index
    %18 = vector.load %arg4[%c2, %c0_17, %c0_18] : memref<6x128x128xbf16, #tpu.memory_space<vmem>>, vector<1x128x128xbf16>
    %19 = vector.shape_cast %18 : vector<1x128x128xbf16> to vector<128x128xbf16>
    %cst_19 = arith.constant dense<0.000000e+00> : vector<32x128xf32>
    %20 = tpu.matmul %17, %19, %cst_19 {dimension_numbers = #tpu.dot_dimension_numbers<[1], [0], [0], [1], [0, 0, 1, 1], [], []>} : vector<32x128xbf16>, vector<128x128xbf16>, vector<32x128xf32> -> vector<32x128xf32>
    %21 = arith.addf %14, %20 : vector<32x128xf32>
    %c0_20 = arith.constant 0 : index
    %c0_21 = arith.constant 0 : index
    %c10 = arith.constant 10 : index
    %c0_22 = arith.constant 0 : index
    %22 = vector.load %arg2[%c0_20, %c0_21, %c10, %c0_22] : memref<1x4x18x128xbf16, #tpu.memory_space<vmem>>, vector<1x4x8x128xbf16>
    %23 = vector.shape_cast %22 : vector<1x4x8x128xbf16> to vector<4x8x128xbf16>
    %24 = vector.shape_cast %23 : vector<4x8x128xbf16> to vector<32x128xbf16>
    %c3 = arith.constant 3 : index
    %c0_23 = arith.constant 0 : index
    %c0_24 = arith.constant 0 : index
    %25 = vector.load %arg4[%c3, %c0_23, %c0_24] : memref<6x128x128xbf16, #tpu.memory_space<vmem>>, vector<1x128x128xbf16>
    %26 = vector.shape_cast %25 : vector<1x128x128xbf16> to vector<128x128xbf16>
    %cst_25 = arith.constant dense<0.000000e+00> : vector<32x128xf32>
    %27 = tpu.matmul %24, %26, %cst_25 {dimension_numbers = #tpu.dot_dimension_numbers<[1], [0], [0], [1], [0, 0, 1, 1], [], []>} : vector<32x128xbf16>, vector<128x128xbf16>, vector<32x128xf32> -> vector<32x128xf32>
    %28 = arith.addf %21, %27 : vector<32x128xf32>
    %c0_26 = arith.constant 0 : index
    %c0_27 = arith.constant 0 : index
    %c0_28 = arith.constant 0 : index
    %c0_29 = arith.constant 0 : index
    %29 = vector.load %arg3[%c0_26, %c0_27, %c0_28, %c0_29] : memref<1x1x18x128xbf16, #tpu.memory_space<vmem>>, vector<1x1x8x128xbf16>
    %30 = vector.shape_cast %29 : vector<1x1x8x128xbf16> to vector<1x8x128xbf16>
    %c0_30 = arith.constant 0 : index
    %c1_31 = arith.constant 1 : index
    %c0_32 = arith.constant 0 : index
    %c0_33 = arith.constant 0 : index
    %31 = vector.load %arg2[%c0_30, %c1_31, %c0_32, %c0_33] : memref<1x4x18x128xbf16, #tpu.memory_space<vmem>>, vector<1x3x8x128xbf16>
    %32 = vector.shape_cast %31 : vector<1x3x8x128xbf16> to vector<3x8x128xbf16>
    %33 = tpu.concatenate %32, %30 in 0 : vector<3x8x128xbf16>, vector<1x8x128xbf16> -> vector<4x8x128xbf16>
    %34 = vector.shape_cast %33 : vector<4x8x128xbf16> to vector<32x128xbf16>
    %c4 = arith.constant 4 : index
    %c0_34 = arith.constant 0 : index
    %c0_35 = arith.constant 0 : index
    %35 = vector.load %arg4[%c4, %c0_34, %c0_35] : memref<6x128x128xbf16, #tpu.memory_space<vmem>>, vector<1x128x128xbf16>
    %36 = vector.shape_cast %35 : vector<1x128x128xbf16> to vector<128x128xbf16>
    %cst_36 = arith.constant dense<0.000000e+00> : vector<32x128xf32>
    %37 = tpu.matmul %34, %36, %cst_36 {dimension_numbers = #tpu.dot_dimension_numbers<[1], [0], [0], [1], [0, 0, 1, 1], [], []>} : vector<32x128xbf16>, vector<128x128xbf16>, vector<32x128xf32> -> vector<32x128xf32>
    %38 = arith.addf %28, %37 : vector<32x128xf32>
    %c0_37 = arith.constant 0 : index
    %c0_38 = arith.constant 0 : index
    %c1_39 = arith.constant 1 : index
    %c0_40 = arith.constant 0 : index
    %39 = vector.load %arg3[%c0_37, %c0_38, %c1_39, %c0_40] : memref<1x1x18x128xbf16, #tpu.memory_space<vmem>>, vector<1x1x8x128xbf16>
    %40 = vector.shape_cast %39 : vector<1x1x8x128xbf16> to vector<1x8x128xbf16>
    %c0_41 = arith.constant 0 : index
    %c1_42 = arith.constant 1 : index
    %c1_43 = arith.constant 1 : index
    %c0_44 = arith.constant 0 : index
    %41 = vector.load %arg2[%c0_41, %c1_42, %c1_43, %c0_44] : memref<1x4x18x128xbf16, #tpu.memory_space<vmem>>, vector<1x3x8x128xbf16>
    %42 = vector.shape_cast %41 : vector<1x3x8x128xbf16> to vector<3x8x128xbf16>
    %43 = tpu.concatenate %42, %40 in 0 : vector<3x8x128xbf16>, vector<1x8x128xbf16> -> vector<4x8x128xbf16>
    %44 = vector.shape_cast %43 : vector<4x8x128xbf16> to vector<32x128xbf16>
    %c5 = arith.constant 5 : index
    %c0_45 = arith.constant 0 : index
    %c0_46 = arith.constant 0 : index
    %45 = vector.load %arg4[%c5, %c0_45, %c0_46] : memref<6x128x128xbf16, #tpu.memory_space<vmem>>, vector<1x128x128xbf16>
    %46 = vector.shape_cast %45 : vector<1x128x128xbf16> to vector<128x128xbf16>
    %cst_47 = arith.constant dense<0.000000e+00> : vector<32x128xf32>
    %47 = tpu.matmul %44, %46, %cst_47 {dimension_numbers = #tpu.dot_dimension_numbers<[1], [0], [0], [1], [0, 0, 1, 1], [], []>} : vector<32x128xbf16>, vector<128x128xbf16>, vector<32x128xf32> -> vector<32x128xf32>
    %48 = arith.addf %38, %47 : vector<32x128xf32>
    %49 = arith.truncf %48 : vector<32x128xf32> to vector<32x128xbf16>
    %c0_48 = arith.constant 0 : index
    %c0_49 = arith.constant 0 : index
    %c0_50 = arith.constant 0 : index
    %50 = vector.load %arg6[%c0_48, %c0_49, %c0_50] : memref<1x32x128xbf16, #tpu.memory_space<vmem>>, vector<1x32x128xbf16>
    %51 = vector.shape_cast %50 : vector<1x32x128xbf16> to vector<32x128xbf16>
    %52 = vector.shape_cast %49 : vector<32x128xbf16> to vector<1x32x128xbf16>
    tpu.vector_store %arg6[%c0_48, %c0_49, %c0_50], %52 {strides = array<i32>} : memref<1x32x128xbf16, #tpu.memory_space<vmem>>, vector<1x32x128xbf16>,
    %c0_51 = arith.constant 0 : index
    %c0_52 = arith.constant 0 : index
    %53 = vector.load %arg5[%c0_51, %c0_52] : memref<32x1xf32, #tpu.memory_space<vmem>>, vector<32x1xf32>
    %54 = vector.broadcast %53 : vector<32x1xf32> to vector<32x128xf32>
    %55 = arith.mulf %48, %54 : vector<32x128xf32>
    %cst_53 = arith.constant dense<0.000000e+00> : vector<128xf32>
    %56 = vector.multi_reduction <add>, %55, %cst_53 [0] : vector<32x128xf32> to vector<128xf32>
    %57 = vector.shape_cast %56 : vector<128xf32> to vector<1x128xf32>
    %c0_54 = arith.constant 0 : index
    %c0_55 = arith.constant 0 : index
    %c0_56 = arith.constant 0 : index
    %c0_57 = arith.constant 0 : index
    %58 = vector.load %arg7[%c0_54, %c0_55, %c0_56, %c0_57] : memref<1x1x1x128xf32, #tpu.memory_space<vmem>>, vector<1x1x1x128xf32>
    %59 = vector.shape_cast %58 : vector<1x1x1x128xf32> to vector<1x128xf32>
    %60 = vector.shape_cast %57 : vector<1x128xf32> to vector<1x1x1x128xf32>
    tpu.vector_store %arg7[%c0_54, %c0_55, %c0_56, %c0_57], %60 {strides = array<i32>} : memref<1x1x1x128xf32, #tpu.memory_space<vmem>>, vector<1x1x1x128xf32>,
    %61 = arith.mulf %55, %48 : vector<32x128xf32>
    %cst_58 = arith.constant dense<0.000000e+00> : vector<128xf32>
    %62 = vector.multi_reduction <add>, %61, %cst_58 [0] : vector<32x128xf32> to vector<128xf32>
    %63 = vector.shape_cast %62 : vector<128xf32> to vector<1x128xf32>
    %c0_59 = arith.constant 0 : index
    %c0_60 = arith.constant 0 : index
    %c0_61 = arith.constant 0 : index
    %c0_62 = arith.constant 0 : index
    %64 = vector.load %arg8[%c0_59, %c0_60, %c0_61, %c0_62] : memref<1x1x1x128xf32, #tpu.memory_space<vmem>>, vector<1x1x1x128xf32>
    %65 = vector.shape_cast %64 : vector<1x1x1x128xf32> to vector<1x128xf32>
    %66 = vector.shape_cast %63 : vector<1x128xf32> to vector<1x1x1x128xf32>
    tpu.vector_store %arg8[%c0_59, %c0_60, %c0_61, %c0_62], %66 {strides = array<i32>} : memref<1x1x1x128xf32, #tpu.memory_space<vmem>>, vector<1x1x1x128xf32>,
    return
  }
  func.func @transform_0(%arg0: i32, %arg1: i32) -> (i32, i32, i32, i32) {
    %c0_i32 = arith.constant 0 : i32
    %c0_i32_0 = arith.constant 0 : i32
    %c0_i32_1 = arith.constant 0 : i32
    return %arg0, %arg1, %c0_i32, %c0_i32_0 : i32, i32, i32, i32
  }
  func.func @transform_1(%arg0: i32, %arg1: i32) -> (i32, i32, i32, i32) {
    %c1_i32 = arith.constant 1 : i32
    %0 = arith.addi %arg1, %c1_i32 : i32
    %c4_i32 = arith.constant 4 : i32
    %1 = arith.muli %0, %c4_i32 : i32
    %c0_i32 = arith.constant 0 : i32
    %c0_i32_0 = arith.constant 0 : i32
    %c0_i32_1 = arith.constant 0 : i32
    return %arg0, %1, %c0_i32, %c0_i32_0 : i32, i32, i32, i32
  }
  func.func @transform_2(%arg0: i32, %arg1: i32) -> (i32, i32, i32) {
    %c0_i32 = arith.constant 0 : i32
    %c0_i32_0 = arith.constant 0 : i32
    %c0_i32_1 = arith.constant 0 : i32
    %c0_i32_2 = arith.constant 0 : i32
    return %c0_i32, %c0_i32_0, %c0_i32_1 : i32, i32, i32
  }
  func.func @transform_3(%arg0: i32, %arg1: i32) -> (i32, i32) {
    %c0_i32 = arith.constant 0 : i32
    %c0_i32_0 = arith.constant 0 : i32
    return %arg1, %c0_i32 : i32, i32
  }
  func.func @transform_4(%arg0: i32, %arg1: i32) -> (i32, i32, i32) {
    %c0_i32 = arith.constant 0 : i32
    %c0_i32_0 = arith.constant 0 : i32
    return %arg0, %arg1, %c0_i32 : i32, i32, i32
  }
  func.func @transform_5(%arg0: i32, %arg1: i32) -> (i32, i32, i32, i32) {
    %c0_i32 = arith.constant 0 : i32
    %c0_i32_0 = arith.constant 0 : i32
    %c0_i32_1 = arith.constant 0 : i32
    return %arg0, %arg1, %c0_i32, %c0_i32_0 : i32, i32, i32, i32
  }
  func.func @transform_6(%arg0: i32, %arg1: i32) -> (i32, i32, i32, i32) {
    %c0_i32 = arith.constant 0 : i32
    %c0_i32_0 = arith.constant 0 : i32
    %c0_i32_1 = arith.constant 0 : i32
    return %arg0, %arg1, %c0_i32, %c0_i32_0 : i32, i32, i32, i32
  }
}

module attributes {stable_mosaic.version = 11 : i64} {
  func.func @_conv_stats_kernel(%arg0: i32, %arg1: i32, %arg2: memref<1x2x18x256xbf16, #tpu.memory_space<vmem>>, %arg3: memref<1x1x18x256xbf16, #tpu.memory_space<vmem>>, %arg4: memref<6x256x256xbf16, #tpu.memory_space<vmem>>, %arg5: memref<16x1xf32, #tpu.memory_space<vmem>>, %arg6: memref<1x16x256xbf16, #tpu.memory_space<vmem>>, %arg7: memref<1x1x1x256xf32, #tpu.memory_space<vmem>>, %arg8: memref<1x1x1x256xf32, #tpu.memory_space<vmem>>) attributes {dimension_semantics = [#tpu.dimension_semantics<parallel>, #tpu.dimension_semantics<parallel>], iteration_bounds = array<i64: 2, 1>, scalar_prefetch = 0 : i64, scratch_operands = 0 : i64, tpu.core_type = #tpu.core_type<tc>, window_params = [{transform_indices = @transform_0, window_bounds = array<i64: 1, 2, 18, 256>}, {transform_indices = @transform_1, window_bounds = array<i64: 1, 1, 18, 256>}, {pipeline_mode = #tpu.pipeline_mode<synchronous>, transform_indices = @transform_2, window_bounds = array<i64: 6, 256, 256>}, {transform_indices = @transform_3, window_bounds = array<i64: 16, 1>}, {transform_indices = @transform_4, window_bounds = array<i64: 1, 16, 256>}, {transform_indices = @transform_5, window_bounds = array<i64: 1, 1, 1, 256>}, {transform_indices = @transform_6, window_bounds = array<i64: 1, 1, 1, 256>}]} {
    %cst = arith.constant 0.000000e+00 : f32
    %0 = vector.broadcast %cst : f32 to vector<16x256xf32>
    %c0 = arith.constant 0 : index
    %c0_0 = arith.constant 0 : index
    %c0_1 = arith.constant 0 : index
    %c0_2 = arith.constant 0 : index
    %1 = vector.load %arg2[%c0, %c0_0, %c0_1, %c0_2] : memref<1x2x18x256xbf16, #tpu.memory_space<vmem>>, vector<1x2x8x256xbf16>
    %2 = vector.shape_cast %1 : vector<1x2x8x256xbf16> to vector<2x8x256xbf16>
    %3 = vector.shape_cast %2 : vector<2x8x256xbf16> to vector<16x256xbf16>
    %c0_3 = arith.constant 0 : index
    %c0_4 = arith.constant 0 : index
    %c0_5 = arith.constant 0 : index
    %4 = vector.load %arg4[%c0_3, %c0_4, %c0_5] : memref<6x256x256xbf16, #tpu.memory_space<vmem>>, vector<1x256x256xbf16>
    %5 = vector.shape_cast %4 : vector<1x256x256xbf16> to vector<256x256xbf16>
    %cst_6 = arith.constant dense<0.000000e+00> : vector<16x256xf32>
    %6 = tpu.matmul %3, %5, %cst_6 {dimension_numbers = #tpu.dot_dimension_numbers<[1], [0], [0], [1], [0, 0, 1, 1], [], []>} : vector<16x256xbf16>, vector<256x256xbf16>, vector<16x256xf32> -> vector<16x256xf32>
    %7 = arith.addf %0, %6 : vector<16x256xf32>
    %c0_7 = arith.constant 0 : index
    %c0_8 = arith.constant 0 : index
    %c1 = arith.constant 1 : index
    %c0_9 = arith.constant 0 : index
    %8 = vector.load %arg2[%c0_7, %c0_8, %c1, %c0_9] : memref<1x2x18x256xbf16, #tpu.memory_space<vmem>>, vector<1x2x8x256xbf16>
    %9 = vector.shape_cast %8 : vector<1x2x8x256xbf16> to vector<2x8x256xbf16>
    %10 = vector.shape_cast %9 : vector<2x8x256xbf16> to vector<16x256xbf16>
    %c1_10 = arith.constant 1 : index
    %c0_11 = arith.constant 0 : index
    %c0_12 = arith.constant 0 : index
    %11 = vector.load %arg4[%c1_10, %c0_11, %c0_12] : memref<6x256x256xbf16, #tpu.memory_space<vmem>>, vector<1x256x256xbf16>
    %12 = vector.shape_cast %11 : vector<1x256x256xbf16> to vector<256x256xbf16>
    %cst_13 = arith.constant dense<0.000000e+00> : vector<16x256xf32>
    %13 = tpu.matmul %10, %12, %cst_13 {dimension_numbers = #tpu.dot_dimension_numbers<[1], [0], [0], [1], [0, 0, 1, 1], [], []>} : vector<16x256xbf16>, vector<256x256xbf16>, vector<16x256xf32> -> vector<16x256xf32>
    %14 = arith.addf %7, %13 : vector<16x256xf32>
    %c0_14 = arith.constant 0 : index
    %c0_15 = arith.constant 0 : index
    %c9 = arith.constant 9 : index
    %c0_16 = arith.constant 0 : index
    %15 = vector.load %arg2[%c0_14, %c0_15, %c9, %c0_16] : memref<1x2x18x256xbf16, #tpu.memory_space<vmem>>, vector<1x2x8x256xbf16>
    %16 = vector.shape_cast %15 : vector<1x2x8x256xbf16> to vector<2x8x256xbf16>
    %17 = vector.shape_cast %16 : vector<2x8x256xbf16> to vector<16x256xbf16>
    %c2 = arith.constant 2 : index
    %c0_17 = arith.constant 0 : index
    %c0_18 = arith.constant 0 : index
    %18 = vector.load %arg4[%c2, %c0_17, %c0_18] : memref<6x256x256xbf16, #tpu.memory_space<vmem>>, vector<1x256x256xbf16>
    %19 = vector.shape_cast %18 : vector<1x256x256xbf16> to vector<256x256xbf16>
    %cst_19 = arith.constant dense<0.000000e+00> : vector<16x256xf32>
    %20 = tpu.matmul %17, %19, %cst_19 {dimension_numbers = #tpu.dot_dimension_numbers<[1], [0], [0], [1], [0, 0, 1, 1], [], []>} : vector<16x256xbf16>, vector<256x256xbf16>, vector<16x256xf32> -> vector<16x256xf32>
    %21 = arith.addf %14, %20 : vector<16x256xf32>
    %c0_20 = arith.constant 0 : index
    %c0_21 = arith.constant 0 : index
    %c10 = arith.constant 10 : index
    %c0_22 = arith.constant 0 : index
    %22 = vector.load %arg2[%c0_20, %c0_21, %c10, %c0_22] : memref<1x2x18x256xbf16, #tpu.memory_space<vmem>>, vector<1x2x8x256xbf16>
    %23 = vector.shape_cast %22 : vector<1x2x8x256xbf16> to vector<2x8x256xbf16>
    %24 = vector.shape_cast %23 : vector<2x8x256xbf16> to vector<16x256xbf16>
    %c3 = arith.constant 3 : index
    %c0_23 = arith.constant 0 : index
    %c0_24 = arith.constant 0 : index
    %25 = vector.load %arg4[%c3, %c0_23, %c0_24] : memref<6x256x256xbf16, #tpu.memory_space<vmem>>, vector<1x256x256xbf16>
    %26 = vector.shape_cast %25 : vector<1x256x256xbf16> to vector<256x256xbf16>
    %cst_25 = arith.constant dense<0.000000e+00> : vector<16x256xf32>
    %27 = tpu.matmul %24, %26, %cst_25 {dimension_numbers = #tpu.dot_dimension_numbers<[1], [0], [0], [1], [0, 0, 1, 1], [], []>} : vector<16x256xbf16>, vector<256x256xbf16>, vector<16x256xf32> -> vector<16x256xf32>
    %28 = arith.addf %21, %27 : vector<16x256xf32>
    %c0_26 = arith.constant 0 : index
    %c0_27 = arith.constant 0 : index
    %c0_28 = arith.constant 0 : index
    %c0_29 = arith.constant 0 : index
    %29 = vector.load %arg3[%c0_26, %c0_27, %c0_28, %c0_29] : memref<1x1x18x256xbf16, #tpu.memory_space<vmem>>, vector<1x1x8x256xbf16>
    %30 = vector.shape_cast %29 : vector<1x1x8x256xbf16> to vector<1x8x256xbf16>
    %c0_30 = arith.constant 0 : index
    %c1_31 = arith.constant 1 : index
    %c0_32 = arith.constant 0 : index
    %c0_33 = arith.constant 0 : index
    %31 = vector.load %arg2[%c0_30, %c1_31, %c0_32, %c0_33] : memref<1x2x18x256xbf16, #tpu.memory_space<vmem>>, vector<1x1x8x256xbf16>
    %32 = vector.shape_cast %31 : vector<1x1x8x256xbf16> to vector<1x8x256xbf16>
    %33 = tpu.concatenate %32, %30 in 0 : vector<1x8x256xbf16>, vector<1x8x256xbf16> -> vector<2x8x256xbf16>
    %34 = vector.shape_cast %33 : vector<2x8x256xbf16> to vector<16x256xbf16>
    %c4 = arith.constant 4 : index
    %c0_34 = arith.constant 0 : index
    %c0_35 = arith.constant 0 : index
    %35 = vector.load %arg4[%c4, %c0_34, %c0_35] : memref<6x256x256xbf16, #tpu.memory_space<vmem>>, vector<1x256x256xbf16>
    %36 = vector.shape_cast %35 : vector<1x256x256xbf16> to vector<256x256xbf16>
    %cst_36 = arith.constant dense<0.000000e+00> : vector<16x256xf32>
    %37 = tpu.matmul %34, %36, %cst_36 {dimension_numbers = #tpu.dot_dimension_numbers<[1], [0], [0], [1], [0, 0, 1, 1], [], []>} : vector<16x256xbf16>, vector<256x256xbf16>, vector<16x256xf32> -> vector<16x256xf32>
    %38 = arith.addf %28, %37 : vector<16x256xf32>
    %c0_37 = arith.constant 0 : index
    %c0_38 = arith.constant 0 : index
    %c1_39 = arith.constant 1 : index
    %c0_40 = arith.constant 0 : index
    %39 = vector.load %arg3[%c0_37, %c0_38, %c1_39, %c0_40] : memref<1x1x18x256xbf16, #tpu.memory_space<vmem>>, vector<1x1x8x256xbf16>
    %40 = vector.shape_cast %39 : vector<1x1x8x256xbf16> to vector<1x8x256xbf16>
    %c0_41 = arith.constant 0 : index
    %c1_42 = arith.constant 1 : index
    %c1_43 = arith.constant 1 : index
    %c0_44 = arith.constant 0 : index
    %41 = vector.load %arg2[%c0_41, %c1_42, %c1_43, %c0_44] : memref<1x2x18x256xbf16, #tpu.memory_space<vmem>>, vector<1x1x8x256xbf16>
    %42 = vector.shape_cast %41 : vector<1x1x8x256xbf16> to vector<1x8x256xbf16>
    %43 = tpu.concatenate %42, %40 in 0 : vector<1x8x256xbf16>, vector<1x8x256xbf16> -> vector<2x8x256xbf16>
    %44 = vector.shape_cast %43 : vector<2x8x256xbf16> to vector<16x256xbf16>
    %c5 = arith.constant 5 : index
    %c0_45 = arith.constant 0 : index
    %c0_46 = arith.constant 0 : index
    %45 = vector.load %arg4[%c5, %c0_45, %c0_46] : memref<6x256x256xbf16, #tpu.memory_space<vmem>>, vector<1x256x256xbf16>
    %46 = vector.shape_cast %45 : vector<1x256x256xbf16> to vector<256x256xbf16>
    %cst_47 = arith.constant dense<0.000000e+00> : vector<16x256xf32>
    %47 = tpu.matmul %44, %46, %cst_47 {dimension_numbers = #tpu.dot_dimension_numbers<[1], [0], [0], [1], [0, 0, 1, 1], [], []>} : vector<16x256xbf16>, vector<256x256xbf16>, vector<16x256xf32> -> vector<16x256xf32>
    %48 = arith.addf %38, %47 : vector<16x256xf32>
    %49 = arith.truncf %48 : vector<16x256xf32> to vector<16x256xbf16>
    %c0_48 = arith.constant 0 : index
    %c0_49 = arith.constant 0 : index
    %c0_50 = arith.constant 0 : index
    %50 = vector.load %arg6[%c0_48, %c0_49, %c0_50] : memref<1x16x256xbf16, #tpu.memory_space<vmem>>, vector<1x16x256xbf16>
    %51 = vector.shape_cast %50 : vector<1x16x256xbf16> to vector<16x256xbf16>
    %52 = vector.shape_cast %49 : vector<16x256xbf16> to vector<1x16x256xbf16>
    tpu.vector_store %arg6[%c0_48, %c0_49, %c0_50], %52 {strides = array<i32>} : memref<1x16x256xbf16, #tpu.memory_space<vmem>>, vector<1x16x256xbf16>,
    %c0_51 = arith.constant 0 : index
    %c0_52 = arith.constant 0 : index
    %53 = vector.load %arg5[%c0_51, %c0_52] : memref<16x1xf32, #tpu.memory_space<vmem>>, vector<16x1xf32>
    %54 = vector.broadcast %53 : vector<16x1xf32> to vector<16x256xf32>
    %55 = arith.mulf %48, %54 : vector<16x256xf32>
    %cst_53 = arith.constant dense<0.000000e+00> : vector<256xf32>
    %56 = vector.multi_reduction <add>, %55, %cst_53 [0] : vector<16x256xf32> to vector<256xf32>
    %57 = vector.shape_cast %56 : vector<256xf32> to vector<1x256xf32>
    %c0_54 = arith.constant 0 : index
    %c0_55 = arith.constant 0 : index
    %c0_56 = arith.constant 0 : index
    %c0_57 = arith.constant 0 : index
    %58 = vector.load %arg7[%c0_54, %c0_55, %c0_56, %c0_57] : memref<1x1x1x256xf32, #tpu.memory_space<vmem>>, vector<1x1x1x256xf32>
    %59 = vector.shape_cast %58 : vector<1x1x1x256xf32> to vector<1x256xf32>
    %60 = vector.shape_cast %57 : vector<1x256xf32> to vector<1x1x1x256xf32>
    tpu.vector_store %arg7[%c0_54, %c0_55, %c0_56, %c0_57], %60 {strides = array<i32>} : memref<1x1x1x256xf32, #tpu.memory_space<vmem>>, vector<1x1x1x256xf32>,
    %61 = arith.mulf %55, %48 : vector<16x256xf32>
    %cst_58 = arith.constant dense<0.000000e+00> : vector<256xf32>
    %62 = vector.multi_reduction <add>, %61, %cst_58 [0] : vector<16x256xf32> to vector<256xf32>
    %63 = vector.shape_cast %62 : vector<256xf32> to vector<1x256xf32>
    %c0_59 = arith.constant 0 : index
    %c0_60 = arith.constant 0 : index
    %c0_61 = arith.constant 0 : index
    %c0_62 = arith.constant 0 : index
    %64 = vector.load %arg8[%c0_59, %c0_60, %c0_61, %c0_62] : memref<1x1x1x256xf32, #tpu.memory_space<vmem>>, vector<1x1x1x256xf32>
    %65 = vector.shape_cast %64 : vector<1x1x1x256xf32> to vector<1x256xf32>
    %66 = vector.shape_cast %63 : vector<1x256xf32> to vector<1x1x1x256xf32>
    tpu.vector_store %arg8[%c0_59, %c0_60, %c0_61, %c0_62], %66 {strides = array<i32>} : memref<1x1x1x256xf32, #tpu.memory_space<vmem>>, vector<1x1x1x256xf32>,
    return
  }
  func.func @transform_0(%arg0: i32, %arg1: i32) -> (i32, i32, i32, i32) {
    %c0_i32 = arith.constant 0 : i32
    %c0_i32_0 = arith.constant 0 : i32
    %c0_i32_1 = arith.constant 0 : i32
    return %arg0, %arg1, %c0_i32, %c0_i32_0 : i32, i32, i32, i32
  }
  func.func @transform_1(%arg0: i32, %arg1: i32) -> (i32, i32, i32, i32) {
    %c1_i32 = arith.constant 1 : i32
    %0 = arith.addi %arg1, %c1_i32 : i32
    %c2_i32 = arith.constant 2 : i32
    %1 = arith.muli %0, %c2_i32 : i32
    %c0_i32 = arith.constant 0 : i32
    %c0_i32_0 = arith.constant 0 : i32
    %c0_i32_1 = arith.constant 0 : i32
    return %arg0, %1, %c0_i32, %c0_i32_0 : i32, i32, i32, i32
  }
  func.func @transform_2(%arg0: i32, %arg1: i32) -> (i32, i32, i32) {
    %c0_i32 = arith.constant 0 : i32
    %c0_i32_0 = arith.constant 0 : i32
    %c0_i32_1 = arith.constant 0 : i32
    %c0_i32_2 = arith.constant 0 : i32
    return %c0_i32, %c0_i32_0, %c0_i32_1 : i32, i32, i32
  }
  func.func @transform_3(%arg0: i32, %arg1: i32) -> (i32, i32) {
    %c0_i32 = arith.constant 0 : i32
    %c0_i32_0 = arith.constant 0 : i32
    return %arg1, %c0_i32 : i32, i32
  }
  func.func @transform_4(%arg0: i32, %arg1: i32) -> (i32, i32, i32) {
    %c0_i32 = arith.constant 0 : i32
    %c0_i32_0 = arith.constant 0 : i32
    return %arg0, %arg1, %c0_i32 : i32, i32, i32
  }
  func.func @transform_5(%arg0: i32, %arg1: i32) -> (i32, i32, i32, i32) {
    %c0_i32 = arith.constant 0 : i32
    %c0_i32_0 = arith.constant 0 : i32
    %c0_i32_1 = arith.constant 0 : i32
    return %arg0, %arg1, %c0_i32, %c0_i32_0 : i32, i32, i32, i32
  }
  func.func @transform_6(%arg0: i32, %arg1: i32) -> (i32, i32, i32, i32) {
    %c0_i32 = arith.constant 0 : i32
    %c0_i32_0 = arith.constant 0 : i32
    %c0_i32_1 = arith.constant 0 : i32
    return %arg0, %arg1, %c0_i32, %c0_i32_0 : i32, i32, i32, i32
  }
}

module attributes {stable_mosaic.version = 11 : i64} {
  func.func @_bn_relu_kernel(%arg0: i32, %arg1: i32, %arg2: memref<1x16x256xbf16, #tpu.memory_space<vmem>>, %arg3: memref<1x1x256xf32, #tpu.memory_space<vmem>>, %arg4: memref<1x1x256xf32, #tpu.memory_space<vmem>>, %arg5: memref<1x16x256xf32, #tpu.memory_space<vmem>>) attributes {dimension_semantics = [#tpu.dimension_semantics<parallel>, #tpu.dimension_semantics<parallel>], iteration_bounds = array<i64: 2, 1>, scalar_prefetch = 0 : i64, scratch_operands = 0 : i64, tpu.core_type = #tpu.core_type<tc>, window_params = [{transform_indices = @transform_0, window_bounds = array<i64: 1, 16, 256>}, {pipeline_mode = #tpu.pipeline_mode<synchronous>, transform_indices = @transform_1, window_bounds = array<i64: 1, 1, 256>}, {pipeline_mode = #tpu.pipeline_mode<synchronous>, transform_indices = @transform_2, window_bounds = array<i64: 1, 1, 256>}, {transform_indices = @transform_3, window_bounds = array<i64: 1, 16, 256>}]} {
    %c0 = arith.constant 0 : index
    %c0_0 = arith.constant 0 : index
    %c0_1 = arith.constant 0 : index
    %0 = vector.load %arg2[%c0, %c0_0, %c0_1] : memref<1x16x256xbf16, #tpu.memory_space<vmem>>, vector<1x16x256xbf16>
    %1 = vector.shape_cast %0 : vector<1x16x256xbf16> to vector<16x256xbf16>
    %2 = arith.extf %1 : vector<16x256xbf16> to vector<16x256xf32>
    %c0_2 = arith.constant 0 : index
    %c0_3 = arith.constant 0 : index
    %c0_4 = arith.constant 0 : index
    %3 = vector.load %arg3[%c0_2, %c0_3, %c0_4] : memref<1x1x256xf32, #tpu.memory_space<vmem>>, vector<1x1x256xf32>
    %4 = vector.shape_cast %3 : vector<1x1x256xf32> to vector<1x256xf32>
    %5 = vector.broadcast %4 : vector<1x256xf32> to vector<16x256xf32>
    %6 = arith.mulf %2, %5 : vector<16x256xf32>
    %c0_5 = arith.constant 0 : index
    %c0_6 = arith.constant 0 : index
    %c0_7 = arith.constant 0 : index
    %7 = vector.load %arg4[%c0_5, %c0_6, %c0_7] : memref<1x1x256xf32, #tpu.memory_space<vmem>>, vector<1x1x256xf32>
    %8 = vector.shape_cast %7 : vector<1x1x256xf32> to vector<1x256xf32>
    %9 = vector.broadcast %8 : vector<1x256xf32> to vector<16x256xf32>
    %10 = arith.addf %6, %9 : vector<16x256xf32>
    %cst = arith.constant 0.000000e+00 : f32
    %11 = vector.broadcast %cst : f32 to vector<16x256xf32>
    %12 = arith.maximumf %10, %11 : vector<16x256xf32>
    %c0_8 = arith.constant 0 : index
    %c0_9 = arith.constant 0 : index
    %c0_10 = arith.constant 0 : index
    %13 = vector.load %arg5[%c0_8, %c0_9, %c0_10] : memref<1x16x256xf32, #tpu.memory_space<vmem>>, vector<1x16x256xf32>
    %14 = vector.shape_cast %13 : vector<1x16x256xf32> to vector<16x256xf32>
    %15 = vector.shape_cast %12 : vector<16x256xf32> to vector<1x16x256xf32>
    tpu.vector_store %arg5[%c0_8, %c0_9, %c0_10], %15 {strides = array<i32>} : memref<1x16x256xf32, #tpu.memory_space<vmem>>, vector<1x16x256xf32>,
    return
  }
  func.func @transform_0(%arg0: i32, %arg1: i32) -> (i32, i32, i32) {
    %c0_i32 = arith.constant 0 : i32
    %c0_i32_0 = arith.constant 0 : i32
    return %arg0, %arg1, %c0_i32 : i32, i32, i32
  }
  func.func @transform_1(%arg0: i32, %arg1: i32) -> (i32, i32, i32) {
    %c0_i32 = arith.constant 0 : i32
    %c0_i32_0 = arith.constant 0 : i32
    %c0_i32_1 = arith.constant 0 : i32
    %c0_i32_2 = arith.constant 0 : i32
    return %c0_i32, %c0_i32_0, %c0_i32_1 : i32, i32, i32
  }
  func.func @transform_2(%arg0: i32, %arg1: i32) -> (i32, i32, i32) {
    %c0_i32 = arith.constant 0 : i32
    %c0_i32_0 = arith.constant 0 : i32
    %c0_i32_1 = arith.constant 0 : i32
    %c0_i32_2 = arith.constant 0 : i32
    return %c0_i32, %c0_i32_0, %c0_i32_1 : i32, i32, i32
  }
  func.func @transform_3(%arg0: i32, %arg1: i32) -> (i32, i32, i32) {
    %c0_i32 = arith.constant 0 : i32
    %c0_i32_0 = arith.constant 0 : i32
    return %arg0, %arg1, %c0_i32 : i32, i32, i32
  }
}

</mosaic_0001>

<llo_original>
// kernel: spatial_path.4
$region0: #{spatial_path.4}
  #allocation0 [shape = 'u32[]', space=smem, size = 0x4, offset = 0x4, fixed_abs, tag = 'smem constant byte address 0x4 - core index']
  #allocation1 [shape = 'u32[144,128]{1,0:T(1,128)}', space=vmem, size = 0x12000, scoped, tag = 'internal scratch']
  %s0 = inlined_call_operand.vmem [shape: bf16[2,9,18,12], index: 0, kind: input, shape index: {}, may-alias: {0,1}]
  %s1 = inlined_call_operand.vmem [shape: bf16[2,9,18,12], index: 1, kind: input, shape index: {}, may-alias: {0,1}]
  %s2 = inlined_call_operand.vmem [shape: bf16[6,12,64], index: 2, kind: input, shape index: {}]
  %s3 = inlined_call_operand.vmem [shape: f32[64,1], index: 3, kind: input, shape index: {}]
  %s4 = inlined_call_operand.vmem [shape: bf16[2,64,64], index: 4, kind: output, shape index: {0}]
  %s5 = inlined_call_operand.vmem [shape: f32[2,1,1,64], index: 5, kind: output, shape index: {1}]
  %s6 = inlined_call_operand.vmem [shape: f32[2,1,1,64], index: 6, kind: output, shape index: {2}]
  %7 = xla_tuple %s4, %s5, %s6
  %s8 = sld [smem:[#allocation0]]
  $region65: #{spatial_path.4} parent=0
    _
  %s10 = ssub.s32 1, %s8
  %s11 = scalar_select 0, %s10, %s8
  loop: start=0, step=1, limit=4
  $region2: #{spatial_path.4} parent=0 // loop_pre_header
    _
  $region3: #{spatial_path.4} parent=0 // loop_header
    %s13 = sphi 0, %s17
    %p14 = scmp.ge.s32.totalorder %s13, 4
    %s20 = sphi 0, %s32
    %s21 = sphi 0, %s28
    %s22 = sphi 0, %s20
    %s23 = sphi 0, %s21
    %s24 = sphi 0, %s22
    %s25 = sphi 0, %s23
    %s37 = sphi 0, %s39
    %s40 = sphi 0, %s37
    %s41 = sphi 0, %s40
    %s57 = sphi 0, %s41
    %s69 = sphi 0, %s71
    %s72 = sphi 0, %s69
    %s73 = sphi 0, %s72
    %s89 = sphi 0, %s73
    %s93 = sphi 0, %s93
    %s95 = sphi 0, %s93
    %s96 = sphi 0, %s95
    %s110 = sphi 0, %s96
    %s116 = sphi 0, %s118
    %s119 = sphi 0, %s116
    %s120 = sphi 0, %s119
    %s136 = sphi 0, %s120
    %s144 = sphi 0, %s146
    %s147 = sphi 0, %s144
    %s148 = sphi 0, %s147
    %s164 = sphi 0, %s148
    %s172 = sphi 0, %s174
    %s175 = sphi 0, %s172
    %s176 = sphi 0, %s175
    %s192 = sphi 0, %s176
    %s200 = sphi 0, %s202
    %s203 = sphi 0, %s200
    %s204 = sphi 0, %s203
    %s220 = sphi 0, %s204
  $region4: #{spatial_path.4} parent=0 // loop_header_branch
    %16 = sbr.rel (%p14) target = $region8
  $region5: #{spatial_path.4} parent=0 // loop_body
    %s18 = ssub.s32 %s13, 1
    %s19 = ssub.s32 %s13, 2
    %s26 = sadd.s32 1, %s21
    %p27 = scmp.ge.s32.totalorder %s26, 1
    %s28 = scalar_select %p27, 0, %s26
    %s29 = sadd.s32 1, %s20
    %s30 = scalar_select %p27, %s29, %s20
    %p31 = scmp.ge.s32.totalorder %s30, 2
    %s32 = scalar_select %p31, 0, %s30
    %s33 = ssub.s32 %s20, %s32
    %s34 = ssub.s32 %s21, %s28
    %s35 = sor.u32 %s33, %s34
    %p36 = scmp.eq.s32.totalorder %s35, 0
    %s38 = sadd.s32 %s37, 1
    %s39 = scalar_select %p36, %s37, %s38
    %p42 = pneg %p36
    %p43 = scmp.eq.s32.totalorder %s13, 1
    %p44 = por %p42, %p43
    %p45 = scmp.ne.s32.totalorder %s37, %s40
    %p46 = scmp.eq.s32.totalorder %s13, 0
    %p47 = por %p45, %p46
    %p48 = scmp.ne.s32.totalorder %s37, %s40
    %p49 = scmp.eq.s32.totalorder %s18, 1
    %p50 = por %p48, %p49
    %p51 = scmp.ne.s32.totalorder %s40, %s41
    %p52 = scmp.eq.s32.totalorder %s18, 0
    %p53 = por %p51, %p52
    %p54 = scmp.ne.s32.totalorder %s40, %s41
    %p55 = scmp.eq.s32.totalorder %s19, 1
    %p56 = por %p54, %p55
    %p58 = scmp.ne.s32.totalorder %s41, %s57
    %p59 = scmp.eq.s32.totalorder %s19, 0
    %p60 = por %p58, %p59
    %s61 = sadd.s32 %s21, 1
    %s62 = smul.u32 %s61, 8
    %s63 = sadd.s32 %s28, 1
    %s64 = smul.u32 %s63, 8
    %s65 = ssub.s32 %s20, %s32
    %s66 = ssub.s32 %s62, %s64
    %s67 = sor.u32 %s65, %s66
    %p68 = scmp.eq.s32.totalorder %s67, 0
    %s70 = sadd.s32 %s69, 1
    %s71 = scalar_select %p68, %s69, %s70
    %p74 = pneg %p68
    %p75 = scmp.eq.s32.totalorder %s13, 1
    %p76 = por %p74, %p75
    %p77 = scmp.ne.s32.totalorder %s69, %s72
    %p78 = scmp.eq.s32.totalorder %s13, 0
    %p79 = por %p77, %p78
    %p80 = scmp.ne.s32.totalorder %s69, %s72
    %p81 = scmp.eq.s32.totalorder %s18, 1
    %p82 = por %p80, %p81
    %p83 = scmp.ne.s32.totalorder %s72, %s73
    %p84 = scmp.eq.s32.totalorder %s18, 0
    %p85 = por %p83, %p84
    %p86 = scmp.ne.s32.totalorder %s72, %s73
    %p87 = scmp.eq.s32.totalorder %s19, 1
    %p88 = por %p86, %p87
    %p90 = scmp.ne.s32.totalorder %s73, %s89
    %p91 = scmp.eq.s32.totalorder %s19, 0
    %p92 = por %p90, %p91
    %s94 = sadd.s32 %s93, 1
    %p97 = scmp.eq.s32.totalorder %s13, 1
    %p98 = scmp.ne.s32.totalorder %s93, %s95
    %p99 = scmp.eq.s32.totalorder %s13, 0
    %p100 = por %p98, %p99
    %p101 = scmp.ne.s32.totalorder %s93, %s95
    %p102 = scmp.eq.s32.totalorder %s18, 1
    %p103 = por %p101, %p102
    %p104 = scmp.ne.s32.totalorder %s95, %s96
    %p105 = scmp.eq.s32.totalorder %s18, 0
    %p106 = por %p104, %p105
    %p107 = scmp.ne.s32.totalorder %s95, %s96
    %p108 = scmp.eq.s32.totalorder %s19, 1
    %p109 = por %p107, %p108
    %p111 = scmp.ne.s32.totalorder %s96, %s110
    %p112 = scmp.eq.s32.totalorder %s19, 0
    %p113 = por %p111, %p112
    %s114 = ssub.s32 %s21, %s28
    %p115 = scmp.eq.s32.totalorder %s114, 0
    %s117 = sadd.s32 %s116, 1
    %s118 = scalar_select %p115, %s116, %s117
    %p121 = pneg %p115
    %p122 = scmp.eq.s32.totalorder %s13, 1
    %p123 = por %p121, %p122
    %p124 = scmp.ne.s32.totalorder %s116, %s119
    %p125 = scmp.eq.s32.totalorder %s13, 0
    %p126 = por %p124, %p125
    %p127 = scmp.ne.s32.totalorder %s116, %s119
    %p128 = scmp.eq.s32.totalorder %s18, 1
    %p129 = por %p127, %p128
    %p130 = scmp.ne.s32.totalorder %s119, %s120
    %p131 = scmp.eq.s32.totalorder %s18, 0
    %p132 = por %p130, %p131
    %p133 = scmp.ne.s32.totalorder %s119, %s120
    %p134 = scmp.eq.s32.totalorder %s19, 1
    %p135 = por %p133, %p134
    %p137 = scmp.ne.s32.totalorder %s120, %s136
    %p138 = scmp.eq.s32.totalorder %s19, 0
    %p139 = por %p137, %p138
    %s140 = ssub.s32 %s20, %s32
    %s141 = ssub.s32 %s21, %s28
    %s142 = sor.u32 %s140, %s141
    %p143 = scmp.eq.s32.totalorder %s142, 0
    %s145 = sadd.s32 %s144, 1
    %s146 = scalar_select %p143, %s144, %s145
    %p149 = pneg %p143
    %p150 = scmp.eq.s32.totalorder %s13, 1
    %p151 = por %p149, %p150
    %p152 = scmp.ne.s32.totalorder %s144, %s147
    %p153 = scmp.eq.s32.totalorder %s13, 0
    %p154 = por %p152, %p153
    %p155 = scmp.ne.s32.totalorder %s144, %s147
    %p156 = scmp.eq.s32.totalorder %s18, 1
    %p157 = por %p155, %p156
    %p158 = scmp.ne.s32.totalorder %s147, %s148
    %p159 = scmp.eq.s32.totalorder %s18, 0
    %p160 = por %p158, %p159
    %p161 = scmp.ne.s32.totalorder %s147, %s148
    %p162 = scmp.eq.s32.totalorder %s19, 1
    %p163 = por %p161, %p162
    %p165 = scmp.ne.s32.totalorder %s148, %s164
    %p166 = scmp.eq.s32.totalorder %s19, 0
    %p167 = por %p165, %p166
    %s168 = ssub.s32 %s20, %s32
    %s169 = ssub.s32 %s21, %s28
    %s170 = sor.u32 %s168, %s169
    %p171 = scmp.eq.s32.totalorder %s170, 0
    %s173 = sadd.s32 %s172, 1
    %s174 = scalar_select %p171, %s172, %s173
    %p177 = pneg %p171
    %p178 = scmp.eq.s32.totalorder %s13, 1
    %p179 = por %p177, %p178
    %p180 = scmp.ne.s32.totalorder %s172, %s175
    %p181 = scmp.eq.s32.totalorder %s13, 0
    %p182 = por %p180, %p181
    %p183 = scmp.ne.s32.totalorder %s172, %s175
    %p184 = scmp.eq.s32.totalorder %s18, 1
    %p185 = por %p183, %p184
    %p186 = scmp.ne.s32.totalorder %s175, %s176
    %p187 = scmp.eq.s32.totalorder %s18, 0
    %p188 = por %p186, %p187
    %p189 = scmp.ne.s32.totalorder %s175, %s176
    %p190 = scmp.eq.s32.totalorder %s19, 1
    %p191 = por %p189, %p190
    %p193 = scmp.ne.s32.totalorder %s176, %s192
    %p194 = scmp.eq.s32.totalorder %s19, 0
    %p195 = por %p193, %p194
    %s196 = ssub.s32 %s20, %s32
    %s197 = ssub.s32 %s21, %s28
    %s198 = sor.u32 %s196, %s197
    %p199 = scmp.eq.s32.totalorder %s198, 0
    %s201 = sadd.s32 %s200, 1
    %s202 = scalar_select %p199, %s200, %s201
    %p205 = pneg %p199
    %p206 = scmp.eq.s32.totalorder %s13, 1
    %p207 = por %p205, %p206
    %p208 = scmp.ne.s32.totalorder %s200, %s203
    %p209 = scmp.eq.s32.totalorder %s13, 0
    %p210 = por %p208, %p209
    %p211 = scmp.ne.s32.totalorder %s200, %s203
    %p212 = scmp.eq.s32.totalorder %s18, 1
    %p213 = por %p211, %p212
    %p214 = scmp.ne.s32.totalorder %s203, %s204
    %p215 = scmp.eq.s32.totalorder %s18, 0
    %p216 = por %p214, %p215
    %p217 = scmp.ne.s32.totalorder %s203, %s204
    %p218 = scmp.eq.s32.totalorder %s19, 1
    %p219 = por %p217, %p218
    %p221 = scmp.ne.s32.totalorder %s204, %s220
    %p222 = scmp.eq.s32.totalorder %s19, 0
    %p223 = por %p221, %p222
    %p224 = scmp.le.s32.totalorder 1, %s13
    %p225 = scmp.lt.s32.totalorder %s13, 3
    %p226 = pnand %p224, %p225
    %p227 = pneg %p226
    // Predicated region
    $region9: #{spatial_path.4} parent=5 // pred_check
      _
    $region10: #{spatial_path.4} parent=5 // pred_check_branch
      %229 = sbr.rel (%p226) target = $region12
    $region11: #{spatial_path.4} parent=5 // pred_region
      %s230 = ssub.s32 %s13, 1
      // Predicated region
      $region13: #{spatial_path.4} parent=11 // pred_check
        %p231 = pneg %p106
      $region14: #{spatial_path.4} parent=11 // pred_check_branch
        %233 = sbr.rel (%p231) target = $region16
      $region15: #{spatial_path.4} parent=11 // pred_region
        _
      $region16: #{spatial_path.4} parent=11 // pred_fallthru
        _
      // Predicated region
      $region17: #{spatial_path.4} parent=11 // pred_check
        %p234 = pneg %p132
      $region18: #{spatial_path.4} parent=11 // pred_check_branch
        %236 = sbr.rel (%p234) target = $region20
      $region19: #{spatial_path.4} parent=11 // pred_region
        %s237 = smul.u32 8, %s23
        %p238 = scmp.lt.s32.totalorder %s237, 7
        %s239 = scalar_select %p238, %s237, 7
        %s240 = smul.addr %s239, 8
        %s241 = scalar_lea.vmem %s3, %s240
        %s242 = smul.u32 8, %s23
      $region20: #{spatial_path.4} parent=11 // pred_fallthru
        _
    $region12: #{spatial_path.4} parent=5 // pred_fallthru
      _
    %p243 = scmp.lt.s32.totalorder %s13, 2
    // Predicated region
    $region21: #{spatial_path.4} parent=5 // pred_check
      %p244 = pneg %p243
    $region22: #{spatial_path.4} parent=5 // pred_check_branch
      %246 = sbr.rel (%p244) target = $region24
    $region23: #{spatial_path.4} parent=5 // pred_region
      // Predicated region
      $region25: #{spatial_path.4} parent=23 // pred_check
        %p247 = pneg %p47
      $region26: #{spatial_path.4} parent=23 // pred_check_branch
        %249 = sbr.rel (%p247) target = $region28
      $region27: #{spatial_path.4} parent=23 // pred_region
        %s250 = smul.u32 8, %s21
        %s251 = ssub.s32 9, %s250
        %p252 = scmp.lt.s32.totalorder %s251, 8
        %s253 = scalar_select %p252, %s251, 8
        %s254 = smul.u32 64, %s253
        %s255 = smul.u32 %s254, 3
        %p256 = scmp.lt.s32.totalorder %s20, 1
        %s257 = scalar_select %p256, %s20, 1
        %p258 = scmp.lt.s32.totalorder %s250, 8
        %s259 = scalar_select %p258, %s250, 8
        %s260 = smul.addr %s259, 3
        %s261 = smul.addr %s257, 27
        %s262 = sadd.s32 %s260, %s261
        %s263 = smul.addr %s262, 4
        %s264 = scalar_lea.vmem %s0, %s263
        %s265 = smul.u32 8, %s21
        %s266 = ssub.s32 9, %s265
        %p267 = scmp.lt.s32.totalorder %s266, 8
        %s268 = scalar_select %p267, %s266, 8
        %s269 = smul.u32 64, %s268
        %s270 = smul.u32 %s269, 3
      $region28: #{spatial_path.4} parent=23 // pred_fallthru
        _
      // Predicated region
      $region29: #{spatial_path.4} parent=23 // pred_check
        %p271 = pneg %p79
      $region30: #{spatial_path.4} parent=23 // pred_check_branch
        %273 = sbr.rel (%p271) target = $region32
      $region31: #{spatial_path.4} parent=23 // pred_region
        %s274 = sadd.s32 %s21, 1
        %s275 = smul.u32 %s274, 8
        %p276 = scmp.lt.s32.totalorder %s20, 1
        %s277 = scalar_select %p276, %s20, 1
        %p278 = scmp.lt.s32.totalorder %s275, 8
        %s279 = scalar_select %p278, %s275, 8
        %s280 = smul.addr %s279, 3
        %s281 = smul.addr %s277, 27
        %s282 = sadd.s32 %s280, %s281
        %s283 = smul.addr %s282, 4
        %s284 = scalar_lea.vmem %s1, %s283
        %s285 = sadd.s32 %s21, 1
        %s286 = smul.u32 %s285, 8
      $region32: #{spatial_path.4} parent=23 // pred_fallthru
        _
    $region24: #{spatial_path.4} parent=5 // pred_fallthru
      _
    %p287 = scmp.le.s32.totalorder 1, %s13
    %p288 = scmp.lt.s32.totalorder %s13, 3
    %p289 = pnand %p287, %p288
    %p290 = pneg %p289
    // Predicated region
    $region33: #{spatial_path.4} parent=5 // pred_check
      _
    $region34: #{spatial_path.4} parent=5 // pred_check_branch
      %292 = sbr.rel (%p289) target = $region36
    $region35: #{spatial_path.4} parent=5 // pred_region
      %s293 = ssub.s32 %s13, 1
      %s294 = smul.u32 8, %s23
      %s295 = ssub.s32 9, %s294
      %p296 = scmp.lt.s32.totalorder %s295, 8
      %s297 = scalar_select %p296, %s295, 8
      %s298 = smul.u32 64, %s297
      %s299 = smul.u32 %s298, 3
      %p300 = scmp.lt.s32.totalorder %s22, 1
      %s301 = scalar_select %p300, %s22, 1
      %p302 = scmp.lt.s32.totalorder %s294, 8
      %s303 = scalar_select %p302, %s294, 8
      %s304 = smul.addr %s303, 3
      %s305 = smul.addr %s301, 27
      %s306 = sadd.s32 %s304, %s305
      %s307 = smul.addr %s306, 4
      %s308 = scalar_lea.vmem %s0, %s307
      %p309 = pneg %p53
      %p310 = pneg %p50
      %s311 = sadd.s32 %s23, 1
      %s312 = smul.u32 %s311, 8
      %p313 = scmp.lt.s32.totalorder %s22, 1
      %s314 = scalar_select %p313, %s22, 1
      %p315 = scmp.lt.s32.totalorder %s312, 8
      %s316 = scalar_select %p315, %s312, 8
      %s317 = smul.addr %s316, 3
      %s318 = smul.addr %s314, 27
      %s319 = sadd.s32 %s317, %s318
      %s320 = smul.addr %s319, 4
      %s321 = scalar_lea.vmem %s1, %s320
      %p322 = pneg %p85
      %p323 = pneg %p82
      %p324 = pneg %p106
      %p325 = pneg %p103
      %s326 = smul.u32 8, %s23
      %p327 = scmp.lt.s32.totalorder %s326, 7
      %s328 = scalar_select %p327, %s326, 7
      %s329 = smul.addr %s328, 8
      %s330 = scalar_lea.vmem %s3, %s329
      %p331 = pneg %p132
      %p332 = pneg %p129
      %p333 = pneg %p160
      %p334 = pneg %p157
      %s335 = smul.u32 8, %s23
      %p336 = scmp.lt.s32.totalorder %s22, 1
      %s337 = scalar_select %p336, %s22, 1
      %p338 = scmp.lt.s32.totalorder %s335, 7
      %s339 = scalar_select %p338, %s335, 7
      %s340 = smul.addr %s337, 8
      %s341 = sadd.s32 %s339, %s340
      %s342 = smul.addr %s341, 4
      %s343 = scalar_lea.vmem %s4, %s342
      %p344 = pneg %p188
      %p345 = pneg %p185
      %p346 = scmp.lt.s32.totalorder %s22, 1
      %s347 = scalar_select %p346, %s22, 1
      %p348 = scmp.lt.s32.totalorder %s23, 0
      %s349 = scalar_select %p348, %s23, 0
      %s350 = sadd.s32 %s349, %s347
      %s351 = scalar_lea.vmem %s5, %s350
      %p352 = pneg %p216
      %p353 = pneg %p213
      %p354 = scmp.lt.s32.totalorder %s22, 1
      %s355 = scalar_select %p354, %s22, 1
      %p356 = scmp.lt.s32.totalorder %s23, 0
      %s357 = scalar_select %p356, %s23, 0
      %s358 = sadd.s32 %s357, %s355
      %s359 = scalar_lea.vmem %s6, %s358
      %s360 = smul.u32 8, %s23
      %s361 = ssub.s32 9, %s360
      %p362 = scmp.lt.s32.totalorder %s361, 8
      %s363 = scalar_select %p362, %s361, 8
      %s364 = smul.u32 64, %s363
      %s365 = smul.u32 %s364, 3
      %p366 = scmp.lt.s32.totalorder %s22, 1
      %s367 = scalar_select %p366, %s22, 1
      %p368 = scmp.lt.s32.totalorder %s360, 8
      %s369 = scalar_select %p368, %s360, 8
      %s370 = smul.addr %s369, 3
      %s371 = smul.addr %s367, 27
      %s372 = sadd.s32 %s370, %s371
      %s373 = smul.addr %s372, 4
      %s374 = scalar_lea.vmem %s0, %s373
      %s375 = smul.u32 8, %s23
      %s376 = ssub.s32 9, %s375
      %p377 = scmp.lt.s32.totalorder %s376, 8
      %s378 = scalar_select %p377, %s376, 8
      %s379 = smul.u32 64, %s378
      %s380 = smul.u32 %s379, 3
      %s381 = sadd.s32 %s23, 1
      %s382 = smul.u32 %s381, 8
      %p383 = scmp.lt.s32.totalorder %s22, 1
      %s384 = scalar_select %p383, %s22, 1
      %p385 = scmp.lt.s32.totalorder %s382, 8
      %s386 = scalar_select %p385, %s382, 8
      %s387 = smul.addr %s386, 3
      %s388 = smul.addr %s384, 27
      %s389 = sadd.s32 %s387, %s388
      %s390 = smul.addr %s389, 4
      %s391 = scalar_lea.vmem %s1, %s390
      %s392 = sadd.s32 %s23, 1
      %s393 = smul.u32 %s392, 8
      %s394 = smul.u32 8, %s23
      %p395 = scmp.lt.s32.totalorder %s394, 7
      %s396 = scalar_select %p395, %s394, 7
      %s397 = smul.addr %s396, 8
      %s398 = scalar_lea.vmem %s3, %s397
      %s399 = smul.u32 8, %s23
      %s400 = smul.u32 8, %s23
      %p401 = scmp.lt.s32.totalorder %s22, 1
      %s402 = scalar_select %p401, %s22, 1
      %p403 = scmp.lt.s32.totalorder %s400, 7
      %s404 = scalar_select %p403, %s400, 7
      %s405 = smul.addr %s402, 8
      %s406 = sadd.s32 %s404, %s405
      %s407 = smul.addr %s406, 4
      %s408 = scalar_lea.vmem %s4, %s407
      %s409 = smul.u32 8, %s23
      %p410 = scmp.lt.s32.totalorder %s22, 1
      %s411 = scalar_select %p410, %s22, 1
      %p412 = scmp.lt.s32.totalorder %s23, 0
      %s413 = scalar_select %p412, %s23, 0
      %s414 = sadd.s32 %s413, %s411
      %s415 = scalar_lea.vmem %s5, %s414
      %p416 = scmp.lt.s32.totalorder %s22, 1
      %s417 = scalar_select %p416, %s22, 1
      %p418 = scmp.lt.s32.totalorder %s23, 0
      %s419 = scalar_select %p418, %s23, 0
      %s420 = sadd.s32 %s419, %s417
      %s421 = scalar_lea.vmem %s6, %s420
      %v423 = vld [vmem:[%s374] sm:$0xf]
      %v424 = vld [vmem:[%s374 + $0xc] sm:$0xf]
      %v425 = vld [vmem:[%s374 + $0x18] sm:$0xf]
      %v426 = vld [vmem:[%s374 + $0x24] sm:$0xf]
      %v427 = vld [vmem:[%s374 + $0x30] sm:$0xf]
      %v428 = vld [vmem:[%s374 + $0x3c] sm:$0xf]
      %v429 = vld [vmem:[%s374 + $0x48] sm:$0xf]
      %v430 = vld [vmem:[%s374 + $0x54] sm:$0xf]
      %v431 = vld [vmem:[%s2] sm:$0xf]
      %v432 = vld [vmem:[%s2 + $0x4] sm:$0x3]
      %v433 = vld [vmem:[%s374 + $0x4] sm:$0x1]
      %v434 = vld [vmem:[%s374 + $0x10] sm:$0x1]
      %v435 = vld [vmem:[%s374 + $0x1c] sm:$0x1]
      %v436 = vld [vmem:[%s374 + $0x28] sm:$0x1]
      %v437 = vld [vmem:[%s374 + $0x34] sm:$0x1]
      %v438 = vld [vmem:[%s374 + $0x40] sm:$0x1]
      %v439 = vld [vmem:[%s374 + $0x4c] sm:$0x1]
      %v440 = vld [vmem:[%s374 + $0x58] sm:$0x1]
      %vm441 = vsmask.f32 3328
      %vm442 = vsmask.f32 7440
      %vm443 = vmor %vm441, %vm442
      %v445 = vshrl.u32 %v423, 16
      %v447 = vrot.slane %v445, 4
      %v448 = vshll.u32 %v423, 16
      %v450 = vrot.slane %v448, 5
      %v451 = vor.u32 %v447, %v450
      %v452 = vrot.slane %v451, 4
      %v454 = vshll.u32 %v433, 16
      %v456 = vrot.slane %v454, 5
      %v457 = vsel %vm443, %v452, %v456
      %v459 = vshrl.u32 %v424, 16
      %v461 = vrot.slane %v459, 4
      %v462 = vshll.u32 %v424, 16
      %v464 = vrot.slane %v462, 5
      %v465 = vor.u32 %v461, %v464
      %v466 = vrot.slane %v465, 4
      %v468 = vshll.u32 %v434, 16
      %v470 = vrot.slane %v468, 5
      %v471 = vsel %vm443, %v466, %v470
      %v473 = vshrl.u32 %v425, 16
      %v475 = vrot.slane %v473, 4
      %v476 = vshll.u32 %v425, 16
      %v478 = vrot.slane %v476, 5
      %v479 = vor.u32 %v475, %v478
      %v480 = vrot.slane %v479, 4
      %v482 = vshll.u32 %v435, 16
      %v484 = vrot.slane %v482, 5
      %v485 = vsel %vm443, %v480, %v484
      %v487 = vshrl.u32 %v426, 16
      %v489 = vrot.slane %v487, 4
      %v490 = vshll.u32 %v426, 16
      %v492 = vrot.slane %v490, 5
      %v493 = vor.u32 %v489, %v492
      %v494 = vrot.slane %v493, 4
      %v496 = vshll.u32 %v436, 16
      %v498 = vrot.slane %v496, 5
      %v499 = vsel %vm443, %v494, %v498
      %v501 = vshrl.u32 %v427, 16
      %v503 = vrot.slane %v501, 4
      %v504 = vshll.u32 %v427, 16
      %v506 = vrot.slane %v504, 5
      %v507 = vor.u32 %v503, %v506
      %v508 = vrot.slane %v507, 4
      %v510 = vshll.u32 %v437, 16
      %v512 = vrot.slane %v510, 5
      %v513 = vsel %vm443, %v508, %v512
      %v515 = vshrl.u32 %v428, 16
      %v517 = vrot.slane %v515, 4
      %v518 = vshll.u32 %v428, 16
      %v520 = vrot.slane %v518, 5
      %v521 = vor.u32 %v517, %v520
      %v522 = vrot.slane %v521, 4
      %v524 = vshll.u32 %v438, 16
      %v526 = vrot.slane %v524, 5
      %v527 = vsel %vm443, %v522, %v526
      %v529 = vshrl.u32 %v429, 16
      %v531 = vrot.slane %v529, 4
      %v532 = vshll.u32 %v429, 16
      %v534 = vrot.slane %v532, 5
      %v535 = vor.u32 %v531, %v534
      %v536 = vrot.slane %v535, 4
      %v538 = vshll.u32 %v439, 16
      %v540 = vrot.slane %v538, 5
      %v541 = vsel %vm443, %v536, %v540
      %v543 = vshrl.u32 %v430, 16
      %v545 = vrot.slane %v543, 4
      %v546 = vshll.u32 %v430, 16
      %v548 = vrot.slane %v546, 5
      %v549 = vor.u32 %v545, %v548
      %v550 = vrot.slane %v549, 4
      %v552 = vshll.u32 %v440, 16
      %v554 = vrot.slane %v552, 5
      %v555 = vsel %vm443, %v550, %v554
      %s556 = scalar_lea.vmem %s2, 8
      %v557 = vld [vmem:[%s556] sm:$0xf]
      %v558 = vld [vmem:[%s556 + $0x4] sm:$0x3]
      %v559 = vunpack.c.l.b16 %v457
      %v560 = vunpack.c.l.b16 %v471
      %v561 = vunpack.c.l.b16 %v485
      %v562 = vunpack.c.l.b16 %v499
      %v563 = vunpack.c.l.b16 %v513
      %v564 = vunpack.c.l.b16 %v527
      %v565 = vunpack.c.l.b16 %v541
      %v566 = vunpack.c.l.b16 %v555
      %v567 = vpack.c.b16 %v560, %v559
      %v568 = vpack.c.b16 %v562, %v561
      %v569 = vpack.c.b16 %v564, %v563
      %v570 = vpack.c.b16 %v566, %v565
      %v573 = vunpack.c.l.b16 %v557
      %v574 = vunpack.c.l.b16 %v558
      %v575 = vpack.c.b16 %v574, %v573
      %vm576 = vcmask 97280
      %v578 = vsel %vm576, %v567, 0
      %v581 = vsel %vm576, %v568, 0
      %v584 = vsel %vm576, %v569, 0
      %v587 = vsel %vm576, %v570, 0
      %vm589 = vcmask 1045504
      %v591 = vsel %vm589, %v575, 0
      %593 = vmatprep.subr.bf16.mxu0 0
      %594 = vmatpush1.bf16.msra.mxu0 0
      %595 = vmatprep.subr.bf16.mxu0 0
      %596 = vmatpush1.bf16.msra.mxu0 0
      %597 = vmatprep.subr.bf16.mxu0 0
      %598 = vmatpush1.bf16.msra.mxu0 0
      %599 = vmatprep.subr.bf16.mxu0 0
      %600 = vmatpush1.bf16.msra.mxu0 0
      %601 = vmatprep.subr.bf16.mxu0 0
      %602 = vmatpush1.bf16.msra.mxu0 0
      %603 = vmatprep.subr.bf16.mxu0 0
      %604 = vmatpush1.bf16.msra.mxu0 0
      %605 = vmatprep.subr.bf16.mxu0 0
      %606 = vmatpush1.bf16.msra.mxu0 0
      %607 = vmatprep.subr.bf16.mxu0 0
      %608 = vmatpush1.bf16.msra.mxu0 %v591
      %609 = vmatprep.subr.bf16.mxu0 0
      %610 = vmatpush2.bf16.msra.mxu0 0
      %611 = vmatprep.subr.bf16.mxu0 0
      %612 = vmatpush2.bf16.msra.mxu0 0
      %613 = vmatprep.subr.bf16.mxu0 0
      %614 = vmatpush2.bf16.msra.mxu0 0
      %615 = vmatprep.subr.bf16.mxu0 0
      %616 = vmatpush2.bf16.msra.mxu0 0
      %617 = vmatprep.subr.bf16.mxu0 0
      %618 = vmatpush2.bf16.msra.mxu0 0
      %619 = vmatprep.subr.bf16.mxu0 0
      %620 = vmatpush2.bf16.msra.mxu0 0
      %621 = vmatprep.subr.bf16.mxu0 0
      %622 = vmatpush2.bf16.msra.mxu0 0
      %623 = vmatprep.subr.bf16.mxu0 0
      %624 = vmatpush2.bf16.msra.mxu0 0
      %625 = vmatprep.mubr.bf16.mxu0 0
      %626 = vmatmul.mubr.bf16.gmra.mxu0 %v578
      %v627 = vpop.f32.mrf.mxu0
      %v628 = vadd.f32 0.0, %v627
      %v629 = vpop.f32.mrf.mxu0
      %v630 = vpop.f32.mrf.mxu0
      %v631 = vadd.f32 0.0, %v630
      %v632 = vpop.f32.mrf.mxu0
      %633 = vmatprep.mubr.bf16.mxu0 0
      %634 = vmatmul.mubr.bf16.gmra.mxu0 %v581
      %v635 = vpop.f32.mrf.mxu0
      %v636 = vadd.f32 0.0, %v635
      %v637 = vpop.f32.mrf.mxu0
      %v638 = vpop.f32.mrf.mxu0
      %v639 = vadd.f32 0.0, %v638
      %v640 = vpop.f32.mrf.mxu0
      %641 = vmatprep.mubr.bf16.mxu0 0
      %642 = vmatmul.mubr.bf16.gmra.mxu0 %v584
      %v643 = vpop.f32.mrf.mxu0
      %v644 = vadd.f32 0.0, %v643
      %v645 = vpop.f32.mrf.mxu0
      %v646 = vpop.f32.mrf.mxu0
      %v647 = vadd.f32 0.0, %v646
      %v648 = vpop.f32.mrf.mxu0
      %649 = vmatprep.mubr.bf16.mxu0 0
      %650 = vmatmul.mubr.bf16.gmra.mxu0 %v587
      %v651 = vpop.f32.mrf.mxu0
      %v652 = vadd.f32 0.0, %v651
      %v653 = vpop.f32.mrf.mxu0
      %v654 = vpop.f32.mrf.mxu0
      %v655 = vadd.f32 0.0, %v654
      %v656 = vpop.f32.mrf.mxu0
      %657 = vdwg.mxu0
      %v666 = vunpack.c.l.b16 %v423
      %v667 = vunpack.c.l.b16 %v424
      %v668 = vunpack.c.l.b16 %v425
      %v669 = vunpack.c.l.b16 %v426
      %v670 = vunpack.c.l.b16 %v427
      %v671 = vunpack.c.l.b16 %v428
      %v672 = vunpack.c.l.b16 %v429
      %v673 = vunpack.c.l.b16 %v430
      %v674 = vpack.c.b16 %v667, %v666
      %v675 = vpack.c.b16 %v669, %v668
      %v676 = vpack.c.b16 %v671, %v670
      %v677 = vpack.c.b16 %v673, %v672
      %v680 = vunpack.c.l.b16 %v431
      %v681 = vunpack.c.l.b16 %v432
      %v682 = vpack.c.b16 %v681, %v680
      %v684 = vsel %vm576, %v674, 0
      %v687 = vsel %vm576, %v675, 0
      %v690 = vsel %vm576, %v676, 0
      %v693 = vsel %vm576, %v677, 0
      %v696 = vsel %vm589, %v682, 0
      %698 = vmatprep.subr.bf16.mxu0 0
      %699 = vmatpush1.bf16.msra.mxu0 0
      %700 = vmatprep.subr.bf16.mxu0 0
      %701 = vmatpush1.bf16.msra.mxu0 0
      %702 = vmatprep.subr.bf16.mxu0 0
      %703 = vmatpush1.bf16.msra.mxu0 0
      %704 = vmatprep.subr.bf16.mxu0 0
      %705 = vmatpush1.bf16.msra.mxu0 0
      %706 = vmatprep.subr.bf16.mxu0 0
      %707 = vmatpush1.bf16.msra.mxu0 0
      %708 = vmatprep.subr.bf16.mxu0 0
      %709 = vmatpush1.bf16.msra.mxu0 0
      %710 = vmatprep.subr.bf16.mxu0 0
      %711 = vmatpush1.bf16.msra.mxu0 0
      %712 = vmatprep.subr.bf16.mxu0 0
      %713 = vmatpush1.bf16.msra.mxu0 %v696
      %714 = vmatprep.subr.bf16.mxu0 0
      %715 = vmatpush2.bf16.msra.mxu0 0
      %716 = vmatprep.subr.bf16.mxu0 0
      %717 = vmatpush2.bf16.msra.mxu0 0
      %718 = vmatprep.subr.bf16.mxu0 0
      %719 = vmatpush2.bf16.msra.mxu0 0
      %720 = vmatprep.subr.bf16.mxu0 0
      %721 = vmatpush2.bf16.msra.mxu0 0
      %722 = vmatprep.subr.bf16.mxu0 0
      %723 = vmatpush2.bf16.msra.mxu0 0
      %724 = vmatprep.subr.bf16.mxu0 0
      %725 = vmatpush2.bf16.msra.mxu0 0
      %726 = vmatprep.subr.bf16.mxu0 0
      %727 = vmatpush2.bf16.msra.mxu0 0
      %728 = vmatprep.subr.bf16.mxu0 0
      %729 = vmatpush2.bf16.msra.mxu0 0
      %730 = vmatprep.mubr.bf16.mxu0 0
      %731 = vmatmul.mubr.bf16.gmra.mxu0 %v684
      %v732 = vpop.f32.mrf.mxu0
      %v733 = vadd.f32 %v628, %v732
      %v734 = vpop.f32.mrf.mxu0
      %v735 = vpop.f32.mrf.mxu0
      %v736 = vadd.f32 %v631, %v735
      %v737 = vpop.f32.mrf.mxu0
      %738 = vmatprep.mubr.bf16.mxu0 0
      %739 = vmatmul.mubr.bf16.gmra.mxu0 %v687
      %v740 = vpop.f32.mrf.mxu0
      %v741 = vadd.f32 %v636, %v740
      %v742 = vpop.f32.mrf.mxu0
      %v743 = vpop.f32.mrf.mxu0
      %v744 = vadd.f32 %v639, %v743
      %v745 = vpop.f32.mrf.mxu0
      %746 = vmatprep.mubr.bf16.mxu0 0
      %747 = vmatmul.mubr.bf16.gmra.mxu0 %v690
      %v748 = vpop.f32.mrf.mxu0
      %v749 = vadd.f32 %v644, %v748
      %v750 = vpop.f32.mrf.mxu0
      %v751 = vpop.f32.mrf.mxu0
      %v752 = vadd.f32 %v647, %v751
      %v753 = vpop.f32.mrf.mxu0
      %754 = vmatprep.mubr.bf16.mxu0 0
      %755 = vmatmul.mubr.bf16.gmra.mxu0 %v693
      %v756 = vpop.f32.mrf.mxu0
      %v757 = vadd.f32 %v652, %v756
      %v758 = vpop.f32.mrf.mxu0
      %v759 = vpop.f32.mrf.mxu0
      %v760 = vadd.f32 %v655, %v759
      %v761 = vpop.f32.mrf.mxu0
      %762 = vdwg.mxu0
      %v763 = vld [vmem:[%s374 + $0x4] sm:$0xf]
      %v764 = vld [vmem:[%s374 + $0x8] sm:$0x1]
      %v765 = vld [vmem:[%s374 + $0x10] sm:$0xf]
      %v766 = vld [vmem:[%s374 + $0x14] sm:$0x1]
      %v767 = vld [vmem:[%s374 + $0x1c] sm:$0xf]
      %v768 = vld [vmem:[%s374 + $0x20] sm:$0x1]
      %v769 = vld [vmem:[%s374 + $0x28] sm:$0xf]
      %v770 = vld [vmem:[%s374 + $0x2c] sm:$0x1]
      %v771 = vld [vmem:[%s374 + $0x34] sm:$0xf]
      %v772 = vld [vmem:[%s374 + $0x38] sm:$0x1]
      %v773 = vld [vmem:[%s374 + $0x40] sm:$0xf]
      %v774 = vld [vmem:[%s374 + $0x44] sm:$0x1]
      %v775 = vld [vmem:[%s374 + $0x4c] sm:$0xf]
      %v776 = vld [vmem:[%s374 + $0x50] sm:$0x1]
      %v777 = vld [vmem:[%s374 + $0x58] sm:$0xf]
      %v778 = vld [vmem:[%s374 + $0x5c] sm:$0x1]
      %v780 = vshrl.u32 %v763, 16
      %v782 = vrot.slane %v780, 4
      %v783 = vshll.u32 %v763, 16
      %v785 = vrot.slane %v783, 5
      %v786 = vor.u32 %v782, %v785
      %v787 = vrot.slane %v786, 4
      %v789 = vshll.u32 %v764, 16
      %v791 = vrot.slane %v789, 5
      %v792 = vsel %vm443, %v787, %v791
      %v794 = vshrl.u32 %v765, 16
      %v796 = vrot.slane %v794, 4
      %v797 = vshll.u32 %v765, 16
      %v799 = vrot.slane %v797, 5
      %v800 = vor.u32 %v796, %v799
      %v801 = vrot.slane %v800, 4
      %v803 = vshll.u32 %v766, 16
      %v805 = vrot.slane %v803, 5
      %v806 = vsel %vm443, %v801, %v805
      %v808 = vshrl.u32 %v767, 16
      %v810 = vrot.slane %v808, 4
      %v811 = vshll.u32 %v767, 16
      %v813 = vrot.slane %v811, 5
      %v814 = vor.u32 %v810, %v813
      %v815 = vrot.slane %v814, 4
      %v817 = vshll.u32 %v768, 16
      %v819 = vrot.slane %v817, 5
      %v820 = vsel %vm443, %v815, %v819
      %v822 = vshrl.u32 %v769, 16
      %v824 = vrot.slane %v822, 4
      %v825 = vshll.u32 %v769, 16
      %v827 = vrot.slane %v825, 5
      %v828 = vor.u32 %v824, %v827
      %v829 = vrot.slane %v828, 4
      %v831 = vshll.u32 %v770, 16
      %v833 = vrot.slane %v831, 5
      %v834 = vsel %vm443, %v829, %v833
      %v836 = vshrl.u32 %v771, 16
      %v838 = vrot.slane %v836, 4
      %v839 = vshll.u32 %v771, 16
      %v841 = vrot.slane %v839, 5
      %v842 = vor.u32 %v838, %v841
      %v843 = vrot.slane %v842, 4
      %v845 = vshll.u32 %v772, 16
      %v847 = vrot.slane %v845, 5
      %v848 = vsel %vm443, %v843, %v847
      %v850 = vshrl.u32 %v773, 16
      %v852 = vrot.slane %v850, 4
      %v853 = vshll.u32 %v773, 16
      %v855 = vrot.slane %v853, 5
      %v856 = vor.u32 %v852, %v855
      %v857 = vrot.slane %v856, 4
      %v859 = vshll.u32 %v774, 16
      %v861 = vrot.slane %v859, 5
      %v862 = vsel %vm443, %v857, %v861
      %v864 = vshrl.u32 %v775, 16
      %v866 = vrot.slane %v864, 4
      %v867 = vshll.u32 %v775, 16
      %v869 = vrot.slane %v867, 5
      %v870 = vor.u32 %v866, %v869
      %v871 = vrot.slane %v870, 4
      %v873 = vshll.u32 %v776, 16
      %v875 = vrot.slane %v873, 5
      %v876 = vsel %vm443, %v871, %v875
      %v878 = vshrl.u32 %v777, 16
      %v880 = vrot.slane %v878, 4
      %v881 = vshll.u32 %v777, 16
      %v883 = vrot.slane %v881, 5
      %v884 = vor.u32 %v880, %v883
      %v885 = vrot.slane %v884, 4
      %v887 = vshll.u32 %v778, 16
      %v889 = vrot.slane %v887, 5
      %v890 = vsel %vm443, %v885, %v889
      %s891 = scalar_lea.vmem %s2, 16
      %v892 = vld [vmem:[%s891] sm:$0xf]
      %v893 = vld [vmem:[%s891 + $0x4] sm:$0x3]
      %v894 = vunpack.c.l.b16 %v792
      %v895 = vunpack.c.l.b16 %v806
      %v896 = vunpack.c.l.b16 %v820
      %v897 = vunpack.c.l.b16 %v834
      %v898 = vunpack.c.l.b16 %v848
      %v899 = vunpack.c.l.b16 %v862
      %v900 = vunpack.c.l.b16 %v876
      %v901 = vunpack.c.l.b16 %v890
      %v902 = vpack.c.b16 %v895, %v894
      %v903 = vpack.c.b16 %v897, %v896
      %v904 = vpack.c.b16 %v899, %v898
      %v905 = vpack.c.b16 %v901, %v900
      %v908 = vunpack.c.l.b16 %v892
      %v909 = vunpack.c.l.b16 %v893
      %v910 = vpack.c.b16 %v909, %v908
      %v912 = vsel %vm576, %v902, 0
      %v915 = vsel %vm576, %v903, 0
      %v918 = vsel %vm576, %v904, 0
      %v921 = vsel %vm576, %v905, 0
      %v924 = vsel %vm589, %v910, 0
      %926 = vmatprep.subr.bf16.mxu0 0
      %927 = vmatpush1.bf16.msra.mxu0 0
      %928 = vmatprep.subr.bf16.mxu0 0
      %929 = vmatpush1.bf16.msra.mxu0 0
      %930 = vmatprep.subr.bf16.mxu0 0
      %931 = vmatpush1.bf16.msra.mxu0 0
      %932 = vmatprep.subr.bf16.mxu0 0
      %933 = vmatpush1.bf16.msra.mxu0 0
      %934 = vmatprep.subr.bf16.mxu0 0
      %935 = vmatpush1.bf16.msra.mxu0 0
      %936 = vmatprep.subr.bf16.mxu0 0
      %937 = vmatpush1.bf16.msra.mxu0 0
      %938 = vmatprep.subr.bf16.mxu0 0
      %939 = vmatpush1.bf16.msra.mxu0 0
      %940 = vmatprep.subr.bf16.mxu0 0
      %941 = vmatpush1.bf16.msra.mxu0 %v924
      %942 = vmatprep.subr.bf16.mxu0 0
      %943 = vmatpush2.bf16.msra.mxu0 0
      %944 = vmatprep.subr.bf16.mxu0 0
      %945 = vmatpush2.bf16.msra.mxu0 0
      %946 = vmatprep.subr.bf16.mxu0 0
      %947 = vmatpush2.bf16.msra.mxu0 0
      %948 = vmatprep.subr.bf16.mxu0 0
      %949 = vmatpush2.bf16.msra.mxu0 0
      %950 = vmatprep.subr.bf16.mxu0 0
      %951 = vmatpush2.bf16.msra.mxu0 0
      %952 = vmatprep.subr.bf16.mxu0 0
      %953 = vmatpush2.bf16.msra.mxu0 0
      %954 = vmatprep.subr.bf16.mxu0 0
      %955 = vmatpush2.bf16.msra.mxu0 0
      %956 = vmatprep.subr.bf16.mxu0 0
      %957 = vmatpush2.bf16.msra.mxu0 0
      %958 = vmatprep.mubr.bf16.mxu0 0
      %959 = vmatmul.mubr.bf16.gmra.mxu0 %v912
      %v960 = vpop.f32.mrf.mxu0
      %v961 = vadd.f32 0.0, %v960
      %v962 = vpop.f32.mrf.mxu0
      %v963 = vpop.f32.mrf.mxu0
      %v964 = vadd.f32 0.0, %v963
      %v965 = vpop.f32.mrf.mxu0
      %966 = vmatprep.mubr.bf16.mxu0 0
      %967 = vmatmul.mubr.bf16.gmra.mxu0 %v915
      %v968 = vpop.f32.mrf.mxu0
      %v969 = vadd.f32 0.0, %v968
      %v970 = vpop.f32.mrf.mxu0
      %v971 = vpop.f32.mrf.mxu0
      %v972 = vadd.f32 0.0, %v971
      %v973 = vpop.f32.mrf.mxu0
      %974 = vmatprep.mubr.bf16.mxu0 0
      %975 = vmatmul.mubr.bf16.gmra.mxu0 %v918
      %v976 = vpop.f32.mrf.mxu0
      %v977 = vadd.f32 0.0, %v976
      %v978 = vpop.f32.mrf.mxu0
      %v979 = vpop.f32.mrf.mxu0
      %v980 = vadd.f32 0.0, %v979
      %v981 = vpop.f32.mrf.mxu0
      %982 = vmatprep.mubr.bf16.mxu0 0
      %983 = vmatmul.mubr.bf16.gmra.mxu0 %v921
      %v984 = vpop.f32.mrf.mxu0
      %v985 = vadd.f32 0.0, %v984
      %v986 = vpop.f32.mrf.mxu0
      %v987 = vpop.f32.mrf.mxu0
      %v988 = vadd.f32 0.0, %v987
      %v989 = vpop.f32.mrf.mxu0
      %990 = vdwg.mxu0
      %v991 = vadd.f32 %v733, %v961
      %v992 = vadd.f32 %v736, %v964
      %v993 = vadd.f32 %v741, %v969
      %v994 = vadd.f32 %v744, %v972
      %v995 = vadd.f32 %v749, %v977
      %v996 = vadd.f32 %v752, %v980
      %v997 = vadd.f32 %v757, %v985
      %v998 = vadd.f32 %v760, %v988
      %v999 = vld [vmem:[%s374 + $0x4] sm:$0xe]
      %v1000 = vld [vmem:[%s374 + $0x10] sm:$0xe]
      %v1001 = vld [vmem:[%s374 + $0x1c] sm:$0xe]
      %v1002 = vld [vmem:[%s374 + $0x28] sm:$0xe]
      %v1003 = vld [vmem:[%s374 + $0x34] sm:$0xe]
      %v1004 = vld [vmem:[%s374 + $0x40] sm:$0xe]
      %v1005 = vld [vmem:[%s374 + $0x4c] sm:$0xe]
      %v1006 = vld [vmem:[%s374 + $0x58] sm:$0xe]
      %vm1023 = vcmask 1042432
      %vm1024 = vcmask 1046532
      %vm1025 = vmor %vm1023, %vm1024
      %v1026 = vrot.slane %v999, 5
      %v1027 = vrot.slane %v1026, 4
      %v1028 = vrot.slane %v764, 5
      %v1029 = vsel %vm1025, %v1027, %v1028
      %v1030 = vrot.slane %v1000, 5
      %v1031 = vrot.slane %v1030, 4
      %v1032 = vrot.slane %v766, 5
      %v1033 = vsel %vm1025, %v1031, %v1032
      %v1034 = vrot.slane %v1001, 5
      %v1035 = vrot.slane %v1034, 4
      %v1036 = vrot.slane %v768, 5
      %v1037 = vsel %vm1025, %v1035, %v1036
      %v1038 = vrot.slane %v1002, 5
      %v1039 = vrot.slane %v1038, 4
      %v1040 = vrot.slane %v770, 5
      %v1041 = vsel %vm1025, %v1039, %v1040
      %v1042 = vrot.slane %v1003, 5
      %v1043 = vrot.slane %v1042, 4
      %v1044 = vrot.slane %v772, 5
      %v1045 = vsel %vm1025, %v1043, %v1044
      %v1046 = vrot.slane %v1004, 5
      %v1047 = vrot.slane %v1046, 4
      %v1048 = vrot.slane %v774, 5
      %v1049 = vsel %vm1025, %v1047, %v1048
      %v1050 = vrot.slane %v1005, 5
      %v1051 = vrot.slane %v1050, 4
      %v1052 = vrot.slane %v776, 5
      %v1053 = vsel %vm1025, %v1051, %v1052
      %v1054 = vrot.slane %v1006, 5
      %v1055 = vrot.slane %v1054, 4
      %v1056 = vrot.slane %v778, 5
      %v1057 = vsel %vm1025, %v1055, %v1056
      %s1058 = scalar_lea.vmem %s2, 24
      %v1059 = vld [vmem:[%s1058] sm:$0xf]
      %v1060 = vld [vmem:[%s1058 + $0x4] sm:$0x3]
      %v1061 = vunpack.c.l.b16 %v1029
      %v1062 = vunpack.c.l.b16 %v1033
      %v1063 = vunpack.c.l.b16 %v1037
      %v1064 = vunpack.c.l.b16 %v1041
      %v1065 = vunpack.c.l.b16 %v1045
      %v1066 = vunpack.c.l.b16 %v1049
      %v1067 = vunpack.c.l.b16 %v1053
      %v1068 = vunpack.c.l.b16 %v1057
      %v1069 = vpack.c.b16 %v1062, %v1061
      %v1070 = vpack.c.b16 %v1064, %v1063
      %v1071 = vpack.c.b16 %v1066, %v1065
      %v1072 = vpack.c.b16 %v1068, %v1067
      %v1075 = vunpack.c.l.b16 %v1059
      %v1076 = vunpack.c.l.b16 %v1060
      %v1077 = vpack.c.b16 %v1076, %v1075
      %v1079 = vsel %vm576, %v1069, 0
      %v1082 = vsel %vm576, %v1070, 0
      %v1085 = vsel %vm576, %v1071, 0
      %v1088 = vsel %vm576, %v1072, 0
      %v1091 = vsel %vm589, %v1077, 0
      %1093 = vmatprep.subr.bf16.mxu0 0
      %1094 = vmatpush1.bf16.msra.mxu0 0
      %1095 = vmatprep.subr.bf16.mxu0 0
      %1096 = vmatpush1.bf16.msra.mxu0 0
      %1097 = vmatprep.subr.bf16.mxu0 0
      %1098 = vmatpush1.bf16.msra.mxu0 0
      %1099 = vmatprep.subr.bf16.mxu0 0
      %1100 = vmatpush1.bf16.msra.mxu0 0
      %1101 = vmatprep.subr.bf16.mxu0 0
      %1102 = vmatpush1.bf16.msra.mxu0 0
      %1103 = vmatprep.subr.bf16.mxu0 0
      %1104 = vmatpush1.bf16.msra.mxu0 0
      %1105 = vmatprep.subr.bf16.mxu0 0
      %1106 = vmatpush1.bf16.msra.mxu0 0
      %1107 = vmatprep.subr.bf16.mxu0 0
      %1108 = vmatpush1.bf16.msra.mxu0 %v1091
      %1109 = vmatprep.subr.bf16.mxu0 0
      %1110 = vmatpush2.bf16.msra.mxu0 0
      %1111 = vmatprep.subr.bf16.mxu0 0
      %1112 = vmatpush2.bf16.msra.mxu0 0
      %1113 = vmatprep.subr.bf16.mxu0 0
      %1114 = vmatpush2.bf16.msra.mxu0 0
      %1115 = vmatprep.subr.bf16.mxu0 0
      %1116 = vmatpush2.bf16.msra.mxu0 0
      %1117 = vmatprep.subr.bf16.mxu0 0
      %1118 = vmatpush2.bf16.msra.mxu0 0
      %1119 = vmatprep.subr.bf16.mxu0 0
      %1120 = vmatpush2.bf16.msra.mxu0 0
      %1121 = vmatprep.subr.bf16.mxu0 0
      %1122 = vmatpush2.bf16.msra.mxu0 0
      %1123 = vmatprep.subr.bf16.mxu0 0
      %1124 = vmatpush2.bf16.msra.mxu0 0
      %1125 = vmatprep.mubr.bf16.mxu0 0
      %1126 = vmatmul.mubr.bf16.gmra.mxu0 %v1079
      %v1127 = vpop.f32.mrf.mxu0
      %v1128 = vadd.f32 0.0, %v1127
      %v1129 = vpop.f32.mrf.mxu0
      %v1130 = vpop.f32.mrf.mxu0
      %v1131 = vadd.f32 0.0, %v1130
      %v1132 = vpop.f32.mrf.mxu0
      %1133 = vmatprep.mubr.bf16.mxu0 0
      %1134 = vmatmul.mubr.bf16.gmra.mxu0 %v1082
      %v1135 = vpop.f32.mrf.mxu0
      %v1136 = vadd.f32 0.0, %v1135
      %v1137 = vpop.f32.mrf.mxu0
      %v1138 = vpop.f32.mrf.mxu0
      %v1139 = vadd.f32 0.0, %v1138
      %v1140 = vpop.f32.mrf.mxu0
      %1141 = vmatprep.mubr.bf16.mxu0 0
      %1142 = vmatmul.mubr.bf16.gmra.mxu0 %v1085
      %v1143 = vpop.f32.mrf.mxu0
      %v1144 = vadd.f32 0.0, %v1143
      %v1145 = vpop.f32.mrf.mxu0
      %v1146 = vpop.f32.mrf.mxu0
      %v1147 = vadd.f32 0.0, %v1146
      %v1148 = vpop.f32.mrf.mxu0
      %1149 = vmatprep.mubr.bf16.mxu0 0
      %1150 = vmatmul.mubr.bf16.gmra.mxu0 %v1088
      %v1151 = vpop.f32.mrf.mxu0
      %v1152 = vadd.f32 0.0, %v1151
      %v1153 = vpop.f32.mrf.mxu0
      %v1154 = vpop.f32.mrf.mxu0
      %v1155 = vadd.f32 0.0, %v1154
      %v1156 = vpop.f32.mrf.mxu0
      %1157 = vdwg.mxu0
      %v1158 = vadd.f32 %v991, %v1128
      %v1159 = vadd.f32 %v992, %v1131
      %v1160 = vadd.f32 %v993, %v1136
      %v1161 = vadd.f32 %v994, %v1139
      %v1162 = vadd.f32 %v995, %v1144
      %v1163 = vadd.f32 %v996, %v1147
      %v1164 = vadd.f32 %v997, %v1152
      %v1165 = vadd.f32 %v998, %v1155
      %v1166 = vld [vmem:[%s391] sm:$0xf]
      %s1167 = scalar_lea.vmem %s374, 12
      %v1168 = vld [vmem:[%s1167] sm:$0xf]
      %v1169 = vld [vmem:[%s1167 + $0xc] sm:$0xf]
      %v1170 = vld [vmem:[%s1167 + $0x18] sm:$0xf]
      %v1171 = vld [vmem:[%s1167 + $0x24] sm:$0xf]
      %v1172 = vld [vmem:[%s1167 + $0x30] sm:$0xf]
      %v1173 = vld [vmem:[%s1167 + $0x3c] sm:$0xf]
      %v1174 = vld [vmem:[%s1167 + $0x48] sm:$0xf]
      %s1175 = scalar_lea.vmem %s2, 32
      %v1176 = vld [vmem:[%s1175] sm:$0xf]
      %v1177 = vld [vmem:[%s1175 + $0x4] sm:$0x3]
      %v1186 = vunpack.c.l.b16 %v1168
      %v1187 = vunpack.c.l.b16 %v1169
      %v1188 = vunpack.c.l.b16 %v1170
      %v1189 = vunpack.c.l.b16 %v1171
      %v1190 = vunpack.c.l.b16 %v1172
      %v1191 = vunpack.c.l.b16 %v1173
      %v1192 = vunpack.c.l.b16 %v1174
      %v1193 = vunpack.c.l.b16 %v1166
      %v1194 = vpack.c.b16 %v1187, %v1186
      %v1195 = vpack.c.b16 %v1189, %v1188
      %v1196 = vpack.c.b16 %v1191, %v1190
      %v1197 = vpack.c.b16 %v1193, %v1192
      %v1200 = vunpack.c.l.b16 %v1176
      %v1201 = vunpack.c.l.b16 %v1177
      %v1202 = vpack.c.b16 %v1201, %v1200
      %v1204 = vsel %vm576, %v1194, 0
      %v1207 = vsel %vm576, %v1195, 0
      %v1210 = vsel %vm576, %v1196, 0
      %v1213 = vsel %vm576, %v1197, 0
      %v1216 = vsel %vm589, %v1202, 0
      %1218 = vmatprep.subr.bf16.mxu0 0
      %1219 = vmatpush1.bf16.msra.mxu0 0
      %1220 = vmatprep.subr.bf16.mxu0 0
      %1221 = vmatpush1.bf16.msra.mxu0 0
      %1222 = vmatprep.subr.bf16.mxu0 0
      %1223 = vmatpush1.bf16.msra.mxu0 0
      %1224 = vmatprep.subr.bf16.mxu0 0
      %1225 = vmatpush1.bf16.msra.mxu0 0
      %1226 = vmatprep.subr.bf16.mxu0 0
      %1227 = vmatpush1.bf16.msra.mxu0 0
      %1228 = vmatprep.subr.bf16.mxu0 0
      %1229 = vmatpush1.bf16.msra.mxu0 0
      %1230 = vmatprep.subr.bf16.mxu0 0
      %1231 = vmatpush1.bf16.msra.mxu0 0
      %1232 = vmatprep.subr.bf16.mxu0 0
      %1233 = vmatpush1.bf16.msra.mxu0 %v1216
      %1234 = vmatprep.subr.bf16.mxu0 0
      %1235 = vmatpush2.bf16.msra.mxu0 0
      %1236 = vmatprep.subr.bf16.mxu0 0
      %1237 = vmatpush2.bf16.msra.mxu0 0
      %1238 = vmatprep.subr.bf16.mxu0 0
      %1239 = vmatpush2.bf16.msra.mxu0 0
      %1240 = vmatprep.subr.bf16.mxu0 0
      %1241 = vmatpush2.bf16.msra.mxu0 0
      %1242 = vmatprep.subr.bf16.mxu0 0
      %1243 = vmatpush2.bf16.msra.mxu0 0
      %1244 = vmatprep.subr.bf16.mxu0 0
      %1245 = vmatpush2.bf16.msra.mxu0 0
      %1246 = vmatprep.subr.bf16.mxu0 0
      %1247 = vmatpush2.bf16.msra.mxu0 0
      %1248 = vmatprep.subr.bf16.mxu0 0
      %1249 = vmatpush2.bf16.msra.mxu0 0
      %1250 = vmatprep.mubr.bf16.mxu0 0
      %1251 = vmatmul.mubr.bf16.gmra.mxu0 %v1204
      %v1252 = vpop.f32.mrf.mxu0
      %v1253 = vadd.f32 0.0, %v1252
      %v1254 = vpop.f32.mrf.mxu0
      %v1255 = vpop.f32.mrf.mxu0
      %v1256 = vadd.f32 0.0, %v1255
      %v1257 = vpop.f32.mrf.mxu0
      %1258 = vmatprep.mubr.bf16.mxu0 0
      %1259 = vmatmul.mubr.bf16.gmra.mxu0 %v1207
      %v1260 = vpop.f32.mrf.mxu0
      %v1261 = vadd.f32 0.0, %v1260
      %v1262 = vpop.f32.mrf.mxu0
      %v1263 = vpop.f32.mrf.mxu0
      %v1264 = vadd.f32 0.0, %v1263
      %v1265 = vpop.f32.mrf.mxu0
      %1266 = vmatprep.mubr.bf16.mxu0 0
      %1267 = vmatmul.mubr.bf16.gmra.mxu0 %v1210
      %v1268 = vpop.f32.mrf.mxu0
      %v1269 = vadd.f32 0.0, %v1268
      %v1270 = vpop.f32.mrf.mxu0
      %v1271 = vpop.f32.mrf.mxu0
      %v1272 = vadd.f32 0.0, %v1271
      %v1273 = vpop.f32.mrf.mxu0
      %1274 = vmatprep.mubr.bf16.mxu0 0
      %1275 = vmatmul.mubr.bf16.gmra.mxu0 %v1213
      %v1276 = vpop.f32.mrf.mxu0
      %v1277 = vadd.f32 0.0, %v1276
      %v1278 = vpop.f32.mrf.mxu0
      %v1279 = vpop.f32.mrf.mxu0
      %v1280 = vadd.f32 0.0, %v1279
      %v1281 = vpop.f32.mrf.mxu0
      %1282 = vdwg.mxu0
      %v1283 = vadd.f32 %v1158, %v1253
      %v1284 = vadd.f32 %v1159, %v1256
      %v1285 = vadd.f32 %v1160, %v1261
      %v1286 = vadd.f32 %v1161, %v1264
      %v1287 = vadd.f32 %v1162, %v1269
      %v1288 = vadd.f32 %v1163, %v1272
      %v1289 = vadd.f32 %v1164, %v1277
      %v1290 = vadd.f32 %v1165, %v1280
      %v1291 = vld [vmem:[%s391] sm:$0xf]
      %v1292 = vld [vmem:[%s391 + $0x4] sm:$0x1]
      %v1293 = vld [vmem:[%s1167] sm:$0xf]
      %v1294 = vld [vmem:[%s1167 + $0x4] sm:$0x1]
      %v1295 = vld [vmem:[%s1167 + $0xc] sm:$0xf]
      %v1296 = vld [vmem:[%s1167 + $0x10] sm:$0x1]
      %v1297 = vld [vmem:[%s1167 + $0x18] sm:$0xf]
      %v1298 = vld [vmem:[%s1167 + $0x1c] sm:$0x1]
      %v1299 = vld [vmem:[%s1167 + $0x24] sm:$0xf]
      %v1300 = vld [vmem:[%s1167 + $0x28] sm:$0x1]
      %v1301 = vld [vmem:[%s1167 + $0x30] sm:$0xf]
      %v1302 = vld [vmem:[%s1167 + $0x34] sm:$0x1]
      %v1303 = vld [vmem:[%s1167 + $0x3c] sm:$0xf]
      %v1304 = vld [vmem:[%s1167 + $0x40] sm:$0x1]
      %v1305 = vld [vmem:[%s1167 + $0x48] sm:$0xf]
      %v1306 = vld [vmem:[%s1167 + $0x4c] sm:$0x1]
      %v1308 = vshrl.u32 %v1293, 16
      %v1310 = vrot.slane %v1308, 4
      %v1311 = vshll.u32 %v1293, 16
      %v1313 = vrot.slane %v1311, 5
      %v1314 = vor.u32 %v1310, %v1313
      %v1315 = vrot.slane %v1314, 4
      %v1317 = vshll.u32 %v1294, 16
      %v1319 = vrot.slane %v1317, 5
      %v1320 = vsel %vm443, %v1315, %v1319
      %v1322 = vshrl.u32 %v1295, 16
      %v1324 = vrot.slane %v1322, 4
      %v1325 = vshll.u32 %v1295, 16
      %v1327 = vrot.slane %v1325, 5
      %v1328 = vor.u32 %v1324, %v1327
      %v1329 = vrot.slane %v1328, 4
      %v1331 = vshll.u32 %v1296, 16
      %v1333 = vrot.slane %v1331, 5
      %v1334 = vsel %vm443, %v1329, %v1333
      %v1336 = vshrl.u32 %v1297, 16
      %v1338 = vrot.slane %v1336, 4
      %v1339 = vshll.u32 %v1297, 16
      %v1341 = vrot.slane %v1339, 5
      %v1342 = vor.u32 %v1338, %v1341
      %v1343 = vrot.slane %v1342, 4
      %v1345 = vshll.u32 %v1298, 16
      %v1347 = vrot.slane %v1345, 5
      %v1348 = vsel %vm443, %v1343, %v1347
      %v1350 = vshrl.u32 %v1299, 16
      %v1352 = vrot.slane %v1350, 4
      %v1353 = vshll.u32 %v1299, 16
      %v1355 = vrot.slane %v1353, 5
      %v1356 = vor.u32 %v1352, %v1355
      %v1357 = vrot.slane %v1356, 4
      %v1359 = vshll.u32 %v1300, 16
      %v1361 = vrot.slane %v1359, 5
      %v1362 = vsel %vm443, %v1357, %v1361
      %v1364 = vshrl.u32 %v1301, 16
      %v1366 = vrot.slane %v1364, 4
      %v1367 = vshll.u32 %v1301, 16
      %v1369 = vrot.slane %v1367, 5
      %v1370 = vor.u32 %v1366, %v1369
      %v1371 = vrot.slane %v1370, 4
      %v1373 = vshll.u32 %v1302, 16
      %v1375 = vrot.slane %v1373, 5
      %v1376 = vsel %vm443, %v1371, %v1375
      %v1378 = vshrl.u32 %v1303, 16
      %v1380 = vrot.slane %v1378, 4
      %v1381 = vshll.u32 %v1303, 16
      %v1383 = vrot.slane %v1381, 5
      %v1384 = vor.u32 %v1380, %v1383
      %v1385 = vrot.slane %v1384, 4
      %v1387 = vshll.u32 %v1304, 16
      %v1389 = vrot.slane %v1387, 5
      %v1390 = vsel %vm443, %v1385, %v1389
      %v1392 = vshrl.u32 %v1305, 16
      %v1394 = vrot.slane %v1392, 4
      %v1395 = vshll.u32 %v1305, 16
      %v1397 = vrot.slane %v1395, 5
      %v1398 = vor.u32 %v1394, %v1397
      %v1399 = vrot.slane %v1398, 4
      %v1401 = vshll.u32 %v1306, 16
      %v1403 = vrot.slane %v1401, 5
      %v1404 = vsel %vm443, %v1399, %v1403
      %v1406 = vshrl.u32 %v1291, 16
      %v1408 = vrot.slane %v1406, 4
      %v1409 = vshll.u32 %v1291, 16
      %v1411 = vrot.slane %v1409, 5
      %v1412 = vor.u32 %v1408, %v1411
      %v1413 = vrot.slane %v1412, 4
      %v1415 = vshll.u32 %v1292, 16
      %v1417 = vrot.slane %v1415, 5
      %v1418 = vsel %vm443, %v1413, %v1417
      %s1419 = scalar_lea.vmem %s2, 40
      %v1420 = vld [vmem:[%s1419] sm:$0xf]
      %v1421 = vld [vmem:[%s1419 + $0x4] sm:$0x3]
      %v1422 = vunpack.c.l.b16 %v1320
      %v1423 = vunpack.c.l.b16 %v1334
      %v1424 = vunpack.c.l.b16 %v1348
      %v1425 = vunpack.c.l.b16 %v1362
      %v1426 = vunpack.c.l.b16 %v1376
      %v1427 = vunpack.c.l.b16 %v1390
      %v1428 = vunpack.c.l.b16 %v1404
      %v1429 = vunpack.c.l.b16 %v1418
      %v1430 = vpack.c.b16 %v1423, %v1422
      %v1431 = vpack.c.b16 %v1425, %v1424
      %v1432 = vpack.c.b16 %v1427, %v1426
      %v1433 = vpack.c.b16 %v1429, %v1428
      %v1436 = vunpack.c.l.b16 %v1420
      %v1437 = vunpack.c.l.b16 %v1421
      %v1438 = vpack.c.b16 %v1437, %v1436
      %v1440 = vsel %vm576, %v1430, 0
      %v1443 = vsel %vm576, %v1431, 0
      %v1446 = vsel %vm576, %v1432, 0
      %v1449 = vsel %vm576, %v1433, 0
      %v1452 = vsel %vm589, %v1438, 0
      %1454 = vmatprep.subr.bf16.mxu0 0
      %1455 = vmatpush1.bf16.msra.mxu0 0
      %1456 = vmatprep.subr.bf16.mxu0 0
      %1457 = vmatpush1.bf16.msra.mxu0 0
      %1458 = vmatprep.subr.bf16.mxu0 0
      %1459 = vmatpush1.bf16.msra.mxu0 0
      %1460 = vmatprep.subr.bf16.mxu0 0
      %1461 = vmatpush1.bf16.msra.mxu0 0
      %1462 = vmatprep.subr.bf16.mxu0 0
      %1463 = vmatpush1.bf16.msra.mxu0 0
      %1464 = vmatprep.subr.bf16.mxu0 0
      %1465 = vmatpush1.bf16.msra.mxu0 0
      %1466 = vmatprep.subr.bf16.mxu0 0
      %1467 = vmatpush1.bf16.msra.mxu0 0
      %1468 = vmatprep.subr.bf16.mxu0 0
      %1469 = vmatpush1.bf16.msra.mxu0 %v1452
      %1470 = vmatprep.subr.bf16.mxu0 0
      %1471 = vmatpush2.bf16.msra.mxu0 0
      %1472 = vmatprep.subr.bf16.mxu0 0
      %1473 = vmatpush2.bf16.msra.mxu0 0
      %1474 = vmatprep.subr.bf16.mxu0 0
      %1475 = vmatpush2.bf16.msra.mxu0 0
      %1476 = vmatprep.subr.bf16.mxu0 0
      %1477 = vmatpush2.bf16.msra.mxu0 0
      %1478 = vmatprep.subr.bf16.mxu0 0
      %1479 = vmatpush2.bf16.msra.mxu0 0
      %1480 = vmatprep.subr.bf16.mxu0 0
      %1481 = vmatpush2.bf16.msra.mxu0 0
      %1482 = vmatprep.subr.bf16.mxu0 0
      %1483 = vmatpush2.bf16.msra.mxu0 0
      %1484 = vmatprep.subr.bf16.mxu0 0
      %1485 = vmatpush2.bf16.msra.mxu0 0
      %1486 = vmatprep.mubr.bf16.mxu0 0
      %1487 = vmatmul.mubr.bf16.gmra.mxu0 %v1440
      %v1488 = vpop.f32.mrf.mxu0
      %v1489 = vadd.f32 0.0, %v1488
      %v1490 = vpop.f32.mrf.mxu0
      %v1491 = vpop.f32.mrf.mxu0
      %v1492 = vadd.f32 0.0, %v1491
      %v1493 = vpop.f32.mrf.mxu0
      %1494 = vmatprep.mubr.bf16.mxu0 0
      %1495 = vmatmul.mubr.bf16.gmra.mxu0 %v1443
      %v1496 = vpop.f32.mrf.mxu0
      %v1497 = vadd.f32 0.0, %v1496
      %v1498 = vpop.f32.mrf.mxu0
      %v1499 = vpop.f32.mrf.mxu0
      %v1500 = vadd.f32 0.0, %v1499
      %v1501 = vpop.f32.mrf.mxu0
      %1502 = vmatprep.mubr.bf16.mxu0 0
      %1503 = vmatmul.mubr.bf16.gmra.mxu0 %v1446
      %v1504 = vpop.f32.mrf.mxu0
      %v1505 = vadd.f32 0.0, %v1504
      %v1506 = vpop.f32.mrf.mxu0
      %v1507 = vpop.f32.mrf.mxu0
      %v1508 = vadd.f32 0.0, %v1507
      %v1509 = vpop.f32.mrf.mxu0
      %1510 = vmatprep.mubr.bf16.mxu0 0
      %1511 = vmatmul.mubr.bf16.gmra.mxu0 %v1449
      %v1512 = vpop.f32.mrf.mxu0
      %v1513 = vadd.f32 0.0, %v1512
      %v1514 = vpop.f32.mrf.mxu0
      %v1515 = vpop.f32.mrf.mxu0
      %v1516 = vadd.f32 0.0, %v1515
      %v1517 = vpop.f32.mrf.mxu0
      %1518 = vdwg.mxu0
      %v1519 = vadd.f32 %v1283, %v1489
      %v1520 = vadd.f32 %v1284, %v1492
      %v1521 = vadd.f32 %v1285, %v1497
      %v1522 = vadd.f32 %v1286, %v1500
      %v1523 = vadd.f32 %v1287, %v1505
      %v1524 = vadd.f32 %v1288, %v1508
      %v1525 = vadd.f32 %v1289, %v1513
      %v1526 = vadd.f32 %v1290, %v1516
      %v1527 = vpack.c.bf16 %v1520, %v1519
      %v1528 = vpack.c.bf16 %v1522, %v1521
      %v1529 = vpack.c.bf16 %v1524, %v1523
      %v1530 = vpack.c.bf16 %v1526, %v1525
      %v1535 = vunpack.c.l.b16 %v1527
      %v1536 = vunpack.c.h.b16 %v1527
      %v1537 = vunpack.c.l.b16 %v1528
      %v1538 = vunpack.c.h.b16 %v1528
      %v1539 = vunpack.c.l.b16 %v1529
      %v1540 = vunpack.c.h.b16 %v1529
      %v1541 = vunpack.c.l.b16 %v1530
      %v1542 = vunpack.c.h.b16 %v1530
      %v1543 = vpack.c.b16 %v1535, %v1535
      %v1544 = vpack.c.b16 %v1536, %v1536
      %v1545 = vpack.c.b16 %v1537, %v1537
      %v1546 = vpack.c.b16 %v1538, %v1538
      %v1547 = vpack.c.b16 %v1539, %v1539
      %v1548 = vpack.c.b16 %v1540, %v1540
      %v1549 = vpack.c.b16 %v1541, %v1541
      %v1550 = vpack.c.b16 %v1542, %v1542
      %vm1559 = vcmask 519168
      %1560 = vst.msk [vmem:[%s408] sm:$0xf] %vm1559, %v1543
      %1561 = vst.msk [vmem:[%s408 + $0x4] sm:$0xf] %vm1559, %v1544
      %1562 = vst.msk [vmem:[%s408 + $0x8] sm:$0xf] %vm1559, %v1545
      %1563 = vst.msk [vmem:[%s408 + $0xc] sm:$0xf] %vm1559, %v1546
      %1564 = vst.msk [vmem:[%s408 + $0x10] sm:$0xf] %vm1559, %v1547
      %1565 = vst.msk [vmem:[%s408 + $0x14] sm:$0xf] %vm1559, %v1548
      %1566 = vst.msk [vmem:[%s408 + $0x18] sm:$0xf] %vm1559, %v1549
      %1567 = vst.msk [vmem:[%s408 + $0x1c] sm:$0xf] %vm1559, %v1550
      %v1568 = vld [vmem:[%s398] sm:$0xff]
      %v1569 = vld [vmem:[%s398 + $0x8] sm:$0xff]
      %v1570 = vld [vmem:[%s398 + $0x10] sm:$0xff]
      %v1571 = vld [vmem:[%s398 + $0x18] sm:$0xff]
      %v1572 = vld [vmem:[%s398 + $0x20] sm:$0xff]
      %v1573 = vld [vmem:[%s398 + $0x28] sm:$0xff]
      %v1574 = vld [vmem:[%s398 + $0x30] sm:$0xff]
      %v1575 = vld [vmem:[%s398 + $0x38] sm:$0xff]
      %1577 = vset.pattern.permute.xlu0 0
      %1578 = vperm.xlu0 %1577, %v1568
      %v1579 = vpop.permute.xlu0 %1578
      %1582 = vset.pattern.permute.xlu0 0
      %1583 = vperm.xlu0 %1582, %v1569
      %v1584 = vpop.permute.xlu0 %1583
      %1587 = vset.pattern.permute.xlu0 0
      %1588 = vperm.xlu0 %1587, %v1570
      %v1589 = vpop.permute.xlu0 %1588
      %1592 = vset.pattern.permute.xlu0 0
      %1593 = vperm.xlu0 %1592, %v1571
      %v1594 = vpop.permute.xlu0 %1593
      %1597 = vset.pattern.permute.xlu0 0
      %1598 = vperm.xlu0 %1597, %v1572
      %v1599 = vpop.permute.xlu0 %1598
      %1602 = vset.pattern.permute.xlu0 0
      %1603 = vperm.xlu0 %1602, %v1573
      %v1604 = vpop.permute.xlu0 %1603
      %1607 = vset.pattern.permute.xlu0 0
      %1608 = vperm.xlu0 %1607, %v1574
      %v1609 = vpop.permute.xlu0 %1608
      %1612 = vset.pattern.permute.xlu0 0
      %1613 = vperm.xlu0 %1612, %v1575
      %v1614 = vpop.permute.xlu0 %1613
      %v1616 = vmul.f32 %v1519, %v1579
      %v1617 = vmul.f32 %v1520, %v1584
      %v1618 = vmul.f32 %v1521, %v1589
      %v1619 = vmul.f32 %v1522, %v1594
      %v1620 = vmul.f32 %v1523, %v1599
      %v1621 = vmul.f32 %v1524, %v1604
      %v1622 = vmul.f32 %v1525, %v1609
      %v1623 = vmul.f32 %v1526, %v1614
      %vm1624 = vcmask 523264
      %v1625 = vsel %vm1624, %v1616, 0.0
      %v1626 = vsel %vm1624, %v1617, 0.0
      %v1627 = vadd.f32 %v1625, %v1626
      %v1628 = vsel %vm1624, %v1618, 0.0
      %v1629 = vadd.f32 %v1627, %v1628
      %v1630 = vsel %vm1624, %v1619, 0.0
      %v1631 = vadd.f32 %v1629, %v1630
      %v1632 = vsel %vm1624, %v1620, 0.0
      %v1633 = vadd.f32 %v1631, %v1632
      %v1634 = vsel %vm1624, %v1621, 0.0
      %v1635 = vadd.f32 %v1633, %v1634
      %v1636 = vsel %vm1624, %v1622, 0.0
      %v1637 = vadd.f32 %v1635, %v1636
      %v1638 = vsel %vm1624, %v1623, 0.0
      %v1639 = vadd.f32 %v1637, %v1638
      %v1640 = vrot.slane %v1639, 4
      %v1641 = vadd.f32 %v1639, %v1640
      %v1642 = vrot.slane %v1641, 2
      %v1643 = vadd.f32 %v1641, %v1642
      %v1644 = vrot.slane %v1643, 1
      %v1645 = vadd.f32 %v1643, %v1644
      %vm1646 = vcmask 516096
      %1647 = vst.msk [vmem:[%s415] sm:$0x1] %vm1646, %v1645
      %v1648 = vmul.f32 %v1616, %v1519
      %v1649 = vmul.f32 %v1617, %v1520
      %v1650 = vmul.f32 %v1618, %v1521
      %v1651 = vmul.f32 %v1619, %v1522
      %v1652 = vmul.f32 %v1620, %v1523
      %v1653 = vmul.f32 %v1621, %v1524
      %v1654 = vmul.f32 %v1622, %v1525
      %v1655 = vmul.f32 %v1623, %v1526
      %v1656 = vsel %vm1624, %v1648, 0.0
      %v1657 = vsel %vm1624, %v1649, 0.0
      %v1658 = vadd.f32 %v1656, %v1657
      %v1659 = vsel %vm1624, %v1650, 0.0
      %v1660 = vadd.f32 %v1658, %v1659
      %v1661 = vsel %vm1624, %v1651, 0.0
      %v1662 = vadd.f32 %v1660, %v1661
      %v1663 = vsel %vm1624, %v1652, 0.0
      %v1664 = vadd.f32 %v1662, %v1663
      %v1665 = vsel %vm1624, %v1653, 0.0
      %v1666 = vadd.f32 %v1664, %v1665
      %v1667 = vsel %vm1624, %v1654, 0.0
      %v1668 = vadd.f32 %v1666, %v1667
      %v1669 = vsel %vm1624, %v1655, 0.0
      %v1670 = vadd.f32 %v1668, %v1669
      %v1671 = vrot.slane %v1670, 4
      %v1672 = vadd.f32 %v1670, %v1671
      %v1673 = vrot.slane %v1672, 2
      %v1674 = vadd.f32 %v1672, %v1673
      %v1675 = vrot.slane %v1674, 1
      %v1676 = vadd.f32 %v1674, %v1675
      %1677 = vst.msk [vmem:[%s421] sm:$0x1] %vm1646, %v1676
      %s1678 = smul.u32 8, %s23
      %p1679 = scmp.lt.s32.totalorder %s22, 1
      %s1680 = scalar_select %p1679, %s22, 1
      %p1681 = scmp.lt.s32.totalorder %s1678, 7
      %s1682 = scalar_select %p1681, %s1678, 7
      %s1683 = smul.addr %s1680, 8
      %s1684 = sadd.s32 %s1682, %s1683
      %s1685 = smul.addr %s1684, 4
      %s1686 = scalar_lea.vmem %s4, %s1685
      %p1687 = scmp.lt.s32.totalorder %s22, 1
      %s1688 = scalar_select %p1687, %s22, 1
      %p1689 = scmp.lt.s32.totalorder %s23, 0
      %s1690 = scalar_select %p1689, %s23, 0
      %s1691 = sadd.s32 %s1690, %s1688
      %s1692 = scalar_lea.vmem %s5, %s1691
      %p1693 = scmp.lt.s32.totalorder %s22, 1
      %s1694 = scalar_select %p1693, %s22, 1
      %p1695 = scmp.lt.s32.totalorder %s23, 0
      %s1696 = scalar_select %p1695, %s23, 0
      %s1697 = sadd.s32 %s1696, %s1694
      %s1698 = scalar_lea.vmem %s6, %s1697
      // Predicated region
      $region37: #{spatial_path.4} parent=35 // pred_check
        %p1699 = pneg %p157
      $region38: #{spatial_path.4} parent=35 // pred_check_branch
        %1701 = sbr.rel (%p1699) target = $region40
      $region39: #{spatial_path.4} parent=35 // pred_region
        %s1702 = smul.u32 8, %s23
      $region40: #{spatial_path.4} parent=35 // pred_fallthru
        _
      // Predicated region
      $region41: #{spatial_path.4} parent=35 // pred_check
        %p1703 = pneg %p185
      $region42: #{spatial_path.4} parent=35 // pred_check_branch
        %1705 = sbr.rel (%p1703) target = $region44
      $region43: #{spatial_path.4} parent=35 // pred_region
        _
      $region44: #{spatial_path.4} parent=35 // pred_fallthru
        _
      // Predicated region
      $region45: #{spatial_path.4} parent=35 // pred_check
        %p1706 = pneg %p213
      $region46: #{spatial_path.4} parent=35 // pred_check_branch
        %1708 = sbr.rel (%p1706) target = $region48
      $region47: #{spatial_path.4} parent=35 // pred_region
        _
      $region48: #{spatial_path.4} parent=35 // pred_fallthru
        _
    $region36: #{spatial_path.4} parent=5 // pred_fallthru
      _
    %p1709 = scmp.le.s32.totalorder 2, %s13
    // Predicated region
    $region49: #{spatial_path.4} parent=5 // pred_check
      %p1710 = pneg %p1709
    $region50: #{spatial_path.4} parent=5 // pred_check_branch
      %1712 = sbr.rel (%p1710) target = $region52
    $region51: #{spatial_path.4} parent=5 // pred_region
      %s1713 = ssub.s32 %s13, 2
      // Predicated region
      $region53: #{spatial_path.4} parent=51 // pred_check
        %p1714 = pneg %p163
      $region54: #{spatial_path.4} parent=51 // pred_check_branch
        %1716 = sbr.rel (%p1714) target = $region56
      $region55: #{spatial_path.4} parent=51 // pred_region
        %s1717 = smul.u32 8, %s25
        %p1718 = scmp.lt.s32.totalorder %s24, 1
        %s1719 = scalar_select %p1718, %s24, 1
        %p1720 = scmp.lt.s32.totalorder %s1717, 7
        %s1721 = scalar_select %p1720, %s1717, 7
        %s1722 = smul.addr %s1719, 8
        %s1723 = sadd.s32 %s1721, %s1722
        %s1724 = smul.addr %s1723, 4
        %s1725 = scalar_lea.vmem %s4, %s1724
      $region56: #{spatial_path.4} parent=51 // pred_fallthru
        _
      // Predicated region
      $region57: #{spatial_path.4} parent=51 // pred_check
        %p1726 = pneg %p191
      $region58: #{spatial_path.4} parent=51 // pred_check_branch
        %1728 = sbr.rel (%p1726) target = $region60
      $region59: #{spatial_path.4} parent=51 // pred_region
        %p1729 = scmp.lt.s32.totalorder %s24, 1
        %s1730 = scalar_select %p1729, %s24, 1
        %p1731 = scmp.lt.s32.totalorder %s25, 0
        %s1732 = scalar_select %p1731, %s25, 0
        %s1733 = sadd.s32 %s1732, %s1730
        %s1734 = scalar_lea.vmem %s5, %s1733
      $region60: #{spatial_path.4} parent=51 // pred_fallthru
        _
      // Predicated region
      $region61: #{spatial_path.4} parent=51 // pred_check
        %p1735 = pneg %p219
      $region62: #{spatial_path.4} parent=51 // pred_check_branch
        %1737 = sbr.rel (%p1735) target = $region64
      $region63: #{spatial_path.4} parent=51 // pred_region
        %p1738 = scmp.lt.s32.totalorder %s24, 1
        %s1739 = scalar_select %p1738, %s24, 1
        %p1740 = scmp.lt.s32.totalorder %s25, 0
        %s1741 = scalar_select %p1740, %s25, 0
        %s1742 = sadd.s32 %s1741, %s1739
        %s1743 = scalar_lea.vmem %s6, %s1742
      $region64: #{spatial_path.4} parent=51 // pred_fallthru
        _
    $region52: #{spatial_path.4} parent=5 // pred_fallthru
      _
  $region6: #{spatial_path.4} parent=0 // loop_footer
    %s17 = sadd.s32 1, %s13
  $region7: #{spatial_path.4} parent=0 // loop_footer_branch
    %12 = sbr.rel target = $region3
  $region8: #{spatial_path.4} parent=0 // loop_exit
    _

// kernel: spatial_path.5
$region0: #{spatial_path.5}
  #allocation0 [shape = 'u32[]', space=smem, size = 0x4, offset = 0x4, fixed_abs, tag = 'smem constant byte address 0x4 - core index']
  #allocation1 [shape = 'u32[144,128]{1,0:T(1,128)}', space=vmem, size = 0x12000, scoped, tag = 'internal scratch']
  %s0 = inlined_call_operand.vmem [shape: bf16[2,5,18,128], index: 0, kind: input, shape index: {}, may-alias: {0,1}]
  %s1 = inlined_call_operand.vmem [shape: bf16[2,5,18,128], index: 1, kind: input, shape index: {}, may-alias: {0,1}]
  %s2 = inlined_call_operand.vmem [shape: bf16[6,128,128], index: 2, kind: input, shape index: {}]
  %s3 = inlined_call_operand.vmem [shape: f32[32,1], index: 3, kind: input, shape index: {}]
  %s4 = inlined_call_operand.vmem [shape: bf16[2,32,128], index: 4, kind: output, shape index: {0}]
  %s5 = inlined_call_operand.vmem [shape: f32[2,1,1,128], index: 5, kind: output, shape index: {1}]
  %s6 = inlined_call_operand.vmem [shape: f32[2,1,1,128], index: 6, kind: output, shape index: {2}]
  %7 = xla_tuple %s4, %s5, %s6
  %s8 = sld [smem:[#allocation0]]
  $region65: #{spatial_path.5} parent=0
    _
  %s10 = ssub.s32 1, %s8
  %s11 = scalar_select 0, %s10, %s8
  loop: start=0, step=1, limit=4
  $region2: #{spatial_path.5} parent=0 // loop_pre_header
    _
  $region3: #{spatial_path.5} parent=0 // loop_header
    %s13 = sphi 0, %s17
    %p14 = scmp.ge.s32.totalorder %s13, 4
    %s20 = sphi 0, %s32
    %s21 = sphi 0, %s28
    %s22 = sphi 0, %s20
    %s23 = sphi 0, %s21
    %s24 = sphi 0, %s22
    %s25 = sphi 0, %s23
    %s37 = sphi 0, %s39
    %s40 = sphi 0, %s37
    %s41 = sphi 0, %s40
    %s57 = sphi 0, %s41
    %s69 = sphi 0, %s71
    %s72 = sphi 0, %s69
    %s73 = sphi 0, %s72
    %s89 = sphi 0, %s73
    %s93 = sphi 0, %s93
    %s95 = sphi 0, %s93
    %s96 = sphi 0, %s95
    %s110 = sphi 0, %s96
    %s116 = sphi 0, %s118
    %s119 = sphi 0, %s116
    %s120 = sphi 0, %s119
    %s136 = sphi 0, %s120
    %s144 = sphi 0, %s146
    %s147 = sphi 0, %s144
    %s148 = sphi 0, %s147
    %s164 = sphi 0, %s148
    %s172 = sphi 0, %s174
    %s175 = sphi 0, %s172
    %s176 = sphi 0, %s175
    %s192 = sphi 0, %s176
    %s200 = sphi 0, %s202
    %s203 = sphi 0, %s200
    %s204 = sphi 0, %s203
    %s220 = sphi 0, %s204
  $region4: #{spatial_path.5} parent=0 // loop_header_branch
    %16 = sbr.rel (%p14) target = $region8
  $region5: #{spatial_path.5} parent=0 // loop_body
    %s18 = ssub.s32 %s13, 1
    %s19 = ssub.s32 %s13, 2
    %s26 = sadd.s32 1, %s21
    %p27 = scmp.ge.s32.totalorder %s26, 1
    %s28 = scalar_select %p27, 0, %s26
    %s29 = sadd.s32 1, %s20
    %s30 = scalar_select %p27, %s29, %s20
    %p31 = scmp.ge.s32.totalorder %s30, 2
    %s32 = scalar_select %p31, 0, %s30
    %s33 = ssub.s32 %s20, %s32
    %s34 = ssub.s32 %s21, %s28
    %s35 = sor.u32 %s33, %s34
    %p36 = scmp.eq.s32.totalorder %s35, 0
    %s38 = sadd.s32 %s37, 1
    %s39 = scalar_select %p36, %s37, %s38
    %p42 = pneg %p36
    %p43 = scmp.eq.s32.totalorder %s13, 1
    %p44 = por %p42, %p43
    %p45 = scmp.ne.s32.totalorder %s37, %s40
    %p46 = scmp.eq.s32.totalorder %s13, 0
    %p47 = por %p45, %p46
    %p48 = scmp.ne.s32.totalorder %s37, %s40
    %p49 = scmp.eq.s32.totalorder %s18, 1
    %p50 = por %p48, %p49
    %p51 = scmp.ne.s32.totalorder %s40, %s41
    %p52 = scmp.eq.s32.totalorder %s18, 0
    %p53 = por %p51, %p52
    %p54 = scmp.ne.s32.totalorder %s40, %s41
    %p55 = scmp.eq.s32.totalorder %s19, 1
    %p56 = por %p54, %p55
    %p58 = scmp.ne.s32.totalorder %s41, %s57
    %p59 = scmp.eq.s32.totalorder %s19, 0
    %p60 = por %p58, %p59
    %s61 = sadd.s32 %s21, 1
    %s62 = smul.u32 %s61, 4
    %s63 = sadd.s32 %s28, 1
    %s64 = smul.u32 %s63, 4
    %s65 = ssub.s32 %s20, %s32
    %s66 = ssub.s32 %s62, %s64
    %s67 = sor.u32 %s65, %s66
    %p68 = scmp.eq.s32.totalorder %s67, 0
    %s70 = sadd.s32 %s69, 1
    %s71 = scalar_select %p68, %s69, %s70
    %p74 = pneg %p68
    %p75 = scmp.eq.s32.totalorder %s13, 1
    %p76 = por %p74, %p75
    %p77 = scmp.ne.s32.totalorder %s69, %s72
    %p78 = scmp.eq.s32.totalorder %s13, 0
    %p79 = por %p77, %p78
    %p80 = scmp.ne.s32.totalorder %s69, %s72
    %p81 = scmp.eq.s32.totalorder %s18, 1
    %p82 = por %p80, %p81
    %p83 = scmp.ne.s32.totalorder %s72, %s73
    %p84 = scmp.eq.s32.totalorder %s18, 0
    %p85 = por %p83, %p84
    %p86 = scmp.ne.s32.totalorder %s72, %s73
    %p87 = scmp.eq.s32.totalorder %s19, 1
    %p88 = por %p86, %p87
    %p90 = scmp.ne.s32.totalorder %s73, %s89
    %p91 = scmp.eq.s32.totalorder %s19, 0
    %p92 = por %p90, %p91
    %s94 = sadd.s32 %s93, 1
    %p97 = scmp.eq.s32.totalorder %s13, 1
    %p98 = scmp.ne.s32.totalorder %s93, %s95
    %p99 = scmp.eq.s32.totalorder %s13, 0
    %p100 = por %p98, %p99
    %p101 = scmp.ne.s32.totalorder %s93, %s95
    %p102 = scmp.eq.s32.totalorder %s18, 1
    %p103 = por %p101, %p102
    %p104 = scmp.ne.s32.totalorder %s95, %s96
    %p105 = scmp.eq.s32.totalorder %s18, 0
    %p106 = por %p104, %p105
    %p107 = scmp.ne.s32.totalorder %s95, %s96
    %p108 = scmp.eq.s32.totalorder %s19, 1
    %p109 = por %p107, %p108
    %p111 = scmp.ne.s32.totalorder %s96, %s110
    %p112 = scmp.eq.s32.totalorder %s19, 0
    %p113 = por %p111, %p112
    %s114 = ssub.s32 %s21, %s28
    %p115 = scmp.eq.s32.totalorder %s114, 0
    %s117 = sadd.s32 %s116, 1
    %s118 = scalar_select %p115, %s116, %s117
    %p121 = pneg %p115
    %p122 = scmp.eq.s32.totalorder %s13, 1
    %p123 = por %p121, %p122
    %p124 = scmp.ne.s32.totalorder %s116, %s119
    %p125 = scmp.eq.s32.totalorder %s13, 0
    %p126 = por %p124, %p125
    %p127 = scmp.ne.s32.totalorder %s116, %s119
    %p128 = scmp.eq.s32.totalorder %s18, 1
    %p129 = por %p127, %p128
    %p130 = scmp.ne.s32.totalorder %s119, %s120
    %p131 = scmp.eq.s32.totalorder %s18, 0
    %p132 = por %p130, %p131
    %p133 = scmp.ne.s32.totalorder %s119, %s120
    %p134 = scmp.eq.s32.totalorder %s19, 1
    %p135 = por %p133, %p134
    %p137 = scmp.ne.s32.totalorder %s120, %s136
    %p138 = scmp.eq.s32.totalorder %s19, 0
    %p139 = por %p137, %p138
    %s140 = ssub.s32 %s20, %s32
    %s141 = ssub.s32 %s21, %s28
    %s142 = sor.u32 %s140, %s141
    %p143 = scmp.eq.s32.totalorder %s142, 0
    %s145 = sadd.s32 %s144, 1
    %s146 = scalar_select %p143, %s144, %s145
    %p149 = pneg %p143
    %p150 = scmp.eq.s32.totalorder %s13, 1
    %p151 = por %p149, %p150
    %p152 = scmp.ne.s32.totalorder %s144, %s147
    %p153 = scmp.eq.s32.totalorder %s13, 0
    %p154 = por %p152, %p153
    %p155 = scmp.ne.s32.totalorder %s144, %s147
    %p156 = scmp.eq.s32.totalorder %s18, 1
    %p157 = por %p155, %p156
    %p158 = scmp.ne.s32.totalorder %s147, %s148
    %p159 = scmp.eq.s32.totalorder %s18, 0
    %p160 = por %p158, %p159
    %p161 = scmp.ne.s32.totalorder %s147, %s148
    %p162 = scmp.eq.s32.totalorder %s19, 1
    %p163 = por %p161, %p162
    %p165 = scmp.ne.s32.totalorder %s148, %s164
    %p166 = scmp.eq.s32.totalorder %s19, 0
    %p167 = por %p165, %p166
    %s168 = ssub.s32 %s20, %s32
    %s169 = ssub.s32 %s21, %s28
    %s170 = sor.u32 %s168, %s169
    %p171 = scmp.eq.s32.totalorder %s170, 0
    %s173 = sadd.s32 %s172, 1
    %s174 = scalar_select %p171, %s172, %s173
    %p177 = pneg %p171
    %p178 = scmp.eq.s32.totalorder %s13, 1
    %p179 = por %p177, %p178
    %p180 = scmp.ne.s32.totalorder %s172, %s175
    %p181 = scmp.eq.s32.totalorder %s13, 0
    %p182 = por %p180, %p181
    %p183 = scmp.ne.s32.totalorder %s172, %s175
    %p184 = scmp.eq.s32.totalorder %s18, 1
    %p185 = por %p183, %p184
    %p186 = scmp.ne.s32.totalorder %s175, %s176
    %p187 = scmp.eq.s32.totalorder %s18, 0
    %p188 = por %p186, %p187
    %p189 = scmp.ne.s32.totalorder %s175, %s176
    %p190 = scmp.eq.s32.totalorder %s19, 1
    %p191 = por %p189, %p190
    %p193 = scmp.ne.s32.totalorder %s176, %s192
    %p194 = scmp.eq.s32.totalorder %s19, 0
    %p195 = por %p193, %p194
    %s196 = ssub.s32 %s20, %s32
    %s197 = ssub.s32 %s21, %s28
    %s198 = sor.u32 %s196, %s197
    %p199 = scmp.eq.s32.totalorder %s198, 0
    %s201 = sadd.s32 %s200, 1
    %s202 = scalar_select %p199, %s200, %s201
    %p205 = pneg %p199
    %p206 = scmp.eq.s32.totalorder %s13, 1
    %p207 = por %p205, %p206
    %p208 = scmp.ne.s32.totalorder %s200, %s203
    %p209 = scmp.eq.s32.totalorder %s13, 0
    %p210 = por %p208, %p209
    %p211 = scmp.ne.s32.totalorder %s200, %s203
    %p212 = scmp.eq.s32.totalorder %s18, 1
    %p213 = por %p211, %p212
    %p214 = scmp.ne.s32.totalorder %s203, %s204
    %p215 = scmp.eq.s32.totalorder %s18, 0
    %p216 = por %p214, %p215
    %p217 = scmp.ne.s32.totalorder %s203, %s204
    %p218 = scmp.eq.s32.totalorder %s19, 1
    %p219 = por %p217, %p218
    %p221 = scmp.ne.s32.totalorder %s204, %s220
    %p222 = scmp.eq.s32.totalorder %s19, 0
    %p223 = por %p221, %p222
    %p224 = scmp.le.s32.totalorder 1, %s13
    %p225 = scmp.lt.s32.totalorder %s13, 3
    %p226 = pnand %p224, %p225
    %p227 = pneg %p226
    // Predicated region
    $region9: #{spatial_path.5} parent=5 // pred_check
      _
    $region10: #{spatial_path.5} parent=5 // pred_check_branch
      %229 = sbr.rel (%p226) target = $region12
    $region11: #{spatial_path.5} parent=5 // pred_region
      %s230 = ssub.s32 %s13, 1
      // Predicated region
      $region13: #{spatial_path.5} parent=11 // pred_check
        %p231 = pneg %p106
      $region14: #{spatial_path.5} parent=11 // pred_check_branch
        %233 = sbr.rel (%p231) target = $region16
      $region15: #{spatial_path.5} parent=11 // pred_region
        _
      $region16: #{spatial_path.5} parent=11 // pred_fallthru
        _
      // Predicated region
      $region17: #{spatial_path.5} parent=11 // pred_check
        %p234 = pneg %p132
      $region18: #{spatial_path.5} parent=11 // pred_check_branch
        %236 = sbr.rel (%p234) target = $region20
      $region19: #{spatial_path.5} parent=11 // pred_region
        %s237 = smul.u32 4, %s23
        %p238 = scmp.lt.s32.totalorder %s237, 3
        %s239 = scalar_select %p238, %s237, 3
        %s240 = smul.addr %s239, 8
        %s241 = scalar_lea.vmem %s3, %s240
        %s242 = smul.u32 4, %s23
      $region20: #{spatial_path.5} parent=11 // pred_fallthru
        _
    $region12: #{spatial_path.5} parent=5 // pred_fallthru
      _
    %p243 = scmp.lt.s32.totalorder %s13, 2
    // Predicated region
    $region21: #{spatial_path.5} parent=5 // pred_check
      %p244 = pneg %p243
    $region22: #{spatial_path.5} parent=5 // pred_check_branch
      %246 = sbr.rel (%p244) target = $region24
    $region23: #{spatial_path.5} parent=5 // pred_region
      // Predicated region
      $region25: #{spatial_path.5} parent=23 // pred_check
        %p247 = pneg %p47
      $region26: #{spatial_path.5} parent=23 // pred_check_branch
        %249 = sbr.rel (%p247) target = $region28
      $region27: #{spatial_path.5} parent=23 // pred_region
        %s250 = smul.u32 4, %s21
        %s251 = ssub.s32 5, %s250
        %p252 = scmp.lt.s32.totalorder %s251, 4
        %s253 = scalar_select %p252, %s251, 4
        %s254 = smul.u32 64, %s253
        %s255 = smul.u32 %s254, 3
        %p256 = scmp.lt.s32.totalorder %s20, 1
        %s257 = scalar_select %p256, %s20, 1
        %p258 = scmp.lt.s32.totalorder %s250, 4
        %s259 = scalar_select %p258, %s250, 4
        %s260 = smul.addr %s259, 3
        %s261 = smul.addr %s257, 15
        %s262 = sadd.s32 %s260, %s261
        %s263 = smul.addr %s262, 4
        %s264 = scalar_lea.vmem %s0, %s263
        %s265 = smul.u32 4, %s21
        %s266 = ssub.s32 5, %s265
        %p267 = scmp.lt.s32.totalorder %s266, 4
        %s268 = scalar_select %p267, %s266, 4
        %s269 = smul.u32 64, %s268
        %s270 = smul.u32 %s269, 3
      $region28: #{spatial_path.5} parent=23 // pred_fallthru
        _
      // Predicated region
      $region29: #{spatial_path.5} parent=23 // pred_check
        %p271 = pneg %p79
      $region30: #{spatial_path.5} parent=23 // pred_check_branch
        %273 = sbr.rel (%p271) target = $region32
      $region31: #{spatial_path.5} parent=23 // pred_region
        %s274 = sadd.s32 %s21, 1
        %s275 = smul.u32 %s274, 4
        %p276 = scmp.lt.s32.totalorder %s20, 1
        %s277 = scalar_select %p276, %s20, 1
        %p278 = scmp.lt.s32.totalorder %s275, 4
        %s279 = scalar_select %p278, %s275, 4
        %s280 = smul.addr %s279, 3
        %s281 = smul.addr %s277, 15
        %s282 = sadd.s32 %s280, %s281
        %s283 = smul.addr %s282, 4
        %s284 = scalar_lea.vmem %s1, %s283
        %s285 = sadd.s32 %s21, 1
        %s286 = smul.u32 %s285, 4
      $region32: #{spatial_path.5} parent=23 // pred_fallthru
        _
    $region24: #{spatial_path.5} parent=5 // pred_fallthru
      _
    %p287 = scmp.le.s32.totalorder 1, %s13
    %p288 = scmp.lt.s32.totalorder %s13, 3
    %p289 = pnand %p287, %p288
    %p290 = pneg %p289
    // Predicated region
    $region33: #{spatial_path.5} parent=5 // pred_check
      _
    $region34: #{spatial_path.5} parent=5 // pred_check_branch
      %292 = sbr.rel (%p289) target = $region36
    $region35: #{spatial_path.5} parent=5 // pred_region
      %s293 = ssub.s32 %s13, 1
      %s294 = smul.u32 4, %s23
      %s295 = ssub.s32 5, %s294
      %p296 = scmp.lt.s32.totalorder %s295, 4
      %s297 = scalar_select %p296, %s295, 4
      %s298 = smul.u32 64, %s297
      %s299 = smul.u32 %s298, 3
      %p300 = scmp.lt.s32.totalorder %s22, 1
      %s301 = scalar_select %p300, %s22, 1
      %p302 = scmp.lt.s32.totalorder %s294, 4
      %s303 = scalar_select %p302, %s294, 4
      %s304 = smul.addr %s303, 3
      %s305 = smul.addr %s301, 15
      %s306 = sadd.s32 %s304, %s305
      %s307 = smul.addr %s306, 4
      %s308 = scalar_lea.vmem %s0, %s307
      %p309 = pneg %p53
      %p310 = pneg %p50
      %s311 = sadd.s32 %s23, 1
      %s312 = smul.u32 %s311, 4
      %p313 = scmp.lt.s32.totalorder %s22, 1
      %s314 = scalar_select %p313, %s22, 1
      %p315 = scmp.lt.s32.totalorder %s312, 4
      %s316 = scalar_select %p315, %s312, 4
      %s317 = smul.addr %s316, 3
      %s318 = smul.addr %s314, 15
      %s319 = sadd.s32 %s317, %s318
      %s320 = smul.addr %s319, 4
      %s321 = scalar_lea.vmem %s1, %s320
      %p322 = pneg %p85
      %p323 = pneg %p82
      %p324 = pneg %p106
      %p325 = pneg %p103
      %s326 = smul.u32 4, %s23
      %p327 = scmp.lt.s32.totalorder %s326, 3
      %s328 = scalar_select %p327, %s326, 3
      %s329 = smul.addr %s328, 8
      %s330 = scalar_lea.vmem %s3, %s329
      %p331 = pneg %p132
      %p332 = pneg %p129
      %p333 = pneg %p160
      %p334 = pneg %p157
      %s335 = smul.u32 4, %s23
      %p336 = scmp.lt.s32.totalorder %s22, 1
      %s337 = scalar_select %p336, %s22, 1
      %p338 = scmp.lt.s32.totalorder %s335, 3
      %s339 = scalar_select %p338, %s335, 3
      %s340 = smul.addr %s337, 4
      %s341 = sadd.s32 %s339, %s340
      %s342 = smul.addr %s341, 4
      %s343 = scalar_lea.vmem %s4, %s342
      %p344 = pneg %p188
      %p345 = pneg %p185
      %p346 = scmp.lt.s32.totalorder %s22, 1
      %s347 = scalar_select %p346, %s22, 1
      %p348 = scmp.lt.s32.totalorder %s23, 0
      %s349 = scalar_select %p348, %s23, 0
      %s350 = sadd.s32 %s349, %s347
      %s351 = scalar_lea.vmem %s5, %s350
      %p352 = pneg %p216
      %p353 = pneg %p213
      %p354 = scmp.lt.s32.totalorder %s22, 1
      %s355 = scalar_select %p354, %s22, 1
      %p356 = scmp.lt.s32.totalorder %s23, 0
      %s357 = scalar_select %p356, %s23, 0
      %s358 = sadd.s32 %s357, %s355
      %s359 = scalar_lea.vmem %s6, %s358
      %s360 = smul.u32 4, %s23
      %s361 = ssub.s32 5, %s360
      %p362 = scmp.lt.s32.totalorder %s361, 4
      %s363 = scalar_select %p362, %s361, 4
      %s364 = smul.u32 64, %s363
      %s365 = smul.u32 %s364, 3
      %p366 = scmp.lt.s32.totalorder %s22, 1
      %s367 = scalar_select %p366, %s22, 1
      %p368 = scmp.lt.s32.totalorder %s360, 4
      %s369 = scalar_select %p368, %s360, 4
      %s370 = smul.addr %s369, 3
      %s371 = smul.addr %s367, 15
      %s372 = sadd.s32 %s370, %s371
      %s373 = smul.addr %s372, 4
      %s374 = scalar_lea.vmem %s0, %s373
      %s375 = smul.u32 4, %s23
      %s376 = ssub.s32 5, %s375
      %p377 = scmp.lt.s32.totalorder %s376, 4
      %s378 = scalar_select %p377, %s376, 4
      %s379 = smul.u32 64, %s378
      %s380 = smul.u32 %s379, 3
      %s381 = sadd.s32 %s23, 1
      %s382 = smul.u32 %s381, 4
      %p383 = scmp.lt.s32.totalorder %s22, 1
      %s384 = scalar_select %p383, %s22, 1
      %p385 = scmp.lt.s32.totalorder %s382, 4
      %s386 = scalar_select %p385, %s382, 4
      %s387 = smul.addr %s386, 3
      %s388 = smul.addr %s384, 15
      %s389 = sadd.s32 %s387, %s388
      %s390 = smul.addr %s389, 4
      %s391 = scalar_lea.vmem %s1, %s390
      %s392 = sadd.s32 %s23, 1
      %s393 = smul.u32 %s392, 4
      %s394 = smul.u32 4, %s23
      %p395 = scmp.lt.s32.totalorder %s394, 3
      %s396 = scalar_select %p395, %s394, 3
      %s397 = smul.addr %s396, 8
      %s398 = scalar_lea.vmem %s3, %s397
      %s399 = smul.u32 4, %s23
      %s400 = smul.u32 4, %s23
      %p401 = scmp.lt.s32.totalorder %s22, 1
      %s402 = scalar_select %p401, %s22, 1
      %p403 = scmp.lt.s32.totalorder %s400, 3
      %s404 = scalar_select %p403, %s400, 3
      %s405 = smul.addr %s402, 4
      %s406 = sadd.s32 %s404, %s405
      %s407 = smul.addr %s406, 4
      %s408 = scalar_lea.vmem %s4, %s407
      %s409 = smul.u32 4, %s23
      %p410 = scmp.lt.s32.totalorder %s22, 1
      %s411 = scalar_select %p410, %s22, 1
      %p412 = scmp.lt.s32.totalorder %s23, 0
      %s413 = scalar_select %p412, %s23, 0
      %s414 = sadd.s32 %s413, %s411
      %s415 = scalar_lea.vmem %s5, %s414
      %p416 = scmp.lt.s32.totalorder %s22, 1
      %s417 = scalar_select %p416, %s22, 1
      %p418 = scmp.lt.s32.totalorder %s23, 0
      %s419 = scalar_select %p418, %s23, 0
      %s420 = sadd.s32 %s419, %s417
      %s421 = scalar_lea.vmem %s6, %s420
      %v423 = vld [vmem:[%s374] sm:$0xf]
      %v424 = vld [vmem:[%s374 + $0xc] sm:$0xf]
      %v425 = vld [vmem:[%s374 + $0x18] sm:$0xf]
      %v426 = vld [vmem:[%s374 + $0x24] sm:$0xf]
      %v427 = vld [vmem:[%s2] sm:$0xf]
      %v428 = vld [vmem:[%s2 + $0x4] sm:$0xf]
      %v429 = vld [vmem:[%s2 + $0x8] sm:$0xf]
      %v430 = vld [vmem:[%s2 + $0xc] sm:$0xf]
      %v431 = vld [vmem:[%s2 + $0x10] sm:$0xf]
      %v432 = vld [vmem:[%s2 + $0x14] sm:$0xf]
      %v433 = vld [vmem:[%s2 + $0x18] sm:$0xf]
      %v434 = vld [vmem:[%s2 + $0x1c] sm:$0xf]
      %v435 = vld [vmem:[%s2 + $0x20] sm:$0xf]
      %v436 = vld [vmem:[%s2 + $0x24] sm:$0xf]
      %v437 = vld [vmem:[%s2 + $0x28] sm:$0xf]
      %v438 = vld [vmem:[%s2 + $0x2c] sm:$0xf]
      %v439 = vld [vmem:[%s2 + $0x30] sm:$0xf]
      %v440 = vld [vmem:[%s2 + $0x34] sm:$0xf]
      %v441 = vld [vmem:[%s2 + $0x38] sm:$0xf]
      %v442 = vld [vmem:[%s2 + $0x3c] sm:$0xf]
      %v443 = vld [vmem:[%s374 + $0x4] sm:$0x1]
      %v444 = vld [vmem:[%s374 + $0x10] sm:$0x1]
      %v445 = vld [vmem:[%s374 + $0x1c] sm:$0x1]
      %v446 = vld [vmem:[%s374 + $0x28] sm:$0x1]
      %vm447 = vsmask.f32 3328
      %vm448 = vsmask.f32 7440
      %vm449 = vmor %vm447, %vm448
      %v451 = vshrl.u32 %v423, 16
      %v453 = vrot.slane %v451, 4
      %v454 = vshll.u32 %v423, 16
      %v456 = vrot.slane %v454, 5
      %v457 = vor.u32 %v453, %v456
      %v458 = vrot.slane %v457, 4
      %v460 = vshll.u32 %v443, 16
      %v462 = vrot.slane %v460, 5
      %v463 = vsel %vm449, %v458, %v462
      %v465 = vshrl.u32 %v424, 16
      %v467 = vrot.slane %v465, 4
      %v468 = vshll.u32 %v424, 16
      %v470 = vrot.slane %v468, 5
      %v471 = vor.u32 %v467, %v470
      %v472 = vrot.slane %v471, 4
      %v474 = vshll.u32 %v444, 16
      %v476 = vrot.slane %v474, 5
      %v477 = vsel %vm449, %v472, %v476
      %v479 = vshrl.u32 %v425, 16
      %v481 = vrot.slane %v479, 4
      %v482 = vshll.u32 %v425, 16
      %v484 = vrot.slane %v482, 5
      %v485 = vor.u32 %v481, %v484
      %v486 = vrot.slane %v485, 4
      %v488 = vshll.u32 %v445, 16
      %v490 = vrot.slane %v488, 5
      %v491 = vsel %vm449, %v486, %v490
      %v493 = vshrl.u32 %v426, 16
      %v495 = vrot.slane %v493, 4
      %v496 = vshll.u32 %v426, 16
      %v498 = vrot.slane %v496, 5
      %v499 = vor.u32 %v495, %v498
      %v500 = vrot.slane %v499, 4
      %v502 = vshll.u32 %v446, 16
      %v504 = vrot.slane %v502, 5
      %v505 = vsel %vm449, %v500, %v504
      %s506 = scalar_lea.vmem %s2, 64
      %v507 = vld [vmem:[%s506] sm:$0xf]
      %v508 = vld [vmem:[%s506 + $0x4] sm:$0xf]
      %v509 = vld [vmem:[%s506 + $0x8] sm:$0xf]
      %v510 = vld [vmem:[%s506 + $0xc] sm:$0xf]
      %v511 = vld [vmem:[%s506 + $0x10] sm:$0xf]
      %v512 = vld [vmem:[%s506 + $0x14] sm:$0xf]
      %v513 = vld [vmem:[%s506 + $0x18] sm:$0xf]
      %v514 = vld [vmem:[%s506 + $0x1c] sm:$0xf]
      %v515 = vld [vmem:[%s506 + $0x20] sm:$0xf]
      %v516 = vld [vmem:[%s506 + $0x24] sm:$0xf]
      %v517 = vld [vmem:[%s506 + $0x28] sm:$0xf]
      %v518 = vld [vmem:[%s506 + $0x2c] sm:$0xf]
      %v519 = vld [vmem:[%s506 + $0x30] sm:$0xf]
      %v520 = vld [vmem:[%s506 + $0x34] sm:$0xf]
      %v521 = vld [vmem:[%s506 + $0x38] sm:$0xf]
      %v522 = vld [vmem:[%s506 + $0x3c] sm:$0xf]
      %v523 = vunpack.c.l.b16 %v463
      %v524 = vunpack.c.l.b16 %v477
      %v525 = vunpack.c.l.b16 %v491
      %v526 = vunpack.c.l.b16 %v505
      %v527 = vpack.c.b16 %v524, %v523
      %v528 = vpack.c.b16 %v526, %v525
      %v547 = vunpack.c.l.b16 %v507
      %v548 = vunpack.c.l.b16 %v508
      %v549 = vunpack.c.l.b16 %v509
      %v550 = vunpack.c.l.b16 %v510
      %v551 = vunpack.c.l.b16 %v511
      %v552 = vunpack.c.l.b16 %v512
      %v553 = vunpack.c.l.b16 %v513
      %v554 = vunpack.c.l.b16 %v514
      %v555 = vunpack.c.l.b16 %v515
      %v556 = vunpack.c.l.b16 %v516
      %v557 = vunpack.c.l.b16 %v517
      %v558 = vunpack.c.l.b16 %v518
      %v559 = vunpack.c.l.b16 %v519
      %v560 = vunpack.c.l.b16 %v520
      %v561 = vunpack.c.l.b16 %v521
      %v562 = vunpack.c.l.b16 %v522
      %v563 = vpack.c.b16 %v548, %v547
      %v564 = vpack.c.b16 %v550, %v549
      %v565 = vpack.c.b16 %v552, %v551
      %v566 = vpack.c.b16 %v554, %v553
      %v567 = vpack.c.b16 %v556, %v555
      %v568 = vpack.c.b16 %v558, %v557
      %v569 = vpack.c.b16 %v560, %v559
      %v570 = vpack.c.b16 %v562, %v561
      %579 = vmatprep.subr.bf16.mxu0 0
      %580 = vmatpush1.bf16.msra.mxu0 %v570
      %581 = vmatprep.subr.bf16.mxu0 0
      %582 = vmatpush1.bf16.msra.mxu0 %v569
      %583 = vmatprep.subr.bf16.mxu0 0
      %584 = vmatpush1.bf16.msra.mxu0 %v568
      %585 = vmatprep.subr.bf16.mxu0 0
      %586 = vmatpush1.bf16.msra.mxu0 %v567
      %587 = vmatprep.subr.bf16.mxu0 0
      %588 = vmatpush1.bf16.msra.mxu0 %v566
      %589 = vmatprep.subr.bf16.mxu0 0
      %590 = vmatpush1.bf16.msra.mxu0 %v565
      %591 = vmatprep.subr.bf16.mxu0 0
      %592 = vmatpush1.bf16.msra.mxu0 %v564
      %593 = vmatprep.subr.bf16.mxu0 0
      %594 = vmatpush1.bf16.msra.mxu0 %v563
      %595 = vmatprep.subr.bf16.mxu0 0
      %596 = vmatpush2.bf16.msra.mxu0 0
      %597 = vmatprep.subr.bf16.mxu0 0
      %598 = vmatpush2.bf16.msra.mxu0 0
      %599 = vmatprep.subr.bf16.mxu0 0
      %600 = vmatpush2.bf16.msra.mxu0 0
      %601 = vmatprep.subr.bf16.mxu0 0
      %602 = vmatpush2.bf16.msra.mxu0 0
      %603 = vmatprep.subr.bf16.mxu0 0
      %604 = vmatpush2.bf16.msra.mxu0 0
      %605 = vmatprep.subr.bf16.mxu0 0
      %606 = vmatpush2.bf16.msra.mxu0 0
      %607 = vmatprep.subr.bf16.mxu0 0
      %608 = vmatpush2.bf16.msra.mxu0 0
      %609 = vmatprep.subr.bf16.mxu0 0
      %610 = vmatpush2.bf16.msra.mxu0 0
      %611 = vmatprep.mubr.bf16.mxu0 0
      %612 = vmatmul.mubr.bf16.gmra.mxu0 %v527
      %v613 = vpop.f32.mrf.mxu0
      %v614 = vadd.f32 0.0, %v613
      %v615 = vpop.f32.mrf.mxu0
      %v616 = vpop.f32.mrf.mxu0
      %v617 = vadd.f32 0.0, %v616
      %v618 = vpop.f32.mrf.mxu0
      %619 = vmatprep.mubr.bf16.mxu0 0
      %620 = vmatmul.mubr.bf16.gmra.mxu0 %v528
      %v621 = vpop.f32.mrf.mxu0
      %v622 = vadd.f32 0.0, %v621
      %v623 = vpop.f32.mrf.mxu0
      %v624 = vpop.f32.mrf.mxu0
      %v625 = vadd.f32 0.0, %v624
      %v626 = vpop.f32.mrf.mxu0
      %627 = vdwg.mxu0
      %v632 = vunpack.c.l.b16 %v423
      %v633 = vunpack.c.l.b16 %v424
      %v634 = vunpack.c.l.b16 %v425
      %v635 = vunpack.c.l.b16 %v426
      %v636 = vpack.c.b16 %v633, %v632
      %v637 = vpack.c.b16 %v635, %v634
      %v656 = vunpack.c.l.b16 %v427
      %v657 = vunpack.c.l.b16 %v428
      %v658 = vunpack.c.l.b16 %v429
      %v659 = vunpack.c.l.b16 %v430
      %v660 = vunpack.c.l.b16 %v431
      %v661 = vunpack.c.l.b16 %v432
      %v662 = vunpack.c.l.b16 %v433
      %v663 = vunpack.c.l.b16 %v434
      %v664 = vunpack.c.l.b16 %v435
      %v665 = vunpack.c.l.b16 %v436
      %v666 = vunpack.c.l.b16 %v437
      %v667 = vunpack.c.l.b16 %v438
      %v668 = vunpack.c.l.b16 %v439
      %v669 = vunpack.c.l.b16 %v440
      %v670 = vunpack.c.l.b16 %v441
      %v671 = vunpack.c.l.b16 %v442
      %v672 = vpack.c.b16 %v657, %v656
      %v673 = vpack.c.b16 %v659, %v658
      %v674 = vpack.c.b16 %v661, %v660
      %v675 = vpack.c.b16 %v663, %v662
      %v676 = vpack.c.b16 %v665, %v664
      %v677 = vpack.c.b16 %v667, %v666
      %v678 = vpack.c.b16 %v669, %v668
      %v679 = vpack.c.b16 %v671, %v670
      %688 = vmatprep.subr.bf16.mxu0 0
      %689 = vmatpush1.bf16.msra.mxu0 %v679
      %690 = vmatprep.subr.bf16.mxu0 0
      %691 = vmatpush1.bf16.msra.mxu0 %v678
      %692 = vmatprep.subr.bf16.mxu0 0
      %693 = vmatpush1.bf16.msra.mxu0 %v677
      %694 = vmatprep.subr.bf16.mxu0 0
      %695 = vmatpush1.bf16.msra.mxu0 %v676
      %696 = vmatprep.subr.bf16.mxu0 0
      %697 = vmatpush1.bf16.msra.mxu0 %v675
      %698 = vmatprep.subr.bf16.mxu0 0
      %699 = vmatpush1.bf16.msra.mxu0 %v674
      %700 = vmatprep.subr.bf16.mxu0 0
      %701 = vmatpush1.bf16.msra.mxu0 %v673
      %702 = vmatprep.subr.bf16.mxu0 0
      %703 = vmatpush1.bf16.msra.mxu0 %v672
      %704 = vmatprep.subr.bf16.mxu0 0
      %705 = vmatpush2.bf16.msra.mxu0 0
      %706 = vmatprep.subr.bf16.mxu0 0
      %707 = vmatpush2.bf16.msra.mxu0 0
      %708 = vmatprep.subr.bf16.mxu0 0
      %709 = vmatpush2.bf16.msra.mxu0 0
      %710 = vmatprep.subr.bf16.mxu0 0
      %711 = vmatpush2.bf16.msra.mxu0 0
      %712 = vmatprep.subr.bf16.mxu0 0
      %713 = vmatpush2.bf16.msra.mxu0 0
      %714 = vmatprep.subr.bf16.mxu0 0
      %715 = vmatpush2.bf16.msra.mxu0 0
      %716 = vmatprep.subr.bf16.mxu0 0
      %717 = vmatpush2.bf16.msra.mxu0 0
      %718 = vmatprep.subr.bf16.mxu0 0
      %719 = vmatpush2.bf16.msra.mxu0 0
      %720 = vmatprep.mubr.bf16.mxu0 0
      %721 = vmatmul.mubr.bf16.gmra.mxu0 %v636
      %v722 = vpop.f32.mrf.mxu0
      %v723 = vadd.f32 %v614, %v722
      %v724 = vpop.f32.mrf.mxu0
      %v725 = vpop.f32.mrf.mxu0
      %v726 = vadd.f32 %v617, %v725
      %v727 = vpop.f32.mrf.mxu0
      %728 = vmatprep.mubr.bf16.mxu0 0
      %729 = vmatmul.mubr.bf16.gmra.mxu0 %v637
      %v730 = vpop.f32.mrf.mxu0
      %v731 = vadd.f32 %v622, %v730
      %v732 = vpop.f32.mrf.mxu0
      %v733 = vpop.f32.mrf.mxu0
      %v734 = vadd.f32 %v625, %v733
      %v735 = vpop.f32.mrf.mxu0
      %736 = vdwg.mxu0
      %v737 = vld [vmem:[%s374 + $0x4] sm:$0xf]
      %v738 = vld [vmem:[%s374 + $0x8] sm:$0x1]
      %v739 = vld [vmem:[%s374 + $0x10] sm:$0xf]
      %v740 = vld [vmem:[%s374 + $0x14] sm:$0x1]
      %v741 = vld [vmem:[%s374 + $0x1c] sm:$0xf]
      %v742 = vld [vmem:[%s374 + $0x20] sm:$0x1]
      %v743 = vld [vmem:[%s374 + $0x28] sm:$0xf]
      %v744 = vld [vmem:[%s374 + $0x2c] sm:$0x1]
      %v746 = vshrl.u32 %v737, 16
      %v748 = vrot.slane %v746, 4
      %v749 = vshll.u32 %v737, 16
      %v751 = vrot.slane %v749, 5
      %v752 = vor.u32 %v748, %v751
      %v753 = vrot.slane %v752, 4
      %v755 = vshll.u32 %v738, 16
      %v757 = vrot.slane %v755, 5
      %v758 = vsel %vm449, %v753, %v757
      %v760 = vshrl.u32 %v739, 16
      %v762 = vrot.slane %v760, 4
      %v763 = vshll.u32 %v739, 16
      %v765 = vrot.slane %v763, 5
      %v766 = vor.u32 %v762, %v765
      %v767 = vrot.slane %v766, 4
      %v769 = vshll.u32 %v740, 16
      %v771 = vrot.slane %v769, 5
      %v772 = vsel %vm449, %v767, %v771
      %v774 = vshrl.u32 %v741, 16
      %v776 = vrot.slane %v774, 4
      %v777 = vshll.u32 %v741, 16
      %v779 = vrot.slane %v777, 5
      %v780 = vor.u32 %v776, %v779
      %v781 = vrot.slane %v780, 4
      %v783 = vshll.u32 %v742, 16
      %v785 = vrot.slane %v783, 5
      %v786 = vsel %vm449, %v781, %v785
      %v788 = vshrl.u32 %v743, 16
      %v790 = vrot.slane %v788, 4
      %v791 = vshll.u32 %v743, 16
      %v793 = vrot.slane %v791, 5
      %v794 = vor.u32 %v790, %v793
      %v795 = vrot.slane %v794, 4
      %v797 = vshll.u32 %v744, 16
      %v799 = vrot.slane %v797, 5
      %v800 = vsel %vm449, %v795, %v799
      %s801 = scalar_lea.vmem %s2, 128
      %v802 = vld [vmem:[%s801] sm:$0xf]
      %v803 = vld [vmem:[%s801 + $0x4] sm:$0xf]
      %v804 = vld [vmem:[%s801 + $0x8] sm:$0xf]
      %v805 = vld [vmem:[%s801 + $0xc] sm:$0xf]
      %v806 = vld [vmem:[%s801 + $0x10] sm:$0xf]
      %v807 = vld [vmem:[%s801 + $0x14] sm:$0xf]
      %v808 = vld [vmem:[%s801 + $0x18] sm:$0xf]
      %v809 = vld [vmem:[%s801 + $0x1c] sm:$0xf]
      %v810 = vld [vmem:[%s801 + $0x20] sm:$0xf]
      %v811 = vld [vmem:[%s801 + $0x24] sm:$0xf]
      %v812 = vld [vmem:[%s801 + $0x28] sm:$0xf]
      %v813 = vld [vmem:[%s801 + $0x2c] sm:$0xf]
      %v814 = vld [vmem:[%s801 + $0x30] sm:$0xf]
      %v815 = vld [vmem:[%s801 + $0x34] sm:$0xf]
      %v816 = vld [vmem:[%s801 + $0x38] sm:$0xf]
      %v817 = vld [vmem:[%s801 + $0x3c] sm:$0xf]
      %v818 = vunpack.c.l.b16 %v758
      %v819 = vunpack.c.l.b16 %v772
      %v820 = vunpack.c.l.b16 %v786
      %v821 = vunpack.c.l.b16 %v800
      %v822 = vpack.c.b16 %v819, %v818
      %v823 = vpack.c.b16 %v821, %v820
      %v842 = vunpack.c.l.b16 %v802
      %v843 = vunpack.c.l.b16 %v803
      %v844 = vunpack.c.l.b16 %v804
      %v845 = vunpack.c.l.b16 %v805
      %v846 = vunpack.c.l.b16 %v806
      %v847 = vunpack.c.l.b16 %v807
      %v848 = vunpack.c.l.b16 %v808
      %v849 = vunpack.c.l.b16 %v809
      %v850 = vunpack.c.l.b16 %v810
      %v851 = vunpack.c.l.b16 %v811
      %v852 = vunpack.c.l.b16 %v812
      %v853 = vunpack.c.l.b16 %v813
      %v854 = vunpack.c.l.b16 %v814
      %v855 = vunpack.c.l.b16 %v815
      %v856 = vunpack.c.l.b16 %v816
      %v857 = vunpack.c.l.b16 %v817
      %v858 = vpack.c.b16 %v843, %v842
      %v859 = vpack.c.b16 %v845, %v844
      %v860 = vpack.c.b16 %v847, %v846
      %v861 = vpack.c.b16 %v849, %v848
      %v862 = vpack.c.b16 %v851, %v850
      %v863 = vpack.c.b16 %v853, %v852
      %v864 = vpack.c.b16 %v855, %v854
      %v865 = vpack.c.b16 %v857, %v856
      %874 = vmatprep.subr.bf16.mxu0 0
      %875 = vmatpush1.bf16.msra.mxu0 %v865
      %876 = vmatprep.subr.bf16.mxu0 0
      %877 = vmatpush1.bf16.msra.mxu0 %v864
      %878 = vmatprep.subr.bf16.mxu0 0
      %879 = vmatpush1.bf16.msra.mxu0 %v863
      %880 = vmatprep.subr.bf16.mxu0 0
      %881 = vmatpush1.bf16.msra.mxu0 %v862
      %882 = vmatprep.subr.bf16.mxu0 0
      %883 = vmatpush1.bf16.msra.mxu0 %v861
      %884 = vmatprep.subr.bf16.mxu0 0
      %885 = vmatpush1.bf16.msra.mxu0 %v860
      %886 = vmatprep.subr.bf16.mxu0 0
      %887 = vmatpush1.bf16.msra.mxu0 %v859
      %888 = vmatprep.subr.bf16.mxu0 0
      %889 = vmatpush1.bf16.msra.mxu0 %v858
      %890 = vmatprep.subr.bf16.mxu0 0
      %891 = vmatpush2.bf16.msra.mxu0 0
      %892 = vmatprep.subr.bf16.mxu0 0
      %893 = vmatpush2.bf16.msra.mxu0 0
      %894 = vmatprep.subr.bf16.mxu0 0
      %895 = vmatpush2.bf16.msra.mxu0 0
      %896 = vmatprep.subr.bf16.mxu0 0
      %897 = vmatpush2.bf16.msra.mxu0 0
      %898 = vmatprep.subr.bf16.mxu0 0
      %899 = vmatpush2.bf16.msra.mxu0 0
      %900 = vmatprep.subr.bf16.mxu0 0
      %901 = vmatpush2.bf16.msra.mxu0 0
      %902 = vmatprep.subr.bf16.mxu0 0
      %903 = vmatpush2.bf16.msra.mxu0 0
      %904 = vmatprep.subr.bf16.mxu0 0
      %905 = vmatpush2.bf16.msra.mxu0 0
      %906 = vmatprep.mubr.bf16.mxu0 0
      %907 = vmatmul.mubr.bf16.gmra.mxu0 %v822
      %v908 = vpop.f32.mrf.mxu0
      %v909 = vadd.f32 0.0, %v908
      %v910 = vpop.f32.mrf.mxu0
      %v911 = vpop.f32.mrf.mxu0
      %v912 = vadd.f32 0.0, %v911
      %v913 = vpop.f32.mrf.mxu0
      %914 = vmatprep.mubr.bf16.mxu0 0
      %915 = vmatmul.mubr.bf16.gmra.mxu0 %v823
      %v916 = vpop.f32.mrf.mxu0
      %v917 = vadd.f32 0.0, %v916
      %v918 = vpop.f32.mrf.mxu0
      %v919 = vpop.f32.mrf.mxu0
      %v920 = vadd.f32 0.0, %v919
      %v921 = vpop.f32.mrf.mxu0
      %922 = vdwg.mxu0
      %v923 = vadd.f32 %v723, %v909
      %v924 = vadd.f32 %v726, %v912
      %v925 = vadd.f32 %v731, %v917
      %v926 = vadd.f32 %v734, %v920
      %v927 = vld [vmem:[%s374 + $0x4] sm:$0xe]
      %v928 = vld [vmem:[%s374 + $0x10] sm:$0xe]
      %v929 = vld [vmem:[%s374 + $0x1c] sm:$0xe]
      %v930 = vld [vmem:[%s374 + $0x28] sm:$0xe]
      %vm939 = vcmask 1042432
      %vm940 = vcmask 1046532
      %vm941 = vmor %vm939, %vm940
      %v942 = vrot.slane %v927, 5
      %v943 = vrot.slane %v942, 4
      %v944 = vrot.slane %v738, 5
      %v945 = vsel %vm941, %v943, %v944
      %v946 = vrot.slane %v928, 5
      %v947 = vrot.slane %v946, 4
      %v948 = vrot.slane %v740, 5
      %v949 = vsel %vm941, %v947, %v948
      %v950 = vrot.slane %v929, 5
      %v951 = vrot.slane %v950, 4
      %v952 = vrot.slane %v742, 5
      %v953 = vsel %vm941, %v951, %v952
      %v954 = vrot.slane %v930, 5
      %v955 = vrot.slane %v954, 4
      %v956 = vrot.slane %v744, 5
      %v957 = vsel %vm941, %v955, %v956
      %s958 = scalar_lea.vmem %s2, 192
      %v959 = vld [vmem:[%s958] sm:$0xf]
      %v960 = vld [vmem:[%s958 + $0x4] sm:$0xf]
      %v961 = vld [vmem:[%s958 + $0x8] sm:$0xf]
      %v962 = vld [vmem:[%s958 + $0xc] sm:$0xf]
      %v963 = vld [vmem:[%s958 + $0x10] sm:$0xf]
      %v964 = vld [vmem:[%s958 + $0x14] sm:$0xf]
      %v965 = vld [vmem:[%s958 + $0x18] sm:$0xf]
      %v966 = vld [vmem:[%s958 + $0x1c] sm:$0xf]
      %v967 = vld [vmem:[%s958 + $0x20] sm:$0xf]
      %v968 = vld [vmem:[%s958 + $0x24] sm:$0xf]
      %v969 = vld [vmem:[%s958 + $0x28] sm:$0xf]
      %v970 = vld [vmem:[%s958 + $0x2c] sm:$0xf]
      %v971 = vld [vmem:[%s958 + $0x30] sm:$0xf]
      %v972 = vld [vmem:[%s958 + $0x34] sm:$0xf]
      %v973 = vld [vmem:[%s958 + $0x38] sm:$0xf]
      %v974 = vld [vmem:[%s958 + $0x3c] sm:$0xf]
      %v975 = vunpack.c.l.b16 %v945
      %v976 = vunpack.c.l.b16 %v949
      %v977 = vunpack.c.l.b16 %v953
      %v978 = vunpack.c.l.b16 %v957
      %v979 = vpack.c.b16 %v976, %v975
      %v980 = vpack.c.b16 %v978, %v977
      %v999 = vunpack.c.l.b16 %v959
      %v1000 = vunpack.c.l.b16 %v960
      %v1001 = vunpack.c.l.b16 %v961
      %v1002 = vunpack.c.l.b16 %v962
      %v1003 = vunpack.c.l.b16 %v963
      %v1004 = vunpack.c.l.b16 %v964
      %v1005 = vunpack.c.l.b16 %v965
      %v1006 = vunpack.c.l.b16 %v966
      %v1007 = vunpack.c.l.b16 %v967
      %v1008 = vunpack.c.l.b16 %v968
      %v1009 = vunpack.c.l.b16 %v969
      %v1010 = vunpack.c.l.b16 %v970
      %v1011 = vunpack.c.l.b16 %v971
      %v1012 = vunpack.c.l.b16 %v972
      %v1013 = vunpack.c.l.b16 %v973
      %v1014 = vunpack.c.l.b16 %v974
      %v1015 = vpack.c.b16 %v1000, %v999
      %v1016 = vpack.c.b16 %v1002, %v1001
      %v1017 = vpack.c.b16 %v1004, %v1003
      %v1018 = vpack.c.b16 %v1006, %v1005
      %v1019 = vpack.c.b16 %v1008, %v1007
      %v1020 = vpack.c.b16 %v1010, %v1009
      %v1021 = vpack.c.b16 %v1012, %v1011
      %v1022 = vpack.c.b16 %v1014, %v1013
      %1031 = vmatprep.subr.bf16.mxu0 0
      %1032 = vmatpush1.bf16.msra.mxu0 %v1022
      %1033 = vmatprep.subr.bf16.mxu0 0
      %1034 = vmatpush1.bf16.msra.mxu0 %v1021
      %1035 = vmatprep.subr.bf16.mxu0 0
      %1036 = vmatpush1.bf16.msra.mxu0 %v1020
      %1037 = vmatprep.subr.bf16.mxu0 0
      %1038 = vmatpush1.bf16.msra.mxu0 %v1019
      %1039 = vmatprep.subr.bf16.mxu0 0
      %1040 = vmatpush1.bf16.msra.mxu0 %v1018
      %1041 = vmatprep.subr.bf16.mxu0 0
      %1042 = vmatpush1.bf16.msra.mxu0 %v1017
      %1043 = vmatprep.subr.bf16.mxu0 0
      %1044 = vmatpush1.bf16.msra.mxu0 %v1016
      %1045 = vmatprep.subr.bf16.mxu0 0
      %1046 = vmatpush1.bf16.msra.mxu0 %v1015
      %1047 = vmatprep.subr.bf16.mxu0 0
      %1048 = vmatpush2.bf16.msra.mxu0 0
      %1049 = vmatprep.subr.bf16.mxu0 0
      %1050 = vmatpush2.bf16.msra.mxu0 0
      %1051 = vmatprep.subr.bf16.mxu0 0
      %1052 = vmatpush2.bf16.msra.mxu0 0
      %1053 = vmatprep.subr.bf16.mxu0 0
      %1054 = vmatpush2.bf16.msra.mxu0 0
      %1055 = vmatprep.subr.bf16.mxu0 0
      %1056 = vmatpush2.bf16.msra.mxu0 0
      %1057 = vmatprep.subr.bf16.mxu0 0
      %1058 = vmatpush2.bf16.msra.mxu0 0
      %1059 = vmatprep.subr.bf16.mxu0 0
      %1060 = vmatpush2.bf16.msra.mxu0 0
      %1061 = vmatprep.subr.bf16.mxu0 0
      %1062 = vmatpush2.bf16.msra.mxu0 0
      %1063 = vmatprep.mubr.bf16.mxu0 0
      %1064 = vmatmul.mubr.bf16.gmra.mxu0 %v979
      %v1065 = vpop.f32.mrf.mxu0
      %v1066 = vadd.f32 0.0, %v1065
      %v1067 = vpop.f32.mrf.mxu0
      %v1068 = vpop.f32.mrf.mxu0
      %v1069 = vadd.f32 0.0, %v1068
      %v1070 = vpop.f32.mrf.mxu0
      %1071 = vmatprep.mubr.bf16.mxu0 0
      %1072 = vmatmul.mubr.bf16.gmra.mxu0 %v980
      %v1073 = vpop.f32.mrf.mxu0
      %v1074 = vadd.f32 0.0, %v1073
      %v1075 = vpop.f32.mrf.mxu0
      %v1076 = vpop.f32.mrf.mxu0
      %v1077 = vadd.f32 0.0, %v1076
      %v1078 = vpop.f32.mrf.mxu0
      %1079 = vdwg.mxu0
      %v1080 = vadd.f32 %v923, %v1066
      %v1081 = vadd.f32 %v924, %v1069
      %v1082 = vadd.f32 %v925, %v1074
      %v1083 = vadd.f32 %v926, %v1077
      %v1084 = vld [vmem:[%s391] sm:$0xf]
      %s1085 = scalar_lea.vmem %s374, 12
      %v1086 = vld [vmem:[%s1085] sm:$0xf]
      %v1087 = vld [vmem:[%s1085 + $0xc] sm:$0xf]
      %v1088 = vld [vmem:[%s1085 + $0x18] sm:$0xf]
      %s1089 = scalar_lea.vmem %s2, 256
      %v1090 = vld [vmem:[%s1089] sm:$0xf]
      %v1091 = vld [vmem:[%s1089 + $0x4] sm:$0xf]
      %v1092 = vld [vmem:[%s1089 + $0x8] sm:$0xf]
      %v1093 = vld [vmem:[%s1089 + $0xc] sm:$0xf]
      %v1094 = vld [vmem:[%s1089 + $0x10] sm:$0xf]
      %v1095 = vld [vmem:[%s1089 + $0x14] sm:$0xf]
      %v1096 = vld [vmem:[%s1089 + $0x18] sm:$0xf]
      %v1097 = vld [vmem:[%s1089 + $0x1c] sm:$0xf]
      %v1098 = vld [vmem:[%s1089 + $0x20] sm:$0xf]
      %v1099 = vld [vmem:[%s1089 + $0x24] sm:$0xf]
      %v1100 = vld [vmem:[%s1089 + $0x28] sm:$0xf]
      %v1101 = vld [vmem:[%s1089 + $0x2c] sm:$0xf]
      %v1102 = vld [vmem:[%s1089 + $0x30] sm:$0xf]
      %v1103 = vld [vmem:[%s1089 + $0x34] sm:$0xf]
      %v1104 = vld [vmem:[%s1089 + $0x38] sm:$0xf]
      %v1105 = vld [vmem:[%s1089 + $0x3c] sm:$0xf]
      %v1110 = vunpack.c.l.b16 %v1086
      %v1111 = vunpack.c.l.b16 %v1087
      %v1112 = vunpack.c.l.b16 %v1088
      %v1113 = vunpack.c.l.b16 %v1084
      %v1114 = vpack.c.b16 %v1111, %v1110
      %v1115 = vpack.c.b16 %v1113, %v1112
      %v1134 = vunpack.c.l.b16 %v1090
      %v1135 = vunpack.c.l.b16 %v1091
      %v1136 = vunpack.c.l.b16 %v1092
      %v1137 = vunpack.c.l.b16 %v1093
      %v1138 = vunpack.c.l.b16 %v1094
      %v1139 = vunpack.c.l.b16 %v1095
      %v1140 = vunpack.c.l.b16 %v1096
      %v1141 = vunpack.c.l.b16 %v1097
      %v1142 = vunpack.c.l.b16 %v1098
      %v1143 = vunpack.c.l.b16 %v1099
      %v1144 = vunpack.c.l.b16 %v1100
      %v1145 = vunpack.c.l.b16 %v1101
      %v1146 = vunpack.c.l.b16 %v1102
      %v1147 = vunpack.c.l.b16 %v1103
      %v1148 = vunpack.c.l.b16 %v1104
      %v1149 = vunpack.c.l.b16 %v1105
      %v1150 = vpack.c.b16 %v1135, %v1134
      %v1151 = vpack.c.b16 %v1137, %v1136
      %v1152 = vpack.c.b16 %v1139, %v1138
      %v1153 = vpack.c.b16 %v1141, %v1140
      %v1154 = vpack.c.b16 %v1143, %v1142
      %v1155 = vpack.c.b16 %v1145, %v1144
      %v1156 = vpack.c.b16 %v1147, %v1146
      %v1157 = vpack.c.b16 %v1149, %v1148
      %1166 = vmatprep.subr.bf16.mxu0 0
      %1167 = vmatpush1.bf16.msra.mxu0 %v1157
      %1168 = vmatprep.subr.bf16.mxu0 0
      %1169 = vmatpush1.bf16.msra.mxu0 %v1156
      %1170 = vmatprep.subr.bf16.mxu0 0
      %1171 = vmatpush1.bf16.msra.mxu0 %v1155
      %1172 = vmatprep.subr.bf16.mxu0 0
      %1173 = vmatpush1.bf16.msra.mxu0 %v1154
      %1174 = vmatprep.subr.bf16.mxu0 0
      %1175 = vmatpush1.bf16.msra.mxu0 %v1153
      %1176 = vmatprep.subr.bf16.mxu0 0
      %1177 = vmatpush1.bf16.msra.mxu0 %v1152
      %1178 = vmatprep.subr.bf16.mxu0 0
      %1179 = vmatpush1.bf16.msra.mxu0 %v1151
      %1180 = vmatprep.subr.bf16.mxu0 0
      %1181 = vmatpush1.bf16.msra.mxu0 %v1150
      %1182 = vmatprep.subr.bf16.mxu0 0
      %1183 = vmatpush2.bf16.msra.mxu0 0
      %1184 = vmatprep.subr.bf16.mxu0 0
      %1185 = vmatpush2.bf16.msra.mxu0 0
      %1186 = vmatprep.subr.bf16.mxu0 0
      %1187 = vmatpush2.bf16.msra.mxu0 0
      %1188 = vmatprep.subr.bf16.mxu0 0
      %1189 = vmatpush2.bf16.msra.mxu0 0
      %1190 = vmatprep.subr.bf16.mxu0 0
      %1191 = vmatpush2.bf16.msra.mxu0 0
      %1192 = vmatprep.subr.bf16.mxu0 0
      %1193 = vmatpush2.bf16.msra.mxu0 0
      %1194 = vmatprep.subr.bf16.mxu0 0
      %1195 = vmatpush2.bf16.msra.mxu0 0
      %1196 = vmatprep.subr.bf16.mxu0 0
      %1197 = vmatpush2.bf16.msra.mxu0 0
      %1198 = vmatprep.mubr.bf16.mxu0 0
      %1199 = vmatmul.mubr.bf16.gmra.mxu0 %v1114
      %v1200 = vpop.f32.mrf.mxu0
      %v1201 = vadd.f32 0.0, %v1200
      %v1202 = vpop.f32.mrf.mxu0
      %v1203 = vpop.f32.mrf.mxu0
      %v1204 = vadd.f32 0.0, %v1203
      %v1205 = vpop.f32.mrf.mxu0
      %1206 = vmatprep.mubr.bf16.mxu0 0
      %1207 = vmatmul.mubr.bf16.gmra.mxu0 %v1115
      %v1208 = vpop.f32.mrf.mxu0
      %v1209 = vadd.f32 0.0, %v1208
      %v1210 = vpop.f32.mrf.mxu0
      %v1211 = vpop.f32.mrf.mxu0
      %v1212 = vadd.f32 0.0, %v1211
      %v1213 = vpop.f32.mrf.mxu0
      %1214 = vdwg.mxu0
      %v1215 = vadd.f32 %v1080, %v1201
      %v1216 = vadd.f32 %v1081, %v1204
      %v1217 = vadd.f32 %v1082, %v1209
      %v1218 = vadd.f32 %v1083, %v1212
      %v1219 = vld [vmem:[%s391] sm:$0xf]
      %v1220 = vld [vmem:[%s391 + $0x4] sm:$0x1]
      %v1221 = vld [vmem:[%s1085] sm:$0xf]
      %v1222 = vld [vmem:[%s1085 + $0x4] sm:$0x1]
      %v1223 = vld [vmem:[%s1085 + $0xc] sm:$0xf]
      %v1224 = vld [vmem:[%s1085 + $0x10] sm:$0x1]
      %v1225 = vld [vmem:[%s1085 + $0x18] sm:$0xf]
      %v1226 = vld [vmem:[%s1085 + $0x1c] sm:$0x1]
      %v1228 = vshrl.u32 %v1221, 16
      %v1230 = vrot.slane %v1228, 4
      %v1231 = vshll.u32 %v1221, 16
      %v1233 = vrot.slane %v1231, 5
      %v1234 = vor.u32 %v1230, %v1233
      %v1235 = vrot.slane %v1234, 4
      %v1237 = vshll.u32 %v1222, 16
      %v1239 = vrot.slane %v1237, 5
      %v1240 = vsel %vm449, %v1235, %v1239
      %v1242 = vshrl.u32 %v1223, 16
      %v1244 = vrot.slane %v1242, 4
      %v1245 = vshll.u32 %v1223, 16
      %v1247 = vrot.slane %v1245, 5
      %v1248 = vor.u32 %v1244, %v1247
      %v1249 = vrot.slane %v1248, 4
      %v1251 = vshll.u32 %v1224, 16
      %v1253 = vrot.slane %v1251, 5
      %v1254 = vsel %vm449, %v1249, %v1253
      %v1256 = vshrl.u32 %v1225, 16
      %v1258 = vrot.slane %v1256, 4
      %v1259 = vshll.u32 %v1225, 16
      %v1261 = vrot.slane %v1259, 5
      %v1262 = vor.u32 %v1258, %v1261
      %v1263 = vrot.slane %v1262, 4
      %v1265 = vshll.u32 %v1226, 16
      %v1267 = vrot.slane %v1265, 5
      %v1268 = vsel %vm449, %v1263, %v1267
      %v1270 = vshrl.u32 %v1219, 16
      %v1272 = vrot.slane %v1270, 4
      %v1273 = vshll.u32 %v1219, 16
      %v1275 = vrot.slane %v1273, 5
      %v1276 = vor.u32 %v1272, %v1275
      %v1277 = vrot.slane %v1276, 4
      %v1279 = vshll.u32 %v1220, 16
      %v1281 = vrot.slane %v1279, 5
      %v1282 = vsel %vm449, %v1277, %v1281
      %s1283 = scalar_lea.vmem %s2, 320
      %v1284 = vld [vmem:[%s1283] sm:$0xf]
      %v1285 = vld [vmem:[%s1283 + $0x4] sm:$0xf]
      %v1286 = vld [vmem:[%s1283 + $0x8] sm:$0xf]
      %v1287 = vld [vmem:[%s1283 + $0xc] sm:$0xf]
      %v1288 = vld [vmem:[%s1283 + $0x10] sm:$0xf]
      %v1289 = vld [vmem:[%s1283 + $0x14] sm:$0xf]
      %v1290 = vld [vmem:[%s1283 + $0x18] sm:$0xf]
      %v1291 = vld [vmem:[%s1283 + $0x1c] sm:$0xf]
      %v1292 = vld [vmem:[%s1283 + $0x20] sm:$0xf]
      %v1293 = vld [vmem:[%s1283 + $0x24] sm:$0xf]
      %v1294 = vld [vmem:[%s1283 + $0x28] sm:$0xf]
      %v1295 = vld [vmem:[%s1283 + $0x2c] sm:$0xf]
      %v1296 = vld [vmem:[%s1283 + $0x30] sm:$0xf]
      %v1297 = vld [vmem:[%s1283 + $0x34] sm:$0xf]
      %v1298 = vld [vmem:[%s1283 + $0x38] sm:$0xf]
      %v1299 = vld [vmem:[%s1283 + $0x3c] sm:$0xf]
      %v1300 = vunpack.c.l.b16 %v1240
      %v1301 = vunpack.c.l.b16 %v1254
      %v1302 = vunpack.c.l.b16 %v1268
      %v1303 = vunpack.c.l.b16 %v1282
      %v1304 = vpack.c.b16 %v1301, %v1300
      %v1305 = vpack.c.b16 %v1303, %v1302
      %v1324 = vunpack.c.l.b16 %v1284
      %v1325 = vunpack.c.l.b16 %v1285
      %v1326 = vunpack.c.l.b16 %v1286
      %v1327 = vunpack.c.l.b16 %v1287
      %v1328 = vunpack.c.l.b16 %v1288
      %v1329 = vunpack.c.l.b16 %v1289
      %v1330 = vunpack.c.l.b16 %v1290
      %v1331 = vunpack.c.l.b16 %v1291
      %v1332 = vunpack.c.l.b16 %v1292
      %v1333 = vunpack.c.l.b16 %v1293
      %v1334 = vunpack.c.l.b16 %v1294
      %v1335 = vunpack.c.l.b16 %v1295
      %v1336 = vunpack.c.l.b16 %v1296
      %v1337 = vunpack.c.l.b16 %v1297
      %v1338 = vunpack.c.l.b16 %v1298
      %v1339 = vunpack.c.l.b16 %v1299
      %v1340 = vpack.c.b16 %v1325, %v1324
      %v1341 = vpack.c.b16 %v1327, %v1326
      %v1342 = vpack.c.b16 %v1329, %v1328
      %v1343 = vpack.c.b16 %v1331, %v1330
      %v1344 = vpack.c.b16 %v1333, %v1332
      %v1345 = vpack.c.b16 %v1335, %v1334
      %v1346 = vpack.c.b16 %v1337, %v1336
      %v1347 = vpack.c.b16 %v1339, %v1338
      %1356 = vmatprep.subr.bf16.mxu0 0
      %1357 = vmatpush1.bf16.msra.mxu0 %v1347
      %1358 = vmatprep.subr.bf16.mxu0 0
      %1359 = vmatpush1.bf16.msra.mxu0 %v1346
      %1360 = vmatprep.subr.bf16.mxu0 0
      %1361 = vmatpush1.bf16.msra.mxu0 %v1345
      %1362 = vmatprep.subr.bf16.mxu0 0
      %1363 = vmatpush1.bf16.msra.mxu0 %v1344
      %1364 = vmatprep.subr.bf16.mxu0 0
      %1365 = vmatpush1.bf16.msra.mxu0 %v1343
      %1366 = vmatprep.subr.bf16.mxu0 0
      %1367 = vmatpush1.bf16.msra.mxu0 %v1342
      %1368 = vmatprep.subr.bf16.mxu0 0
      %1369 = vmatpush1.bf16.msra.mxu0 %v1341
      %1370 = vmatprep.subr.bf16.mxu0 0
      %1371 = vmatpush1.bf16.msra.mxu0 %v1340
      %1372 = vmatprep.subr.bf16.mxu0 0
      %1373 = vmatpush2.bf16.msra.mxu0 0
      %1374 = vmatprep.subr.bf16.mxu0 0
      %1375 = vmatpush2.bf16.msra.mxu0 0
      %1376 = vmatprep.subr.bf16.mxu0 0
      %1377 = vmatpush2.bf16.msra.mxu0 0
      %1378 = vmatprep.subr.bf16.mxu0 0
      %1379 = vmatpush2.bf16.msra.mxu0 0
      %1380 = vmatprep.subr.bf16.mxu0 0
      %1381 = vmatpush2.bf16.msra.mxu0 0
      %1382 = vmatprep.subr.bf16.mxu0 0
      %1383 = vmatpush2.bf16.msra.mxu0 0
      %1384 = vmatprep.subr.bf16.mxu0 0
      %1385 = vmatpush2.bf16.msra.mxu0 0
      %1386 = vmatprep.subr.bf16.mxu0 0
      %1387 = vmatpush2.bf16.msra.mxu0 0
      %1388 = vmatprep.mubr.bf16.mxu0 0
      %1389 = vmatmul.mubr.bf16.gmra.mxu0 %v1304
      %v1390 = vpop.f32.mrf.mxu0
      %v1391 = vadd.f32 0.0, %v1390
      %v1392 = vpop.f32.mrf.mxu0
      %v1393 = vpop.f32.mrf.mxu0
      %v1394 = vadd.f32 0.0, %v1393
      %v1395 = vpop.f32.mrf.mxu0
      %1396 = vmatprep.mubr.bf16.mxu0 0
      %1397 = vmatmul.mubr.bf16.gmra.mxu0 %v1305
      %v1398 = vpop.f32.mrf.mxu0
      %v1399 = vadd.f32 0.0, %v1398
      %v1400 = vpop.f32.mrf.mxu0
      %v1401 = vpop.f32.mrf.mxu0
      %v1402 = vadd.f32 0.0, %v1401
      %v1403 = vpop.f32.mrf.mxu0
      %1404 = vdwg.mxu0
      %v1405 = vadd.f32 %v1215, %v1391
      %v1406 = vadd.f32 %v1216, %v1394
      %v1407 = vadd.f32 %v1217, %v1399
      %v1408 = vadd.f32 %v1218, %v1402
      %v1409 = vpack.c.bf16 %v1406, %v1405
      %v1410 = vpack.c.bf16 %v1408, %v1407
      %v1413 = vunpack.c.l.b16 %v1409
      %v1414 = vunpack.c.h.b16 %v1409
      %v1415 = vunpack.c.l.b16 %v1410
      %v1416 = vunpack.c.h.b16 %v1410
      %v1417 = vpack.c.b16 %v1413, %v1413
      %v1418 = vpack.c.b16 %v1414, %v1414
      %v1419 = vpack.c.b16 %v1415, %v1415
      %v1420 = vpack.c.b16 %v1416, %v1416
      %1425 = vst [vmem:[%s408] sm:$0xf] %v1417
      %1426 = vst [vmem:[%s408 + $0x4] sm:$0xf] %v1418
      %1427 = vst [vmem:[%s408 + $0x8] sm:$0xf] %v1419
      %1428 = vst [vmem:[%s408 + $0xc] sm:$0xf] %v1420
      %v1429 = vld [vmem:[%s398] sm:$0xff]
      %v1430 = vld [vmem:[%s398 + $0x8] sm:$0xff]
      %v1431 = vld [vmem:[%s398 + $0x10] sm:$0xff]
      %v1432 = vld [vmem:[%s398 + $0x18] sm:$0xff]
      %1434 = vset.pattern.permute.xlu0 0
      %1435 = vperm.xlu0 %1434, %v1429
      %v1436 = vpop.permute.xlu0 %1435
      %1439 = vset.pattern.permute.xlu0 0
      %1440 = vperm.xlu0 %1439, %v1430
      %v1441 = vpop.permute.xlu0 %1440
      %1444 = vset.pattern.permute.xlu0 0
      %1445 = vperm.xlu0 %1444, %v1431
      %v1446 = vpop.permute.xlu0 %1445
      %1449 = vset.pattern.permute.xlu0 0
      %1450 = vperm.xlu0 %1449, %v1432
      %v1451 = vpop.permute.xlu0 %1450
      %v1453 = vmul.f32 %v1405, %v1436
      %v1454 = vmul.f32 %v1406, %v1441
      %v1455 = vmul.f32 %v1407, %v1446
      %v1456 = vmul.f32 %v1408, %v1451
      %v1457 = vadd.f32 %v1453, %v1454
      %v1458 = vadd.f32 %v1457, %v1455
      %v1459 = vadd.f32 %v1458, %v1456
      %v1460 = vrot.slane %v1459, 4
      %v1461 = vadd.f32 %v1459, %v1460
      %v1462 = vrot.slane %v1461, 2
      %v1463 = vadd.f32 %v1461, %v1462
      %v1464 = vrot.slane %v1463, 1
      %v1465 = vadd.f32 %v1463, %v1464
      %1466 = vst [vmem:[%s415] sm:$0x1] %v1465
      %v1467 = vmul.f32 %v1453, %v1405
      %v1468 = vmul.f32 %v1454, %v1406
      %v1469 = vmul.f32 %v1455, %v1407
      %v1470 = vmul.f32 %v1456, %v1408
      %v1471 = vadd.f32 %v1467, %v1468
      %v1472 = vadd.f32 %v1471, %v1469
      %v1473 = vadd.f32 %v1472, %v1470
      %v1474 = vrot.slane %v1473, 4
      %v1475 = vadd.f32 %v1473, %v1474
      %v1476 = vrot.slane %v1475, 2
      %v1477 = vadd.f32 %v1475, %v1476
      %v1478 = vrot.slane %v1477, 1
      %v1479 = vadd.f32 %v1477, %v1478
      %1480 = vst [vmem:[%s421] sm:$0x1] %v1479
      %s1481 = smul.u32 4, %s23
      %p1482 = scmp.lt.s32.totalorder %s22, 1
      %s1483 = scalar_select %p1482, %s22, 1
      %p1484 = scmp.lt.s32.totalorder %s1481, 3
      %s1485 = scalar_select %p1484, %s1481, 3
      %s1486 = smul.addr %s1483, 4
      %s1487 = sadd.s32 %s1485, %s1486
      %s1488 = smul.addr %s1487, 4
      %s1489 = scalar_lea.vmem %s4, %s1488
      %p1490 = scmp.lt.s32.totalorder %s22, 1
      %s1491 = scalar_select %p1490, %s22, 1
      %p1492 = scmp.lt.s32.totalorder %s23, 0
      %s1493 = scalar_select %p1492, %s23, 0
      %s1494 = sadd.s32 %s1493, %s1491
      %s1495 = scalar_lea.vmem %s5, %s1494
      %p1496 = scmp.lt.s32.totalorder %s22, 1
      %s1497 = scalar_select %p1496, %s22, 1
      %p1498 = scmp.lt.s32.totalorder %s23, 0
      %s1499 = scalar_select %p1498, %s23, 0
      %s1500 = sadd.s32 %s1499, %s1497
      %s1501 = scalar_lea.vmem %s6, %s1500
      // Predicated region
      $region37: #{spatial_path.5} parent=35 // pred_check
        %p1502 = pneg %p157
      $region38: #{spatial_path.5} parent=35 // pred_check_branch
        %1504 = sbr.rel (%p1502) target = $region40
      $region39: #{spatial_path.5} parent=35 // pred_region
        %s1505 = smul.u32 4, %s23
      $region40: #{spatial_path.5} parent=35 // pred_fallthru
        _
      // Predicated region
      $region41: #{spatial_path.5} parent=35 // pred_check
        %p1506 = pneg %p185
      $region42: #{spatial_path.5} parent=35 // pred_check_branch
        %1508 = sbr.rel (%p1506) target = $region44
      $region43: #{spatial_path.5} parent=35 // pred_region
        _
      $region44: #{spatial_path.5} parent=35 // pred_fallthru
        _
      // Predicated region
      $region45: #{spatial_path.5} parent=35 // pred_check
        %p1509 = pneg %p213
      $region46: #{spatial_path.5} parent=35 // pred_check_branch
        %1511 = sbr.rel (%p1509) target = $region48
      $region47: #{spatial_path.5} parent=35 // pred_region
        _
      $region48: #{spatial_path.5} parent=35 // pred_fallthru
        _
    $region36: #{spatial_path.5} parent=5 // pred_fallthru
      _
    %p1512 = scmp.le.s32.totalorder 2, %s13
    // Predicated region
    $region49: #{spatial_path.5} parent=5 // pred_check
      %p1513 = pneg %p1512
    $region50: #{spatial_path.5} parent=5 // pred_check_branch
      %1515 = sbr.rel (%p1513) target = $region52
    $region51: #{spatial_path.5} parent=5 // pred_region
      %s1516 = ssub.s32 %s13, 2
      // Predicated region
      $region53: #{spatial_path.5} parent=51 // pred_check
        %p1517 = pneg %p163
      $region54: #{spatial_path.5} parent=51 // pred_check_branch
        %1519 = sbr.rel (%p1517) target = $region56
      $region55: #{spatial_path.5} parent=51 // pred_region
        %s1520 = smul.u32 4, %s25
        %p1521 = scmp.lt.s32.totalorder %s24, 1
        %s1522 = scalar_select %p1521, %s24, 1
        %p1523 = scmp.lt.s32.totalorder %s1520, 3
        %s1524 = scalar_select %p1523, %s1520, 3
        %s1525 = smul.addr %s1522, 4
        %s1526 = sadd.s32 %s1524, %s1525
        %s1527 = smul.addr %s1526, 4
        %s1528 = scalar_lea.vmem %s4, %s1527
      $region56: #{spatial_path.5} parent=51 // pred_fallthru
        _
      // Predicated region
      $region57: #{spatial_path.5} parent=51 // pred_check
        %p1529 = pneg %p191
      $region58: #{spatial_path.5} parent=51 // pred_check_branch
        %1531 = sbr.rel (%p1529) target = $region60
      $region59: #{spatial_path.5} parent=51 // pred_region
        %p1532 = scmp.lt.s32.totalorder %s24, 1
        %s1533 = scalar_select %p1532, %s24, 1
        %p1534 = scmp.lt.s32.totalorder %s25, 0
        %s1535 = scalar_select %p1534, %s25, 0
        %s1536 = sadd.s32 %s1535, %s1533
        %s1537 = scalar_lea.vmem %s5, %s1536
      $region60: #{spatial_path.5} parent=51 // pred_fallthru
        _
      // Predicated region
      $region61: #{spatial_path.5} parent=51 // pred_check
        %p1538 = pneg %p219
      $region62: #{spatial_path.5} parent=51 // pred_check_branch
        %1540 = sbr.rel (%p1538) target = $region64
      $region63: #{spatial_path.5} parent=51 // pred_region
        %p1541 = scmp.lt.s32.totalorder %s24, 1
        %s1542 = scalar_select %p1541, %s24, 1
        %p1543 = scmp.lt.s32.totalorder %s25, 0
        %s1544 = scalar_select %p1543, %s25, 0
        %s1545 = sadd.s32 %s1544, %s1542
        %s1546 = scalar_lea.vmem %s6, %s1545
      $region64: #{spatial_path.5} parent=51 // pred_fallthru
        _
    $region52: #{spatial_path.5} parent=5 // pred_fallthru
      _
  $region6: #{spatial_path.5} parent=0 // loop_footer
    %s17 = sadd.s32 1, %s13
  $region7: #{spatial_path.5} parent=0 // loop_footer_branch
    %12 = sbr.rel target = $region3
  $region8: #{spatial_path.5} parent=0 // loop_exit
    _

// kernel: spatial_path.7
$region0: #{spatial_path.7}
  #allocation0 [shape = 'u32[]', space=smem, size = 0x4, offset = 0x4, fixed_abs, tag = 'smem constant byte address 0x4 - core index']
  #allocation1 [shape = 'u32[144,128]{1,0:T(1,128)}', space=vmem, size = 0x12000, scoped, tag = 'internal scratch']
  %s0 = inlined_call_operand.vmem [shape: bf16[2,16,256], index: 0, kind: input, shape index: {}]
  %s1 = inlined_call_operand.vmem [shape: f32[1,1,256], index: 1, kind: input, shape index: {}]
  %s2 = inlined_call_operand.vmem [shape: f32[1,1,256], index: 2, kind: input, shape index: {}]
  %s3 = inlined_call_operand.vmem [shape: f32[2,16,256], index: 3, kind: output, shape index: {}]
  %s4 = sld [smem:[#allocation0]]
  $region45: #{spatial_path.7} parent=0
    _
  %s6 = ssub.s32 1, %s4
  %s7 = scalar_select 0, %s6, %s4
  loop: start=0, step=1, limit=4
  $region2: #{spatial_path.7} parent=0 // loop_pre_header
    _
  $region3: #{spatial_path.7} parent=0 // loop_header
    %s9 = sphi 0, %s13
    %p10 = scmp.ge.s32.totalorder %s9, 4
    %s16 = sphi 0, %s28
    %s17 = sphi 0, %s24
    %s18 = sphi 0, %s16
    %s19 = sphi 0, %s17
    %s20 = sphi 0, %s18
    %s21 = sphi 0, %s19
    %s33 = sphi 0, %s35
    %s36 = sphi 0, %s33
    %s37 = sphi 0, %s36
    %s53 = sphi 0, %s37
    %s57 = sphi 0, %s57
    %s59 = sphi 0, %s57
    %s60 = sphi 0, %s59
    %s74 = sphi 0, %s60
    %s78 = sphi 0, %s78
    %s80 = sphi 0, %s78
    %s81 = sphi 0, %s80
    %s95 = sphi 0, %s81
    %s103 = sphi 0, %s105
    %s106 = sphi 0, %s103
    %s107 = sphi 0, %s106
    %s123 = sphi 0, %s107
  $region4: #{spatial_path.7} parent=0 // loop_header_branch
    %12 = sbr.rel (%p10) target = $region8
  $region5: #{spatial_path.7} parent=0 // loop_body
    %s14 = ssub.s32 %s9, 1
    %s15 = ssub.s32 %s9, 2
    %s22 = sadd.s32 1, %s17
    %p23 = scmp.ge.s32.totalorder %s22, 1
    %s24 = scalar_select %p23, 0, %s22
    %s25 = sadd.s32 1, %s16
    %s26 = scalar_select %p23, %s25, %s16
    %p27 = scmp.ge.s32.totalorder %s26, 2
    %s28 = scalar_select %p27, 0, %s26
    %s29 = ssub.s32 %s16, %s28
    %s30 = ssub.s32 %s17, %s24
    %s31 = sor.u32 %s29, %s30
    %p32 = scmp.eq.s32.totalorder %s31, 0
    %s34 = sadd.s32 %s33, 1
    %s35 = scalar_select %p32, %s33, %s34
    %p38 = pneg %p32
    %p39 = scmp.eq.s32.totalorder %s9, 1
    %p40 = por %p38, %p39
    %p41 = scmp.ne.s32.totalorder %s33, %s36
    %p42 = scmp.eq.s32.totalorder %s9, 0
    %p43 = por %p41, %p42
    %p44 = scmp.ne.s32.totalorder %s33, %s36
    %p45 = scmp.eq.s32.totalorder %s14, 1
    %p46 = por %p44, %p45
    %p47 = scmp.ne.s32.totalorder %s36, %s37
    %p48 = scmp.eq.s32.totalorder %s14, 0
    %p49 = por %p47, %p48
    %p50 = scmp.ne.s32.totalorder %s36, %s37
    %p51 = scmp.eq.s32.totalorder %s15, 1
    %p52 = por %p50, %p51
    %p54 = scmp.ne.s32.totalorder %s37, %s53
    %p55 = scmp.eq.s32.totalorder %s15, 0
    %p56 = por %p54, %p55
    %s58 = sadd.s32 %s57, 1
    %p61 = scmp.eq.s32.totalorder %s9, 1
    %p62 = scmp.ne.s32.totalorder %s57, %s59
    %p63 = scmp.eq.s32.totalorder %s9, 0
    %p64 = por %p62, %p63
    %p65 = scmp.ne.s32.totalorder %s57, %s59
    %p66 = scmp.eq.s32.totalorder %s14, 1
    %p67 = por %p65, %p66
    %p68 = scmp.ne.s32.totalorder %s59, %s60
    %p69 = scmp.eq.s32.totalorder %s14, 0
    %p70 = por %p68, %p69
    %p71 = scmp.ne.s32.totalorder %s59, %s60
    %p72 = scmp.eq.s32.totalorder %s15, 1
    %p73 = por %p71, %p72
    %p75 = scmp.ne.s32.totalorder %s60, %s74
    %p76 = scmp.eq.s32.totalorder %s15, 0
    %p77 = por %p75, %p76
    %s79 = sadd.s32 %s78, 1
    %p82 = scmp.eq.s32.totalorder %s9, 1
    %p83 = scmp.ne.s32.totalorder %s78, %s80
    %p84 = scmp.eq.s32.totalorder %s9, 0
    %p85 = por %p83, %p84
    %p86 = scmp.ne.s32.totalorder %s78, %s80
    %p87 = scmp.eq.s32.totalorder %s14, 1
    %p88 = por %p86, %p87
    %p89 = scmp.ne.s32.totalorder %s80, %s81
    %p90 = scmp.eq.s32.totalorder %s14, 0
    %p91 = por %p89, %p90
    %p92 = scmp.ne.s32.totalorder %s80, %s81
    %p93 = scmp.eq.s32.totalorder %s15, 1
    %p94 = por %p92, %p93
    %p96 = scmp.ne.s32.totalorder %s81, %s95
    %p97 = scmp.eq.s32.totalorder %s15, 0
    %p98 = por %p96, %p97
    %s99 = ssub.s32 %s16, %s28
    %s100 = ssub.s32 %s17, %s24
    %s101 = sor.u32 %s99, %s100
    %p102 = scmp.eq.s32.totalorder %s101, 0
    %s104 = sadd.s32 %s103, 1
    %s105 = scalar_select %p102, %s103, %s104
    %p108 = pneg %p102
    %p109 = scmp.eq.s32.totalorder %s9, 1
    %p110 = por %p108, %p109
    %p111 = scmp.ne.s32.totalorder %s103, %s106
    %p112 = scmp.eq.s32.totalorder %s9, 0
    %p113 = por %p111, %p112
    %p114 = scmp.ne.s32.totalorder %s103, %s106
    %p115 = scmp.eq.s32.totalorder %s14, 1
    %p116 = por %p114, %p115
    %p117 = scmp.ne.s32.totalorder %s106, %s107
    %p118 = scmp.eq.s32.totalorder %s14, 0
    %p119 = por %p117, %p118
    %p120 = scmp.ne.s32.totalorder %s106, %s107
    %p121 = scmp.eq.s32.totalorder %s15, 1
    %p122 = por %p120, %p121
    %p124 = scmp.ne.s32.totalorder %s107, %s123
    %p125 = scmp.eq.s32.totalorder %s15, 0
    %p126 = por %p124, %p125
    %p127 = scmp.le.s32.totalorder 1, %s9
    %p128 = scmp.lt.s32.totalorder %s9, 3
    %p129 = pnand %p127, %p128
    %p130 = pneg %p129
    // Predicated region
    $region9: #{spatial_path.7} parent=5 // pred_check
      _
    $region10: #{spatial_path.7} parent=5 // pred_check_branch
      %132 = sbr.rel (%p129) target = $region12
    $region11: #{spatial_path.7} parent=5 // pred_region
      %s133 = ssub.s32 %s9, 1
      // Predicated region
      $region13: #{spatial_path.7} parent=11 // pred_check
        %p134 = pneg %p70
      $region14: #{spatial_path.7} parent=11 // pred_check_branch
        %136 = sbr.rel (%p134) target = $region16
      $region15: #{spatial_path.7} parent=11 // pred_region
        _
      $region16: #{spatial_path.7} parent=11 // pred_fallthru
        _
      // Predicated region
      $region17: #{spatial_path.7} parent=11 // pred_check
        %p137 = pneg %p91
      $region18: #{spatial_path.7} parent=11 // pred_check_branch
        %139 = sbr.rel (%p137) target = $region20
      $region19: #{spatial_path.7} parent=11 // pred_region
        _
      $region20: #{spatial_path.7} parent=11 // pred_fallthru
        _
    $region12: #{spatial_path.7} parent=5 // pred_fallthru
      _
    %p140 = scmp.lt.s32.totalorder %s9, 2
    // Predicated region
    $region21: #{spatial_path.7} parent=5 // pred_check
      %p141 = pneg %p140
    $region22: #{spatial_path.7} parent=5 // pred_check_branch
      %143 = sbr.rel (%p141) target = $region24
    $region23: #{spatial_path.7} parent=5 // pred_region
      // Predicated region
      $region25: #{spatial_path.7} parent=23 // pred_check
        %p144 = pneg %p43
      $region26: #{spatial_path.7} parent=23 // pred_check_branch
        %146 = sbr.rel (%p144) target = $region28
      $region27: #{spatial_path.7} parent=23 // pred_region
        %s147 = smul.u32 2, %s17
        %p148 = scmp.lt.s32.totalorder %s16, 1
        %s149 = scalar_select %p148, %s16, 1
        %p150 = scmp.lt.s32.totalorder %s147, 1
        %s151 = scalar_select %p150, %s147, 1
        %s152 = smul.addr %s151, 2
        %s153 = smul.addr %s149, 4
        %s154 = sadd.s32 %s152, %s153
        %s155 = smul.addr %s154, 4
        %s156 = scalar_lea.vmem %s0, %s155
        %s157 = smul.u32 2, %s17
      $region28: #{spatial_path.7} parent=23 // pred_fallthru
        _
    $region24: #{spatial_path.7} parent=5 // pred_fallthru
      _
    %p158 = scmp.le.s32.totalorder 1, %s9
    %p159 = scmp.lt.s32.totalorder %s9, 3
    %p160 = pnand %p158, %p159
    %p161 = pneg %p160
    // Predicated region
    $region29: #{spatial_path.7} parent=5 // pred_check
      _
    $region30: #{spatial_path.7} parent=5 // pred_check_branch
      %163 = sbr.rel (%p160) target = $region32
    $region31: #{spatial_path.7} parent=5 // pred_region
      %s164 = ssub.s32 %s9, 1
      %s165 = smul.u32 2, %s19
      %p166 = scmp.lt.s32.totalorder %s18, 1
      %s167 = scalar_select %p166, %s18, 1
      %p168 = scmp.lt.s32.totalorder %s165, 1
      %s169 = scalar_select %p168, %s165, 1
      %s170 = smul.addr %s169, 2
      %s171 = smul.addr %s167, 4
      %s172 = sadd.s32 %s170, %s171
      %s173 = smul.addr %s172, 4
      %s174 = scalar_lea.vmem %s0, %s173
      %p175 = pneg %p49
      %p176 = pneg %p46
      %p177 = pneg %p70
      %p178 = pneg %p67
      %p179 = pneg %p91
      %p180 = pneg %p88
      %p181 = pneg %p119
      %p182 = pneg %p116
      %s183 = smul.u32 2, %s19
      %p184 = scmp.lt.s32.totalorder %s18, 1
      %s185 = scalar_select %p184, %s18, 1
      %p186 = scmp.lt.s32.totalorder %s183, 1
      %s187 = scalar_select %p186, %s183, 1
      %s188 = smul.addr %s187, 2
      %s189 = smul.addr %s185, 4
      %s190 = sadd.s32 %s188, %s189
      %s191 = smul.addr %s190, 8
      %s192 = scalar_lea.vmem %s3, %s191
      %s193 = smul.u32 2, %s19
      %p194 = scmp.lt.s32.totalorder %s18, 1
      %s195 = scalar_select %p194, %s18, 1
      %p196 = scmp.lt.s32.totalorder %s193, 1
      %s197 = scalar_select %p196, %s193, 1
      %s198 = smul.addr %s197, 2
      %s199 = smul.addr %s195, 4
      %s200 = sadd.s32 %s198, %s199
      %s201 = smul.addr %s200, 4
      %s202 = scalar_lea.vmem %s0, %s201
      %s203 = smul.u32 2, %s19
      %s204 = smul.u32 2, %s19
      %p205 = scmp.lt.s32.totalorder %s18, 1
      %s206 = scalar_select %p205, %s18, 1
      %p207 = scmp.lt.s32.totalorder %s204, 1
      %s208 = scalar_select %p207, %s204, 1
      %s209 = smul.addr %s208, 2
      %s210 = smul.addr %s206, 4
      %s211 = sadd.s32 %s209, %s210
      %s212 = smul.addr %s211, 8
      %s213 = scalar_lea.vmem %s3, %s212
      %s214 = smul.u32 2, %s19
      %v215 = vld [vmem:[%s202] sm:$0xff]
      %v216 = vld [vmem:[%s202 + $0x8] sm:$0xff]
      %v217 = vunpack.c.l.bf16 %v215
      %v218 = vunpack.c.h.bf16 %v215
      %v219 = vunpack.c.l.bf16 %v216
      %v220 = vunpack.c.h.bf16 %v216
      %v221 = vld [vmem:[%s1] sm:$0x3]
      %v223 = vlaneseq
      %v224 = vshrl.u32 %v223, 7
      %v225 = vsub.s32 0, %v224
      %v226 = vrot.slane %v221, %v225
      %v227 = vlaneseq
      %v228 = vshrl.u32 %v227, 7
      %v229 = vsub.s32 1, %v228
      %v230 = vrot.slane %v221, %v229
      %v233 = vmul.f32 %v217, %v226
      %v234 = vmul.f32 %v218, %v230
      %v235 = vmul.f32 %v219, %v226
      %v236 = vmul.f32 %v220, %v230
      %v237 = vld [vmem:[%s2] sm:$0x3]
      %v239 = vlaneseq
      %v240 = vshrl.u32 %v239, 7
      %v241 = vsub.s32 0, %v240
      %v242 = vrot.slane %v237, %v241
      %v243 = vlaneseq
      %v244 = vshrl.u32 %v243, 7
      %v245 = vsub.s32 1, %v244
      %v246 = vrot.slane %v237, %v245
      %v249 = vadd.f32 %v233, %v242
      %v250 = vadd.f32 %v234, %v246
      %v251 = vadd.f32 %v235, %v242
      %v252 = vadd.f32 %v236, %v246
      %v253 = vmax.f32 %v249, 0.0
      %v254 = vmax.f32 %v250, 0.0
      %v255 = vmax.f32 %v251, 0.0
      %v256 = vmax.f32 %v252, 0.0
      %257 = vst [vmem:[%s213] sm:$0xff] %v253
      %258 = vst [vmem:[%s213 + $0x8] sm:$0xff] %v254
      %259 = vst [vmem:[%s213 + $0x10] sm:$0xff] %v255
      %260 = vst [vmem:[%s213 + $0x18] sm:$0xff] %v256
      %s261 = smul.u32 2, %s19
      %p262 = scmp.lt.s32.totalorder %s18, 1
      %s263 = scalar_select %p262, %s18, 1
      %p264 = scmp.lt.s32.totalorder %s261, 1
      %s265 = scalar_select %p264, %s261, 1
      %s266 = smul.addr %s265, 2
      %s267 = smul.addr %s263, 4
      %s268 = sadd.s32 %s266, %s267
      %s269 = smul.addr %s268, 8
      %s270 = scalar_lea.vmem %s3, %s269
      // Predicated region
      $region33: #{spatial_path.7} parent=31 // pred_check
        %p271 = pneg %p116
      $region34: #{spatial_path.7} parent=31 // pred_check_branch
        %273 = sbr.rel (%p271) target = $region36
      $region35: #{spatial_path.7} parent=31 // pred_region
        %s274 = smul.u32 2, %s19
      $region36: #{spatial_path.7} parent=31 // pred_fallthru
        _
    $region32: #{spatial_path.7} parent=5 // pred_fallthru
      _
    %p275 = scmp.le.s32.totalorder 2, %s9
    // Predicated region
    $region37: #{spatial_path.7} parent=5 // pred_check
      %p276 = pneg %p275
    $region38: #{spatial_path.7} parent=5 // pred_check_branch
      %278 = sbr.rel (%p276) target = $region40
    $region39: #{spatial_path.7} parent=5 // pred_region
      %s279 = ssub.s32 %s9, 2
      // Predicated region
      $region41: #{spatial_path.7} parent=39 // pred_check
        %p280 = pneg %p122
      $region42: #{spatial_path.7} parent=39 // pred_check_branch
        %282 = sbr.rel (%p280) target = $region44
      $region43: #{spatial_path.7} parent=39 // pred_region
        %s283 = smul.u32 2, %s21
        %p284 = scmp.lt.s32.totalorder %s20, 1
        %s285 = scalar_select %p284, %s20, 1
        %p286 = scmp.lt.s32.totalorder %s283, 1
        %s287 = scalar_select %p286, %s283, 1
        %s288 = smul.addr %s287, 2
        %s289 = smul.addr %s285, 4
        %s290 = sadd.s32 %s288, %s289
        %s291 = smul.addr %s290, 8
        %s292 = scalar_lea.vmem %s3, %s291
      $region44: #{spatial_path.7} parent=39 // pred_fallthru
        _
    $region40: #{spatial_path.7} parent=5 // pred_fallthru
      _
  $region6: #{spatial_path.7} parent=0 // loop_footer
    %s13 = sadd.s32 1, %s9
  $region7: #{spatial_path.7} parent=0 // loop_footer_branch
    %8 = sbr.rel target = $region3
  $region8: #{spatial_path.7} parent=0 // loop_exit
    _

// kernel: spatial_path.6
$region0: #{spatial_path.6}
  #allocation0 [shape = 'u32[]', space=smem, size = 0x4, offset = 0x4, fixed_abs, tag = 'smem constant byte address 0x4 - core index']
  #allocation1 [shape = 'u32[144,128]{1,0:T(1,128)}', space=vmem, size = 0x12000, scoped, tag = 'internal scratch']
  %s0 = inlined_call_operand.vmem [shape: bf16[2,3,18,256], index: 0, kind: input, shape index: {}, may-alias: {0,1}]
  %s1 = inlined_call_operand.vmem [shape: bf16[2,3,18,256], index: 1, kind: input, shape index: {}, may-alias: {0,1}]
  %s2 = inlined_call_operand.vmem [shape: bf16[6,256,256], index: 2, kind: input, shape index: {}]
  %s3 = inlined_call_operand.vmem [shape: f32[16,1], index: 3, kind: input, shape index: {}]
  %s4 = inlined_call_operand.vmem [shape: bf16[2,16,256], index: 4, kind: output, shape index: {0}]
  %s5 = inlined_call_operand.vmem [shape: f32[2,1,1,256], index: 5, kind: output, shape index: {1}]
  %s6 = inlined_call_operand.vmem [shape: f32[2,1,1,256], index: 6, kind: output, shape index: {2}]
  %7 = xla_tuple %s4, %s5, %s6
  %s8 = sld [smem:[#allocation0]]
  $region65: #{spatial_path.6} parent=0
    _
  %s10 = ssub.s32 1, %s8
  %s11 = scalar_select 0, %s10, %s8
  loop: start=0, step=1, limit=4
  $region2: #{spatial_path.6} parent=0 // loop_pre_header
    _
  $region3: #{spatial_path.6} parent=0 // loop_header
    %s13 = sphi 0, %s17
    %p14 = scmp.ge.s32.totalorder %s13, 4
    %s20 = sphi 0, %s32
    %s21 = sphi 0, %s28
    %s22 = sphi 0, %s20
    %s23 = sphi 0, %s21
    %s24 = sphi 0, %s22
    %s25 = sphi 0, %s23
    %s37 = sphi 0, %s39
    %s40 = sphi 0, %s37
    %s41 = sphi 0, %s40
    %s57 = sphi 0, %s41
    %s69 = sphi 0, %s71
    %s72 = sphi 0, %s69
    %s73 = sphi 0, %s72
    %s89 = sphi 0, %s73
    %s93 = sphi 0, %s93
    %s95 = sphi 0, %s93
    %s96 = sphi 0, %s95
    %s110 = sphi 0, %s96
    %s116 = sphi 0, %s118
    %s119 = sphi 0, %s116
    %s120 = sphi 0, %s119
    %s136 = sphi 0, %s120
    %s144 = sphi 0, %s146
    %s147 = sphi 0, %s144
    %s148 = sphi 0, %s147
    %s164 = sphi 0, %s148
    %s172 = sphi 0, %s174
    %s175 = sphi 0, %s172
    %s176 = sphi 0, %s175
    %s192 = sphi 0, %s176
    %s200 = sphi 0, %s202
    %s203 = sphi 0, %s200
    %s204 = sphi 0, %s203
    %s220 = sphi 0, %s204
  $region4: #{spatial_path.6} parent=0 // loop_header_branch
    %16 = sbr.rel (%p14) target = $region8
  $region5: #{spatial_path.6} parent=0 // loop_body
    %s18 = ssub.s32 %s13, 1
    %s19 = ssub.s32 %s13, 2
    %s26 = sadd.s32 1, %s21
    %p27 = scmp.ge.s32.totalorder %s26, 1
    %s28 = scalar_select %p27, 0, %s26
    %s29 = sadd.s32 1, %s20
    %s30 = scalar_select %p27, %s29, %s20
    %p31 = scmp.ge.s32.totalorder %s30, 2
    %s32 = scalar_select %p31, 0, %s30
    %s33 = ssub.s32 %s20, %s32
    %s34 = ssub.s32 %s21, %s28
    %s35 = sor.u32 %s33, %s34
    %p36 = scmp.eq.s32.totalorder %s35, 0
    %s38 = sadd.s32 %s37, 1
    %s39 = scalar_select %p36, %s37, %s38
    %p42 = pneg %p36
    %p43 = scmp.eq.s32.totalorder %s13, 1
    %p44 = por %p42, %p43
    %p45 = scmp.ne.s32.totalorder %s37, %s40
    %p46 = scmp.eq.s32.totalorder %s13, 0
    %p47 = por %p45, %p46
    %p48 = scmp.ne.s32.totalorder %s37, %s40
    %p49 = scmp.eq.s32.totalorder %s18, 1
    %p50 = por %p48, %p49
    %p51 = scmp.ne.s32.totalorder %s40, %s41
    %p52 = scmp.eq.s32.totalorder %s18, 0
    %p53 = por %p51, %p52
    %p54 = scmp.ne.s32.totalorder %s40, %s41
    %p55 = scmp.eq.s32.totalorder %s19, 1
    %p56 = por %p54, %p55
    %p58 = scmp.ne.s32.totalorder %s41, %s57
    %p59 = scmp.eq.s32.totalorder %s19, 0
    %p60 = por %p58, %p59
    %s61 = sadd.s32 %s21, 1
    %s62 = smul.u32 %s61, 2
    %s63 = sadd.s32 %s28, 1
    %s64 = smul.u32 %s63, 2
    %s65 = ssub.s32 %s20, %s32
    %s66 = ssub.s32 %s62, %s64
    %s67 = sor.u32 %s65, %s66
    %p68 = scmp.eq.s32.totalorder %s67, 0
    %s70 = sadd.s32 %s69, 1
    %s71 = scalar_select %p68, %s69, %s70
    %p74 = pneg %p68
    %p75 = scmp.eq.s32.totalorder %s13, 1
    %p76 = por %p74, %p75
    %p77 = scmp.ne.s32.totalorder %s69, %s72
    %p78 = scmp.eq.s32.totalorder %s13, 0
    %p79 = por %p77, %p78
    %p80 = scmp.ne.s32.totalorder %s69, %s72
    %p81 = scmp.eq.s32.totalorder %s18, 1
    %p82 = por %p80, %p81
    %p83 = scmp.ne.s32.totalorder %s72, %s73
    %p84 = scmp.eq.s32.totalorder %s18, 0
    %p85 = por %p83, %p84
    %p86 = scmp.ne.s32.totalorder %s72, %s73
    %p87 = scmp.eq.s32.totalorder %s19, 1
    %p88 = por %p86, %p87
    %p90 = scmp.ne.s32.totalorder %s73, %s89
    %p91 = scmp.eq.s32.totalorder %s19, 0
    %p92 = por %p90, %p91
    %s94 = sadd.s32 %s93, 1
    %p97 = scmp.eq.s32.totalorder %s13, 1
    %p98 = scmp.ne.s32.totalorder %s93, %s95
    %p99 = scmp.eq.s32.totalorder %s13, 0
    %p100 = por %p98, %p99
    %p101 = scmp.ne.s32.totalorder %s93, %s95
    %p102 = scmp.eq.s32.totalorder %s18, 1
    %p103 = por %p101, %p102
    %p104 = scmp.ne.s32.totalorder %s95, %s96
    %p105 = scmp.eq.s32.totalorder %s18, 0
    %p106 = por %p104, %p105
    %p107 = scmp.ne.s32.totalorder %s95, %s96
    %p108 = scmp.eq.s32.totalorder %s19, 1
    %p109 = por %p107, %p108
    %p111 = scmp.ne.s32.totalorder %s96, %s110
    %p112 = scmp.eq.s32.totalorder %s19, 0
    %p113 = por %p111, %p112
    %s114 = ssub.s32 %s21, %s28
    %p115 = scmp.eq.s32.totalorder %s114, 0
    %s117 = sadd.s32 %s116, 1
    %s118 = scalar_select %p115, %s116, %s117
    %p121 = pneg %p115
    %p122 = scmp.eq.s32.totalorder %s13, 1
    %p123 = por %p121, %p122
    %p124 = scmp.ne.s32.totalorder %s116, %s119
    %p125 = scmp.eq.s32.totalorder %s13, 0
    %p126 = por %p124, %p125
    %p127 = scmp.ne.s32.totalorder %s116, %s119
    %p128 = scmp.eq.s32.totalorder %s18, 1
    %p129 = por %p127, %p128
    %p130 = scmp.ne.s32.totalorder %s119, %s120
    %p131 = scmp.eq.s32.totalorder %s18, 0
    %p132 = por %p130, %p131
    %p133 = scmp.ne.s32.totalorder %s119, %s120
    %p134 = scmp.eq.s32.totalorder %s19, 1
    %p135 = por %p133, %p134
    %p137 = scmp.ne.s32.totalorder %s120, %s136
    %p138 = scmp.eq.s32.totalorder %s19, 0
    %p139 = por %p137, %p138
    %s140 = ssub.s32 %s20, %s32
    %s141 = ssub.s32 %s21, %s28
    %s142 = sor.u32 %s140, %s141
    %p143 = scmp.eq.s32.totalorder %s142, 0
    %s145 = sadd.s32 %s144, 1
    %s146 = scalar_select %p143, %s144, %s145
    %p149 = pneg %p143
    %p150 = scmp.eq.s32.totalorder %s13, 1
    %p151 = por %p149, %p150
    %p152 = scmp.ne.s32.totalorder %s144, %s147
    %p153 = scmp.eq.s32.totalorder %s13, 0
    %p154 = por %p152, %p153
    %p155 = scmp.ne.s32.totalorder %s144, %s147
    %p156 = scmp.eq.s32.totalorder %s18, 1
    %p157 = por %p155, %p156
    %p158 = scmp.ne.s32.totalorder %s147, %s148
    %p159 = scmp.eq.s32.totalorder %s18, 0
    %p160 = por %p158, %p159
    %p161 = scmp.ne.s32.totalorder %s147, %s148
    %p162 = scmp.eq.s32.totalorder %s19, 1
    %p163 = por %p161, %p162
    %p165 = scmp.ne.s32.totalorder %s148, %s164
    %p166 = scmp.eq.s32.totalorder %s19, 0
    %p167 = por %p165, %p166
    %s168 = ssub.s32 %s20, %s32
    %s169 = ssub.s32 %s21, %s28
    %s170 = sor.u32 %s168, %s169
    %p171 = scmp.eq.s32.totalorder %s170, 0
    %s173 = sadd.s32 %s172, 1
    %s174 = scalar_select %p171, %s172, %s173
    %p177 = pneg %p171
    %p178 = scmp.eq.s32.totalorder %s13, 1
    %p179 = por %p177, %p178
    %p180 = scmp.ne.s32.totalorder %s172, %s175
    %p181 = scmp.eq.s32.totalorder %s13, 0
    %p182 = por %p180, %p181
    %p183 = scmp.ne.s32.totalorder %s172, %s175
    %p184 = scmp.eq.s32.totalorder %s18, 1
    %p185 = por %p183, %p184
    %p186 = scmp.ne.s32.totalorder %s175, %s176
    %p187 = scmp.eq.s32.totalorder %s18, 0
    %p188 = por %p186, %p187
    %p189 = scmp.ne.s32.totalorder %s175, %s176
    %p190 = scmp.eq.s32.totalorder %s19, 1
    %p191 = por %p189, %p190
    %p193 = scmp.ne.s32.totalorder %s176, %s192
    %p194 = scmp.eq.s32.totalorder %s19, 0
    %p195 = por %p193, %p194
    %s196 = ssub.s32 %s20, %s32
    %s197 = ssub.s32 %s21, %s28
    %s198 = sor.u32 %s196, %s197
    %p199 = scmp.eq.s32.totalorder %s198, 0
    %s201 = sadd.s32 %s200, 1
    %s202 = scalar_select %p199, %s200, %s201
    %p205 = pneg %p199
    %p206 = scmp.eq.s32.totalorder %s13, 1
    %p207 = por %p205, %p206
    %p208 = scmp.ne.s32.totalorder %s200, %s203
    %p209 = scmp.eq.s32.totalorder %s13, 0
    %p210 = por %p208, %p209
    %p211 = scmp.ne.s32.totalorder %s200, %s203
    %p212 = scmp.eq.s32.totalorder %s18, 1
    %p213 = por %p211, %p212
    %p214 = scmp.ne.s32.totalorder %s203, %s204
    %p215 = scmp.eq.s32.totalorder %s18, 0
    %p216 = por %p214, %p215
    %p217 = scmp.ne.s32.totalorder %s203, %s204
    %p218 = scmp.eq.s32.totalorder %s19, 1
    %p219 = por %p217, %p218
    %p221 = scmp.ne.s32.totalorder %s204, %s220
    %p222 = scmp.eq.s32.totalorder %s19, 0
    %p223 = por %p221, %p222
    %p224 = scmp.le.s32.totalorder 1, %s13
    %p225 = scmp.lt.s32.totalorder %s13, 3
    %p226 = pnand %p224, %p225
    %p227 = pneg %p226
    // Predicated region
    $region9: #{spatial_path.6} parent=5 // pred_check
      _
    $region10: #{spatial_path.6} parent=5 // pred_check_branch
      %229 = sbr.rel (%p226) target = $region12
    $region11: #{spatial_path.6} parent=5 // pred_region
      %s230 = ssub.s32 %s13, 1
      // Predicated region
      $region13: #{spatial_path.6} parent=11 // pred_check
        %p231 = pneg %p106
      $region14: #{spatial_path.6} parent=11 // pred_check_branch
        %233 = sbr.rel (%p231) target = $region16
      $region15: #{spatial_path.6} parent=11 // pred_region
        _
      $region16: #{spatial_path.6} parent=11 // pred_fallthru
        _
      // Predicated region
      $region17: #{spatial_path.6} parent=11 // pred_check
        %p234 = pneg %p132
      $region18: #{spatial_path.6} parent=11 // pred_check_branch
        %236 = sbr.rel (%p234) target = $region20
      $region19: #{spatial_path.6} parent=11 // pred_region
        %s237 = smul.u32 2, %s23
        %p238 = scmp.lt.s32.totalorder %s237, 1
        %s239 = scalar_select %p238, %s237, 1
        %s240 = smul.addr %s239, 8
        %s241 = scalar_lea.vmem %s3, %s240
        %s242 = smul.u32 2, %s23
      $region20: #{spatial_path.6} parent=11 // pred_fallthru
        _
    $region12: #{spatial_path.6} parent=5 // pred_fallthru
      _
    %p243 = scmp.lt.s32.totalorder %s13, 2
    // Predicated region
    $region21: #{spatial_path.6} parent=5 // pred_check
      %p244 = pneg %p243
    $region22: #{spatial_path.6} parent=5 // pred_check_branch
      %246 = sbr.rel (%p244) target = $region24
    $region23: #{spatial_path.6} parent=5 // pred_region
      // Predicated region
      $region25: #{spatial_path.6} parent=23 // pred_check
        %p247 = pneg %p47
      $region26: #{spatial_path.6} parent=23 // pred_check_branch
        %249 = sbr.rel (%p247) target = $region28
      $region27: #{spatial_path.6} parent=23 // pred_region
        %s250 = smul.u32 2, %s21
        %s251 = ssub.s32 3, %s250
        %p252 = scmp.lt.s32.totalorder %s251, 2
        %s253 = scalar_select %p252, %s251, 2
        %s254 = smul.u32 64, %s253
        %s255 = smul.u32 %s254, 3
        %s256 = smul.u32 %s255, 2
        %p257 = scmp.lt.s32.totalorder %s20, 1
        %s258 = scalar_select %p257, %s20, 1
        %p259 = scmp.lt.s32.totalorder %s250, 2
        %s260 = scalar_select %p259, %s250, 2
        %s261 = smul.addr %s260, 6
        %s262 = smul.addr %s258, 18
        %s263 = sadd.s32 %s261, %s262
        %s264 = smul.addr %s263, 4
        %s265 = scalar_lea.vmem %s0, %s264
        %s266 = smul.u32 2, %s21
        %s267 = ssub.s32 3, %s266
        %p268 = scmp.lt.s32.totalorder %s267, 2
        %s269 = scalar_select %p268, %s267, 2
        %s270 = smul.u32 64, %s269
        %s271 = smul.u32 %s270, 3
        %s272 = smul.u32 %s271, 2
      $region28: #{spatial_path.6} parent=23 // pred_fallthru
        _
      // Predicated region
      $region29: #{spatial_path.6} parent=23 // pred_check
        %p273 = pneg %p79
      $region30: #{spatial_path.6} parent=23 // pred_check_branch
        %275 = sbr.rel (%p273) target = $region32
      $region31: #{spatial_path.6} parent=23 // pred_region
        %s276 = sadd.s32 %s21, 1
        %s277 = smul.u32 %s276, 2
        %p278 = scmp.lt.s32.totalorder %s20, 1
        %s279 = scalar_select %p278, %s20, 1
        %p280 = scmp.lt.s32.totalorder %s277, 2
        %s281 = scalar_select %p280, %s277, 2
        %s282 = smul.addr %s281, 6
        %s283 = smul.addr %s279, 18
        %s284 = sadd.s32 %s282, %s283
        %s285 = smul.addr %s284, 4
        %s286 = scalar_lea.vmem %s1, %s285
        %s287 = sadd.s32 %s21, 1
        %s288 = smul.u32 %s287, 2
      $region32: #{spatial_path.6} parent=23 // pred_fallthru
        _
    $region24: #{spatial_path.6} parent=5 // pred_fallthru
      _
    %p289 = scmp.le.s32.totalorder 1, %s13
    %p290 = scmp.lt.s32.totalorder %s13, 3
    %p291 = pnand %p289, %p290
    %p292 = pneg %p291
    // Predicated region
    $region33: #{spatial_path.6} parent=5 // pred_check
      _
    $region34: #{spatial_path.6} parent=5 // pred_check_branch
      %294 = sbr.rel (%p291) target = $region36
    $region35: #{spatial_path.6} parent=5 // pred_region
      %s295 = ssub.s32 %s13, 1
      %s296 = smul.u32 2, %s23
      %s297 = ssub.s32 3, %s296
      %p298 = scmp.lt.s32.totalorder %s297, 2
      %s299 = scalar_select %p298, %s297, 2
      %s300 = smul.u32 64, %s299
      %s301 = smul.u32 %s300, 3
      %s302 = smul.u32 %s301, 2
      %p303 = scmp.lt.s32.totalorder %s22, 1
      %s304 = scalar_select %p303, %s22, 1
      %p305 = scmp.lt.s32.totalorder %s296, 2
      %s306 = scalar_select %p305, %s296, 2
      %s307 = smul.addr %s306, 6
      %s308 = smul.addr %s304, 18
      %s309 = sadd.s32 %s307, %s308
      %s310 = smul.addr %s309, 4
      %s311 = scalar_lea.vmem %s0, %s310
      %p312 = pneg %p53
      %p313 = pneg %p50
      %s314 = sadd.s32 %s23, 1
      %s315 = smul.u32 %s314, 2
      %p316 = scmp.lt.s32.totalorder %s22, 1
      %s317 = scalar_select %p316, %s22, 1
      %p318 = scmp.lt.s32.totalorder %s315, 2
      %s319 = scalar_select %p318, %s315, 2
      %s320 = smul.addr %s319, 6
      %s321 = smul.addr %s317, 18
      %s322 = sadd.s32 %s320, %s321
      %s323 = smul.addr %s322, 4
      %s324 = scalar_lea.vmem %s1, %s323
      %p325 = pneg %p85
      %p326 = pneg %p82
      %p327 = pneg %p106
      %p328 = pneg %p103
      %s329 = smul.u32 2, %s23
      %p330 = scmp.lt.s32.totalorder %s329, 1
      %s331 = scalar_select %p330, %s329, 1
      %s332 = smul.addr %s331, 8
      %s333 = scalar_lea.vmem %s3, %s332
      %p334 = pneg %p132
      %p335 = pneg %p129
      %p336 = pneg %p160
      %p337 = pneg %p157
      %s338 = smul.u32 2, %s23
      %p339 = scmp.lt.s32.totalorder %s22, 1
      %s340 = scalar_select %p339, %s22, 1
      %p341 = scmp.lt.s32.totalorder %s338, 1
      %s342 = scalar_select %p341, %s338, 1
      %s343 = smul.addr %s342, 2
      %s344 = smul.addr %s340, 4
      %s345 = sadd.s32 %s343, %s344
      %s346 = smul.addr %s345, 4
      %s347 = scalar_lea.vmem %s4, %s346
      %p348 = pneg %p188
      %p349 = pneg %p185
      %p350 = scmp.lt.s32.totalorder %s22, 1
      %s351 = scalar_select %p350, %s22, 1
      %p352 = scmp.lt.s32.totalorder %s23, 0
      %s353 = scalar_select %p352, %s23, 0
      %s354 = smul.addr %s353, 2
      %s355 = smul.addr %s351, 2
      %s356 = sadd.s32 %s354, %s355
      %s357 = scalar_lea.vmem %s5, %s356
      %p358 = pneg %p216
      %p359 = pneg %p213
      %p360 = scmp.lt.s32.totalorder %s22, 1
      %s361 = scalar_select %p360, %s22, 1
      %p362 = scmp.lt.s32.totalorder %s23, 0
      %s363 = scalar_select %p362, %s23, 0
      %s364 = smul.addr %s363, 2
      %s365 = smul.addr %s361, 2
      %s366 = sadd.s32 %s364, %s365
      %s367 = scalar_lea.vmem %s6, %s366
      %s368 = smul.u32 2, %s23
      %s369 = ssub.s32 3, %s368
      %p370 = scmp.lt.s32.totalorder %s369, 2
      %s371 = scalar_select %p370, %s369, 2
      %s372 = smul.u32 64, %s371
      %s373 = smul.u32 %s372, 3
      %s374 = smul.u32 %s373, 2
      %p375 = scmp.lt.s32.totalorder %s22, 1
      %s376 = scalar_select %p375, %s22, 1
      %p377 = scmp.lt.s32.totalorder %s368, 2
      %s378 = scalar_select %p377, %s368, 2
      %s379 = smul.addr %s378, 6
      %s380 = smul.addr %s376, 18
      %s381 = sadd.s32 %s379, %s380
      %s382 = smul.addr %s381, 4
      %s383 = scalar_lea.vmem %s0, %s382
      %s384 = smul.u32 2, %s23
      %s385 = ssub.s32 3, %s384
      %p386 = scmp.lt.s32.totalorder %s385, 2
      %s387 = scalar_select %p386, %s385, 2
      %s388 = smul.u32 64, %s387
      %s389 = smul.u32 %s388, 3
      %s390 = smul.u32 %s389, 2
      %s391 = sadd.s32 %s23, 1
      %s392 = smul.u32 %s391, 2
      %p393 = scmp.lt.s32.totalorder %s22, 1
      %s394 = scalar_select %p393, %s22, 1
      %p395 = scmp.lt.s32.totalorder %s392, 2
      %s396 = scalar_select %p395, %s392, 2
      %s397 = smul.addr %s396, 6
      %s398 = smul.addr %s394, 18
      %s399 = sadd.s32 %s397, %s398
      %s400 = smul.addr %s399, 4
      %s401 = scalar_lea.vmem %s1, %s400
      %s402 = sadd.s32 %s23, 1
      %s403 = smul.u32 %s402, 2
      %s404 = smul.u32 2, %s23
      %p405 = scmp.lt.s32.totalorder %s404, 1
      %s406 = scalar_select %p405, %s404, 1
      %s407 = smul.addr %s406, 8
      %s408 = scalar_lea.vmem %s3, %s407
      %s409 = smul.u32 2, %s23
      %s410 = smul.u32 2, %s23
      %p411 = scmp.lt.s32.totalorder %s22, 1
      %s412 = scalar_select %p411, %s22, 1
      %p413 = scmp.lt.s32.totalorder %s410, 1
      %s414 = scalar_select %p413, %s410, 1
      %s415 = smul.addr %s414, 2
      %s416 = smul.addr %s412, 4
      %s417 = sadd.s32 %s415, %s416
      %s418 = smul.addr %s417, 4
      %s419 = scalar_lea.vmem %s4, %s418
      %s420 = smul.u32 2, %s23
      %p421 = scmp.lt.s32.totalorder %s22, 1
      %s422 = scalar_select %p421, %s22, 1
      %p423 = scmp.lt.s32.totalorder %s23, 0
      %s424 = scalar_select %p423, %s23, 0
      %s425 = smul.addr %s424, 2
      %s426 = smul.addr %s422, 2
      %s427 = sadd.s32 %s425, %s426
      %s428 = scalar_lea.vmem %s5, %s427
      %p429 = scmp.lt.s32.totalorder %s22, 1
      %s430 = scalar_select %p429, %s22, 1
      %p431 = scmp.lt.s32.totalorder %s23, 0
      %s432 = scalar_select %p431, %s23, 0
      %s433 = smul.addr %s432, 2
      %s434 = smul.addr %s430, 2
      %s435 = sadd.s32 %s433, %s434
      %s436 = scalar_lea.vmem %s6, %s435
      %v437 = vld [vmem:[%s383] sm:$0xff]
      %v438 = vld [vmem:[%s383 + $0x18] sm:$0xff]
      %v439 = vld [vmem:[%s2] sm:$0xff]
      %v440 = vld [vmem:[%s2 + $0x8] sm:$0xff]
      %v441 = vld [vmem:[%s2 + $0x10] sm:$0xff]
      %v442 = vld [vmem:[%s2 + $0x18] sm:$0xff]
      %v443 = vld [vmem:[%s2 + $0x20] sm:$0xff]
      %v444 = vld [vmem:[%s2 + $0x28] sm:$0xff]
      %v445 = vld [vmem:[%s2 + $0x30] sm:$0xff]
      %v446 = vld [vmem:[%s2 + $0x38] sm:$0xff]
      %v447 = vld [vmem:[%s2 + $0x40] sm:$0xff]
      %v448 = vld [vmem:[%s2 + $0x48] sm:$0xff]
      %v449 = vld [vmem:[%s2 + $0x50] sm:$0xff]
      %v450 = vld [vmem:[%s2 + $0x58] sm:$0xff]
      %v451 = vld [vmem:[%s2 + $0x60] sm:$0xff]
      %v452 = vld [vmem:[%s2 + $0x68] sm:$0xff]
      %v453 = vld [vmem:[%s2 + $0x70] sm:$0xff]
      %v454 = vld [vmem:[%s2 + $0x78] sm:$0xff]
      %v455 = vld [vmem:[%s2 + $0x80] sm:$0xff]
      %v456 = vld [vmem:[%s2 + $0x88] sm:$0xff]
      %v457 = vld [vmem:[%s2 + $0x90] sm:$0xff]
      %v458 = vld [vmem:[%s2 + $0x98] sm:$0xff]
      %v459 = vld [vmem:[%s2 + $0xa0] sm:$0xff]
      %v460 = vld [vmem:[%s2 + $0xa8] sm:$0xff]
      %v461 = vld [vmem:[%s2 + $0xb0] sm:$0xff]
      %v462 = vld [vmem:[%s2 + $0xb8] sm:$0xff]
      %v463 = vld [vmem:[%s2 + $0xc0] sm:$0xff]
      %v464 = vld [vmem:[%s2 + $0xc8] sm:$0xff]
      %v465 = vld [vmem:[%s2 + $0xd0] sm:$0xff]
      %v466 = vld [vmem:[%s2 + $0xd8] sm:$0xff]
      %v467 = vld [vmem:[%s2 + $0xe0] sm:$0xff]
      %v468 = vld [vmem:[%s2 + $0xe8] sm:$0xff]
      %v469 = vld [vmem:[%s2 + $0xf0] sm:$0xff]
      %v470 = vld [vmem:[%s2 + $0xf8] sm:$0xff]
      %v471 = vld [vmem:[%s383 + $0x8] sm:$0x11]
      %v472 = vld [vmem:[%s383 + $0x20] sm:$0x11]
      %vm473 = vsmask.f32 3328
      %vm474 = vsmask.f32 7440
      %vm475 = vmor %vm473, %vm474
      %v477 = vshrl.u32 %v437, 16
      %v479 = vrot.slane %v477, 4
      %v480 = vshll.u32 %v437, 16
      %v482 = vrot.slane %v480, 5
      %v483 = vor.u32 %v479, %v482
      %v484 = vrot.slane %v483, 4
      %v486 = vshll.u32 %v471, 16
      %v488 = vrot.slane %v486, 5
      %v489 = vsel %vm475, %v484, %v488
      %v491 = vshrl.u32 %v438, 16
      %v493 = vrot.slane %v491, 4
      %v494 = vshll.u32 %v438, 16
      %v496 = vrot.slane %v494, 5
      %v497 = vor.u32 %v493, %v496
      %v498 = vrot.slane %v497, 4
      %v500 = vshll.u32 %v472, 16
      %v502 = vrot.slane %v500, 5
      %v503 = vsel %vm475, %v498, %v502
      %s504 = scalar_lea.vmem %s2, 256
      %v505 = vld [vmem:[%s504] sm:$0xff]
      %v506 = vld [vmem:[%s504 + $0x8] sm:$0xff]
      %v507 = vld [vmem:[%s504 + $0x10] sm:$0xff]
      %v508 = vld [vmem:[%s504 + $0x18] sm:$0xff]
      %v509 = vld [vmem:[%s504 + $0x20] sm:$0xff]
      %v510 = vld [vmem:[%s504 + $0x28] sm:$0xff]
      %v511 = vld [vmem:[%s504 + $0x30] sm:$0xff]
      %v512 = vld [vmem:[%s504 + $0x38] sm:$0xff]
      %v513 = vld [vmem:[%s504 + $0x40] sm:$0xff]
      %v514 = vld [vmem:[%s504 + $0x48] sm:$0xff]
      %v515 = vld [vmem:[%s504 + $0x50] sm:$0xff]
      %v516 = vld [vmem:[%s504 + $0x58] sm:$0xff]
      %v517 = vld [vmem:[%s504 + $0x60] sm:$0xff]
      %v518 = vld [vmem:[%s504 + $0x68] sm:$0xff]
      %v519 = vld [vmem:[%s504 + $0x70] sm:$0xff]
      %v520 = vld [vmem:[%s504 + $0x78] sm:$0xff]
      %v521 = vld [vmem:[%s504 + $0x80] sm:$0xff]
      %v522 = vld [vmem:[%s504 + $0x88] sm:$0xff]
      %v523 = vld [vmem:[%s504 + $0x90] sm:$0xff]
      %v524 = vld [vmem:[%s504 + $0x98] sm:$0xff]
      %v525 = vld [vmem:[%s504 + $0xa0] sm:$0xff]
      %v526 = vld [vmem:[%s504 + $0xa8] sm:$0xff]
      %v527 = vld [vmem:[%s504 + $0xb0] sm:$0xff]
      %v528 = vld [vmem:[%s504 + $0xb8] sm:$0xff]
      %v529 = vld [vmem:[%s504 + $0xc0] sm:$0xff]
      %v530 = vld [vmem:[%s504 + $0xc8] sm:$0xff]
      %v531 = vld [vmem:[%s504 + $0xd0] sm:$0xff]
      %v532 = vld [vmem:[%s504 + $0xd8] sm:$0xff]
      %v533 = vld [vmem:[%s504 + $0xe0] sm:$0xff]
      %v534 = vld [vmem:[%s504 + $0xe8] sm:$0xff]
      %v535 = vld [vmem:[%s504 + $0xf0] sm:$0xff]
      %v536 = vld [vmem:[%s504 + $0xf8] sm:$0xff]
      %v537 = vunpack.c.l.b16 %v489
      %v538 = vunpack.c.h.b16 %v489
      %v539 = vunpack.c.l.b16 %v503
      %v540 = vunpack.c.h.b16 %v503
      %v541 = vpack.c.b16 %v539, %v537
      %v542 = vpack.c.b16 %v540, %v538
      %v577 = vunpack.c.l.b16 %v505
      %v578 = vunpack.c.h.b16 %v505
      %v579 = vunpack.c.l.b16 %v506
      %v580 = vunpack.c.h.b16 %v506
      %v581 = vunpack.c.l.b16 %v507
      %v582 = vunpack.c.h.b16 %v507
      %v583 = vunpack.c.l.b16 %v508
      %v584 = vunpack.c.h.b16 %v508
      %v585 = vunpack.c.l.b16 %v509
      %v586 = vunpack.c.h.b16 %v509
      %v587 = vunpack.c.l.b16 %v510
      %v588 = vunpack.c.h.b16 %v510
      %v589 = vunpack.c.l.b16 %v511
      %v590 = vunpack.c.h.b16 %v511
      %v591 = vunpack.c.l.b16 %v512
      %v592 = vunpack.c.h.b16 %v512
      %v593 = vunpack.c.l.b16 %v513
      %v594 = vunpack.c.h.b16 %v513
      %v595 = vunpack.c.l.b16 %v514
      %v596 = vunpack.c.h.b16 %v514
      %v597 = vunpack.c.l.b16 %v515
      %v598 = vunpack.c.h.b16 %v515
      %v599 = vunpack.c.l.b16 %v516
      %v600 = vunpack.c.h.b16 %v516
      %v601 = vunpack.c.l.b16 %v517
      %v602 = vunpack.c.h.b16 %v517
      %v603 = vunpack.c.l.b16 %v518
      %v604 = vunpack.c.h.b16 %v518
      %v605 = vunpack.c.l.b16 %v519
      %v606 = vunpack.c.h.b16 %v519
      %v607 = vunpack.c.l.b16 %v520
      %v608 = vunpack.c.h.b16 %v520
      %v609 = vunpack.c.l.b16 %v521
      %v610 = vunpack.c.h.b16 %v521
      %v611 = vunpack.c.l.b16 %v522
      %v612 = vunpack.c.h.b16 %v522
      %v613 = vunpack.c.l.b16 %v523
      %v614 = vunpack.c.h.b16 %v523
      %v615 = vunpack.c.l.b16 %v524
      %v616 = vunpack.c.h.b16 %v524
      %v617 = vunpack.c.l.b16 %v525
      %v618 = vunpack.c.h.b16 %v525
      %v619 = vunpack.c.l.b16 %v526
      %v620 = vunpack.c.h.b16 %v526
      %v621 = vunpack.c.l.b16 %v527
      %v622 = vunpack.c.h.b16 %v527
      %v623 = vunpack.c.l.b16 %v528
      %v624 = vunpack.c.h.b16 %v528
      %v625 = vunpack.c.l.b16 %v529
      %v626 = vunpack.c.h.b16 %v529
      %v627 = vunpack.c.l.b16 %v530
      %v628 = vunpack.c.h.b16 %v530
      %v629 = vunpack.c.l.b16 %v531
      %v630 = vunpack.c.h.b16 %v531
      %v631 = vunpack.c.l.b16 %v532
      %v632 = vunpack.c.h.b16 %v532
      %v633 = vunpack.c.l.b16 %v533
      %v634 = vunpack.c.h.b16 %v533
      %v635 = vunpack.c.l.b16 %v534
      %v636 = vunpack.c.h.b16 %v534
      %v637 = vunpack.c.l.b16 %v535
      %v638 = vunpack.c.h.b16 %v535
      %v639 = vunpack.c.l.b16 %v536
      %v640 = vunpack.c.h.b16 %v536
      %v641 = vpack.c.b16 %v579, %v577
      %v642 = vpack.c.b16 %v580, %v578
      %v643 = vpack.c.b16 %v583, %v581
      %v644 = vpack.c.b16 %v584, %v582
      %v645 = vpack.c.b16 %v587, %v585
      %v646 = vpack.c.b16 %v588, %v586
      %v647 = vpack.c.b16 %v591, %v589
      %v648 = vpack.c.b16 %v592, %v590
      %v649 = vpack.c.b16 %v595, %v593
      %v650 = vpack.c.b16 %v596, %v594
      %v651 = vpack.c.b16 %v599, %v597
      %v652 = vpack.c.b16 %v600, %v598
      %v653 = vpack.c.b16 %v603, %v601
      %v654 = vpack.c.b16 %v604, %v602
      %v655 = vpack.c.b16 %v607, %v605
      %v656 = vpack.c.b16 %v608, %v606
      %v657 = vpack.c.b16 %v611, %v609
      %v658 = vpack.c.b16 %v612, %v610
      %v659 = vpack.c.b16 %v615, %v613
      %v660 = vpack.c.b16 %v616, %v614
      %v661 = vpack.c.b16 %v619, %v617
      %v662 = vpack.c.b16 %v620, %v618
      %v663 = vpack.c.b16 %v623, %v621
      %v664 = vpack.c.b16 %v624, %v622
      %v665 = vpack.c.b16 %v627, %v625
      %v666 = vpack.c.b16 %v628, %v626
      %v667 = vpack.c.b16 %v631, %v629
      %v668 = vpack.c.b16 %v632, %v630
      %v669 = vpack.c.b16 %v635, %v633
      %v670 = vpack.c.b16 %v636, %v634
      %v671 = vpack.c.b16 %v639, %v637
      %v672 = vpack.c.b16 %v640, %v638
      %705 = vmatprep.subr.bf16.mxu0 %v656
      %706 = vmatpush1.bf16.msra.mxu0 %v655
      %707 = vmatprep.subr.bf16.mxu0 %v654
      %708 = vmatpush1.bf16.msra.mxu0 %v653
      %709 = vmatprep.subr.bf16.mxu0 %v652
      %710 = vmatpush1.bf16.msra.mxu0 %v651
      %711 = vmatprep.subr.bf16.mxu0 %v650
      %712 = vmatpush1.bf16.msra.mxu0 %v649
      %713 = vmatprep.subr.bf16.mxu0 %v648
      %714 = vmatpush1.bf16.msra.mxu0 %v647
      %715 = vmatprep.subr.bf16.mxu0 %v646
      %716 = vmatpush1.bf16.msra.mxu0 %v645
      %717 = vmatprep.subr.bf16.mxu0 %v644
      %718 = vmatpush1.bf16.msra.mxu0 %v643
      %719 = vmatprep.subr.bf16.mxu0 %v642
      %720 = vmatpush1.bf16.msra.mxu0 %v641
      %721 = vmatprep.subr.bf16.mxu0 %v672
      %722 = vmatpush2.bf16.msra.mxu0 %v671
      %723 = vmatprep.subr.bf16.mxu0 %v670
      %724 = vmatpush2.bf16.msra.mxu0 %v669
      %725 = vmatprep.subr.bf16.mxu0 %v668
      %726 = vmatpush2.bf16.msra.mxu0 %v667
      %727 = vmatprep.subr.bf16.mxu0 %v666
      %728 = vmatpush2.bf16.msra.mxu0 %v665
      %729 = vmatprep.subr.bf16.mxu0 %v664
      %730 = vmatpush2.bf16.msra.mxu0 %v663
      %731 = vmatprep.subr.bf16.mxu0 %v662
      %732 = vmatpush2.bf16.msra.mxu0 %v661
      %733 = vmatprep.subr.bf16.mxu0 %v660
      %734 = vmatpush2.bf16.msra.mxu0 %v659
      %735 = vmatprep.subr.bf16.mxu0 %v658
      %736 = vmatpush2.bf16.msra.mxu0 %v657
      %737 = vmatprep.mubr.bf16.mxu0 %v542
      %738 = vmatmul.mubr.bf16.gmra.mxu0 %v541
      %v739 = vpop.f32.mrf.mxu0
      %v740 = vadd.f32 0.0, %v739
      %v741 = vpop.f32.mrf.mxu0
      %v742 = vadd.f32 0.0, %v741
      %v743 = vpop.f32.mrf.mxu0
      %v744 = vadd.f32 0.0, %v743
      %v745 = vpop.f32.mrf.mxu0
      %v746 = vadd.f32 0.0, %v745
      %747 = vdwg.mxu0
      %v750 = vunpack.c.l.b16 %v437
      %v751 = vunpack.c.h.b16 %v437
      %v752 = vunpack.c.l.b16 %v438
      %v753 = vunpack.c.h.b16 %v438
      %v754 = vpack.c.b16 %v752, %v750
      %v755 = vpack.c.b16 %v753, %v751
      %v790 = vunpack.c.l.b16 %v439
      %v791 = vunpack.c.h.b16 %v439
      %v792 = vunpack.c.l.b16 %v440
      %v793 = vunpack.c.h.b16 %v440
      %v794 = vunpack.c.l.b16 %v441
      %v795 = vunpack.c.h.b16 %v441
      %v796 = vunpack.c.l.b16 %v442
      %v797 = vunpack.c.h.b16 %v442
      %v798 = vunpack.c.l.b16 %v443
      %v799 = vunpack.c.h.b16 %v443
      %v800 = vunpack.c.l.b16 %v444
      %v801 = vunpack.c.h.b16 %v444
      %v802 = vunpack.c.l.b16 %v445
      %v803 = vunpack.c.h.b16 %v445
      %v804 = vunpack.c.l.b16 %v446
      %v805 = vunpack.c.h.b16 %v446
      %v806 = vunpack.c.l.b16 %v447
      %v807 = vunpack.c.h.b16 %v447
      %v808 = vunpack.c.l.b16 %v448
      %v809 = vunpack.c.h.b16 %v448
      %v810 = vunpack.c.l.b16 %v449
      %v811 = vunpack.c.h.b16 %v449
      %v812 = vunpack.c.l.b16 %v450
      %v813 = vunpack.c.h.b16 %v450
      %v814 = vunpack.c.l.b16 %v451
      %v815 = vunpack.c.h.b16 %v451
      %v816 = vunpack.c.l.b16 %v452
      %v817 = vunpack.c.h.b16 %v452
      %v818 = vunpack.c.l.b16 %v453
      %v819 = vunpack.c.h.b16 %v453
      %v820 = vunpack.c.l.b16 %v454
      %v821 = vunpack.c.h.b16 %v454
      %v822 = vunpack.c.l.b16 %v455
      %v823 = vunpack.c.h.b16 %v455
      %v824 = vunpack.c.l.b16 %v456
      %v825 = vunpack.c.h.b16 %v456
      %v826 = vunpack.c.l.b16 %v457
      %v827 = vunpack.c.h.b16 %v457
      %v828 = vunpack.c.l.b16 %v458
      %v829 = vunpack.c.h.b16 %v458
      %v830 = vunpack.c.l.b16 %v459
      %v831 = vunpack.c.h.b16 %v459
      %v832 = vunpack.c.l.b16 %v460
      %v833 = vunpack.c.h.b16 %v460
      %v834 = vunpack.c.l.b16 %v461
      %v835 = vunpack.c.h.b16 %v461
      %v836 = vunpack.c.l.b16 %v462
      %v837 = vunpack.c.h.b16 %v462
      %v838 = vunpack.c.l.b16 %v463
      %v839 = vunpack.c.h.b16 %v463
      %v840 = vunpack.c.l.b16 %v464
      %v841 = vunpack.c.h.b16 %v464
      %v842 = vunpack.c.l.b16 %v465
      %v843 = vunpack.c.h.b16 %v465
      %v844 = vunpack.c.l.b16 %v466
      %v845 = vunpack.c.h.b16 %v466
      %v846 = vunpack.c.l.b16 %v467
      %v847 = vunpack.c.h.b16 %v467
      %v848 = vunpack.c.l.b16 %v468
      %v849 = vunpack.c.h.b16 %v468
      %v850 = vunpack.c.l.b16 %v469
      %v851 = vunpack.c.h.b16 %v469
      %v852 = vunpack.c.l.b16 %v470
      %v853 = vunpack.c.h.b16 %v470
      %v854 = vpack.c.b16 %v792, %v790
      %v855 = vpack.c.b16 %v793, %v791
      %v856 = vpack.c.b16 %v796, %v794
      %v857 = vpack.c.b16 %v797, %v795
      %v858 = vpack.c.b16 %v800, %v798
      %v859 = vpack.c.b16 %v801, %v799
      %v860 = vpack.c.b16 %v804, %v802
      %v861 = vpack.c.b16 %v805, %v803
      %v862 = vpack.c.b16 %v808, %v806
      %v863 = vpack.c.b16 %v809, %v807
      %v864 = vpack.c.b16 %v812, %v810
      %v865 = vpack.c.b16 %v813, %v811
      %v866 = vpack.c.b16 %v816, %v814
      %v867 = vpack.c.b16 %v817, %v815
      %v868 = vpack.c.b16 %v820, %v818
      %v869 = vpack.c.b16 %v821, %v819
      %v870 = vpack.c.b16 %v824, %v822
      %v871 = vpack.c.b16 %v825, %v823
      %v872 = vpack.c.b16 %v828, %v826
      %v873 = vpack.c.b16 %v829, %v827
      %v874 = vpack.c.b16 %v832, %v830
      %v875 = vpack.c.b16 %v833, %v831
      %v876 = vpack.c.b16 %v836, %v834
      %v877 = vpack.c.b16 %v837, %v835
      %v878 = vpack.c.b16 %v840, %v838
      %v879 = vpack.c.b16 %v841, %v839
      %v880 = vpack.c.b16 %v844, %v842
      %v881 = vpack.c.b16 %v845, %v843
      %v882 = vpack.c.b16 %v848, %v846
      %v883 = vpack.c.b16 %v849, %v847
      %v884 = vpack.c.b16 %v852, %v850
      %v885 = vpack.c.b16 %v853, %v851
      %918 = vmatprep.subr.bf16.mxu0 %v869
      %919 = vmatpush1.bf16.msra.mxu0 %v868
      %920 = vmatprep.subr.bf16.mxu0 %v867
      %921 = vmatpush1.bf16.msra.mxu0 %v866
      %922 = vmatprep.subr.bf16.mxu0 %v865
      %923 = vmatpush1.bf16.msra.mxu0 %v864
      %924 = vmatprep.subr.bf16.mxu0 %v863
      %925 = vmatpush1.bf16.msra.mxu0 %v862
      %926 = vmatprep.subr.bf16.mxu0 %v861
      %927 = vmatpush1.bf16.msra.mxu0 %v860
      %928 = vmatprep.subr.bf16.mxu0 %v859
      %929 = vmatpush1.bf16.msra.mxu0 %v858
      %930 = vmatprep.subr.bf16.mxu0 %v857
      %931 = vmatpush1.bf16.msra.mxu0 %v856
      %932 = vmatprep.subr.bf16.mxu0 %v855
      %933 = vmatpush1.bf16.msra.mxu0 %v854
      %934 = vmatprep.subr.bf16.mxu0 %v885
      %935 = vmatpush2.bf16.msra.mxu0 %v884
      %936 = vmatprep.subr.bf16.mxu0 %v883
      %937 = vmatpush2.bf16.msra.mxu0 %v882
      %938 = vmatprep.subr.bf16.mxu0 %v881
      %939 = vmatpush2.bf16.msra.mxu0 %v880
      %940 = vmatprep.subr.bf16.mxu0 %v879
      %941 = vmatpush2.bf16.msra.mxu0 %v878
      %942 = vmatprep.subr.bf16.mxu0 %v877
      %943 = vmatpush2.bf16.msra.mxu0 %v876
      %944 = vmatprep.subr.bf16.mxu0 %v875
      %945 = vmatpush2.bf16.msra.mxu0 %v874
      %946 = vmatprep.subr.bf16.mxu0 %v873
      %947 = vmatpush2.bf16.msra.mxu0 %v872
      %948 = vmatprep.subr.bf16.mxu0 %v871
      %949 = vmatpush2.bf16.msra.mxu0 %v870
      %950 = vmatprep.mubr.bf16.mxu0 %v755
      %951 = vmatmul.mubr.bf16.gmra.mxu0 %v754
      %v952 = vpop.f32.mrf.mxu0
      %v953 = vadd.f32 %v740, %v952
      %v954 = vpop.f32.mrf.mxu0
      %v955 = vadd.f32 %v742, %v954
      %v956 = vpop.f32.mrf.mxu0
      %v957 = vadd.f32 %v744, %v956
      %v958 = vpop.f32.mrf.mxu0
      %v959 = vadd.f32 %v746, %v958
      %960 = vdwg.mxu0
      %v961 = vld [vmem:[%s383 + $0x8] sm:$0xff]
      %v962 = vld [vmem:[%s383 + $0x10] sm:$0x11]
      %v963 = vld [vmem:[%s383 + $0x20] sm:$0xff]
      %v964 = vld [vmem:[%s383 + $0x28] sm:$0x11]
      %v966 = vshrl.u32 %v961, 16
      %v968 = vrot.slane %v966, 4
      %v969 = vshll.u32 %v961, 16
      %v971 = vrot.slane %v969, 5
      %v972 = vor.u32 %v968, %v971
      %v973 = vrot.slane %v972, 4
      %v975 = vshll.u32 %v962, 16
      %v977 = vrot.slane %v975, 5
      %v978 = vsel %vm475, %v973, %v977
      %v980 = vshrl.u32 %v963, 16
      %v982 = vrot.slane %v980, 4
      %v983 = vshll.u32 %v963, 16
      %v985 = vrot.slane %v983, 5
      %v986 = vor.u32 %v982, %v985
      %v987 = vrot.slane %v986, 4
      %v989 = vshll.u32 %v964, 16
      %v991 = vrot.slane %v989, 5
      %v992 = vsel %vm475, %v987, %v991
      %s993 = scalar_lea.vmem %s2, 512
      %v994 = vld [vmem:[%s993] sm:$0xff]
      %v995 = vld [vmem:[%s993 + $0x8] sm:$0xff]
      %v996 = vld [vmem:[%s993 + $0x10] sm:$0xff]
      %v997 = vld [vmem:[%s993 + $0x18] sm:$0xff]
      %v998 = vld [vmem:[%s993 + $0x20] sm:$0xff]
      %v999 = vld [vmem:[%s993 + $0x28] sm:$0xff]
      %v1000 = vld [vmem:[%s993 + $0x30] sm:$0xff]
      %v1001 = vld [vmem:[%s993 + $0x38] sm:$0xff]
      %v1002 = vld [vmem:[%s993 + $0x40] sm:$0xff]
      %v1003 = vld [vmem:[%s993 + $0x48] sm:$0xff]
      %v1004 = vld [vmem:[%s993 + $0x50] sm:$0xff]
      %v1005 = vld [vmem:[%s993 + $0x58] sm:$0xff]
      %v1006 = vld [vmem:[%s993 + $0x60] sm:$0xff]
      %v1007 = vld [vmem:[%s993 + $0x68] sm:$0xff]
      %v1008 = vld [vmem:[%s993 + $0x70] sm:$0xff]
      %v1009 = vld [vmem:[%s993 + $0x78] sm:$0xff]
      %v1010 = vld [vmem:[%s993 + $0x80] sm:$0xff]
      %v1011 = vld [vmem:[%s993 + $0x88] sm:$0xff]
      %v1012 = vld [vmem:[%s993 + $0x90] sm:$0xff]
      %v1013 = vld [vmem:[%s993 + $0x98] sm:$0xff]
      %v1014 = vld [vmem:[%s993 + $0xa0] sm:$0xff]
      %v1015 = vld [vmem:[%s993 + $0xa8] sm:$0xff]
      %v1016 = vld [vmem:[%s993 + $0xb0] sm:$0xff]
      %v1017 = vld [vmem:[%s993 + $0xb8] sm:$0xff]
      %v1018 = vld [vmem:[%s993 + $0xc0] sm:$0xff]
      %v1019 = vld [vmem:[%s993 + $0xc8] sm:$0xff]
      %v1020 = vld [vmem:[%s993 + $0xd0] sm:$0xff]
      %v1021 = vld [vmem:[%s993 + $0xd8] sm:$0xff]
      %v1022 = vld [vmem:[%s993 + $0xe0] sm:$0xff]
      %v1023 = vld [vmem:[%s993 + $0xe8] sm:$0xff]
      %v1024 = vld [vmem:[%s993 + $0xf0] sm:$0xff]
      %v1025 = vld [vmem:[%s993 + $0xf8] sm:$0xff]
      %v1026 = vunpack.c.l.b16 %v978
      %v1027 = vunpack.c.h.b16 %v978
      %v1028 = vunpack.c.l.b16 %v992
      %v1029 = vunpack.c.h.b16 %v992
      %v1030 = vpack.c.b16 %v1028, %v1026
      %v1031 = vpack.c.b16 %v1029, %v1027
      %v1066 = vunpack.c.l.b16 %v994
      %v1067 = vunpack.c.h.b16 %v994
      %v1068 = vunpack.c.l.b16 %v995
      %v1069 = vunpack.c.h.b16 %v995
      %v1070 = vunpack.c.l.b16 %v996
      %v1071 = vunpack.c.h.b16 %v996
      %v1072 = vunpack.c.l.b16 %v997
      %v1073 = vunpack.c.h.b16 %v997
      %v1074 = vunpack.c.l.b16 %v998
      %v1075 = vunpack.c.h.b16 %v998
      %v1076 = vunpack.c.l.b16 %v999
      %v1077 = vunpack.c.h.b16 %v999
      %v1078 = vunpack.c.l.b16 %v1000
      %v1079 = vunpack.c.h.b16 %v1000
      %v1080 = vunpack.c.l.b16 %v1001
      %v1081 = vunpack.c.h.b16 %v1001
      %v1082 = vunpack.c.l.b16 %v1002
      %v1083 = vunpack.c.h.b16 %v1002
      %v1084 = vunpack.c.l.b16 %v1003
      %v1085 = vunpack.c.h.b16 %v1003
      %v1086 = vunpack.c.l.b16 %v1004
      %v1087 = vunpack.c.h.b16 %v1004
      %v1088 = vunpack.c.l.b16 %v1005
      %v1089 = vunpack.c.h.b16 %v1005
      %v1090 = vunpack.c.l.b16 %v1006
      %v1091 = vunpack.c.h.b16 %v1006
      %v1092 = vunpack.c.l.b16 %v1007
      %v1093 = vunpack.c.h.b16 %v1007
      %v1094 = vunpack.c.l.b16 %v1008
      %v1095 = vunpack.c.h.b16 %v1008
      %v1096 = vunpack.c.l.b16 %v1009
      %v1097 = vunpack.c.h.b16 %v1009
      %v1098 = vunpack.c.l.b16 %v1010
      %v1099 = vunpack.c.h.b16 %v1010
      %v1100 = vunpack.c.l.b16 %v1011
      %v1101 = vunpack.c.h.b16 %v1011
      %v1102 = vunpack.c.l.b16 %v1012
      %v1103 = vunpack.c.h.b16 %v1012
      %v1104 = vunpack.c.l.b16 %v1013
      %v1105 = vunpack.c.h.b16 %v1013
      %v1106 = vunpack.c.l.b16 %v1014
      %v1107 = vunpack.c.h.b16 %v1014
      %v1108 = vunpack.c.l.b16 %v1015
      %v1109 = vunpack.c.h.b16 %v1015
      %v1110 = vunpack.c.l.b16 %v1016
      %v1111 = vunpack.c.h.b16 %v1016
      %v1112 = vunpack.c.l.b16 %v1017
      %v1113 = vunpack.c.h.b16 %v1017
      %v1114 = vunpack.c.l.b16 %v1018
      %v1115 = vunpack.c.h.b16 %v1018
      %v1116 = vunpack.c.l.b16 %v1019
      %v1117 = vunpack.c.h.b16 %v1019
      %v1118 = vunpack.c.l.b16 %v1020
      %v1119 = vunpack.c.h.b16 %v1020
      %v1120 = vunpack.c.l.b16 %v1021
      %v1121 = vunpack.c.h.b16 %v1021
      %v1122 = vunpack.c.l.b16 %v1022
      %v1123 = vunpack.c.h.b16 %v1022
      %v1124 = vunpack.c.l.b16 %v1023
      %v1125 = vunpack.c.h.b16 %v1023
      %v1126 = vunpack.c.l.b16 %v1024
      %v1127 = vunpack.c.h.b16 %v1024
      %v1128 = vunpack.c.l.b16 %v1025
      %v1129 = vunpack.c.h.b16 %v1025
      %v1130 = vpack.c.b16 %v1068, %v1066
      %v1131 = vpack.c.b16 %v1069, %v1067
      %v1132 = vpack.c.b16 %v1072, %v1070
      %v1133 = vpack.c.b16 %v1073, %v1071
      %v1134 = vpack.c.b16 %v1076, %v1074
      %v1135 = vpack.c.b16 %v1077, %v1075
      %v1136 = vpack.c.b16 %v1080, %v1078
      %v1137 = vpack.c.b16 %v1081, %v1079
      %v1138 = vpack.c.b16 %v1084, %v1082
      %v1139 = vpack.c.b16 %v1085, %v1083
      %v1140 = vpack.c.b16 %v1088, %v1086
      %v1141 = vpack.c.b16 %v1089, %v1087
      %v1142 = vpack.c.b16 %v1092, %v1090
      %v1143 = vpack.c.b16 %v1093, %v1091
      %v1144 = vpack.c.b16 %v1096, %v1094
      %v1145 = vpack.c.b16 %v1097, %v1095
      %v1146 = vpack.c.b16 %v1100, %v1098
      %v1147 = vpack.c.b16 %v1101, %v1099
      %v1148 = vpack.c.b16 %v1104, %v1102
      %v1149 = vpack.c.b16 %v1105, %v1103
      %v1150 = vpack.c.b16 %v1108, %v1106
      %v1151 = vpack.c.b16 %v1109, %v1107
      %v1152 = vpack.c.b16 %v1112, %v1110
      %v1153 = vpack.c.b16 %v1113, %v1111
      %v1154 = vpack.c.b16 %v1116, %v1114
      %v1155 = vpack.c.b16 %v1117, %v1115
      %v1156 = vpack.c.b16 %v1120, %v1118
      %v1157 = vpack.c.b16 %v1121, %v1119
      %v1158 = vpack.c.b16 %v1124, %v1122
      %v1159 = vpack.c.b16 %v1125, %v1123
      %v1160 = vpack.c.b16 %v1128, %v1126
      %v1161 = vpack.c.b16 %v1129, %v1127
      %1194 = vmatprep.subr.bf16.mxu0 %v1145
      %1195 = vmatpush1.bf16.msra.mxu0 %v1144
      %1196 = vmatprep.subr.bf16.mxu0 %v1143
      %1197 = vmatpush1.bf16.msra.mxu0 %v1142
      %1198 = vmatprep.subr.bf16.mxu0 %v1141
      %1199 = vmatpush1.bf16.msra.mxu0 %v1140
      %1200 = vmatprep.subr.bf16.mxu0 %v1139
      %1201 = vmatpush1.bf16.msra.mxu0 %v1138
      %1202 = vmatprep.subr.bf16.mxu0 %v1137
      %1203 = vmatpush1.bf16.msra.mxu0 %v1136
      %1204 = vmatprep.subr.bf16.mxu0 %v1135
      %1205 = vmatpush1.bf16.msra.mxu0 %v1134
      %1206 = vmatprep.subr.bf16.mxu0 %v1133
      %1207 = vmatpush1.bf16.msra.mxu0 %v1132
      %1208 = vmatprep.subr.bf16.mxu0 %v1131
      %1209 = vmatpush1.bf16.msra.mxu0 %v1130
      %1210 = vmatprep.subr.bf16.mxu0 %v1161
      %1211 = vmatpush2.bf16.msra.mxu0 %v1160
      %1212 = vmatprep.subr.bf16.mxu0 %v1159
      %1213 = vmatpush2.bf16.msra.mxu0 %v1158
      %1214 = vmatprep.subr.bf16.mxu0 %v1157
      %1215 = vmatpush2.bf16.msra.mxu0 %v1156
      %1216 = vmatprep.subr.bf16.mxu0 %v1155
      %1217 = vmatpush2.bf16.msra.mxu0 %v1154
      %1218 = vmatprep.subr.bf16.mxu0 %v1153
      %1219 = vmatpush2.bf16.msra.mxu0 %v1152
      %1220 = vmatprep.subr.bf16.mxu0 %v1151
      %1221 = vmatpush2.bf16.msra.mxu0 %v1150
      %1222 = vmatprep.subr.bf16.mxu0 %v1149
      %1223 = vmatpush2.bf16.msra.mxu0 %v1148
      %1224 = vmatprep.subr.bf16.mxu0 %v1147
      %1225 = vmatpush2.bf16.msra.mxu0 %v1146
      %1226 = vmatprep.mubr.bf16.mxu0 %v1031
      %1227 = vmatmul.mubr.bf16.gmra.mxu0 %v1030
      %v1228 = vpop.f32.mrf.mxu0
      %v1229 = vadd.f32 0.0, %v1228
      %v1230 = vpop.f32.mrf.mxu0
      %v1231 = vadd.f32 0.0, %v1230
      %v1232 = vpop.f32.mrf.mxu0
      %v1233 = vadd.f32 0.0, %v1232
      %v1234 = vpop.f32.mrf.mxu0
      %v1235 = vadd.f32 0.0, %v1234
      %1236 = vdwg.mxu0
      %v1237 = vadd.f32 %v953, %v1229
      %v1238 = vadd.f32 %v955, %v1231
      %v1239 = vadd.f32 %v957, %v1233
      %v1240 = vadd.f32 %v959, %v1235
      %v1241 = vld [vmem:[%s383 + $0x8] sm:$0xee]
      %v1242 = vld [vmem:[%s383 + $0x20] sm:$0xee]
      %vm1247 = vcmask 1042432
      %vm1248 = vcmask 1046532
      %vm1249 = vmor %vm1247, %vm1248
      %v1250 = vrot.slane %v1241, 5
      %v1251 = vrot.slane %v1250, 4
      %v1252 = vrot.slane %v962, 5
      %v1253 = vsel %vm1249, %v1251, %v1252
      %v1254 = vrot.slane %v1242, 5
      %v1255 = vrot.slane %v1254, 4
      %v1256 = vrot.slane %v964, 5
      %v1257 = vsel %vm1249, %v1255, %v1256
      %s1258 = scalar_lea.vmem %s2, 768
      %v1259 = vld [vmem:[%s1258] sm:$0xff]
      %v1260 = vld [vmem:[%s1258 + $0x8] sm:$0xff]
      %v1261 = vld [vmem:[%s1258 + $0x10] sm:$0xff]
      %v1262 = vld [vmem:[%s1258 + $0x18] sm:$0xff]
      %v1263 = vld [vmem:[%s1258 + $0x20] sm:$0xff]
      %v1264 = vld [vmem:[%s1258 + $0x28] sm:$0xff]
      %v1265 = vld [vmem:[%s1258 + $0x30] sm:$0xff]
      %v1266 = vld [vmem:[%s1258 + $0x38] sm:$0xff]
      %v1267 = vld [vmem:[%s1258 + $0x40] sm:$0xff]
      %v1268 = vld [vmem:[%s1258 + $0x48] sm:$0xff]
      %v1269 = vld [vmem:[%s1258 + $0x50] sm:$0xff]
      %v1270 = vld [vmem:[%s1258 + $0x58] sm:$0xff]
      %v1271 = vld [vmem:[%s1258 + $0x60] sm:$0xff]
      %v1272 = vld [vmem:[%s1258 + $0x68] sm:$0xff]
      %v1273 = vld [vmem:[%s1258 + $0x70] sm:$0xff]
      %v1274 = vld [vmem:[%s1258 + $0x78] sm:$0xff]
      %v1275 = vld [vmem:[%s1258 + $0x80] sm:$0xff]
      %v1276 = vld [vmem:[%s1258 + $0x88] sm:$0xff]
      %v1277 = vld [vmem:[%s1258 + $0x90] sm:$0xff]
      %v1278 = vld [vmem:[%s1258 + $0x98] sm:$0xff]
      %v1279 = vld [vmem:[%s1258 + $0xa0] sm:$0xff]
      %v1280 = vld [vmem:[%s1258 + $0xa8] sm:$0xff]
      %v1281 = vld [vmem:[%s1258 + $0xb0] sm:$0xff]
      %v1282 = vld [vmem:[%s1258 + $0xb8] sm:$0xff]
      %v1283 = vld [vmem:[%s1258 + $0xc0] sm:$0xff]
      %v1284 = vld [vmem:[%s1258 + $0xc8] sm:$0xff]
      %v1285 = vld [vmem:[%s1258 + $0xd0] sm:$0xff]
      %v1286 = vld [vmem:[%s1258 + $0xd8] sm:$0xff]
      %v1287 = vld [vmem:[%s1258 + $0xe0] sm:$0xff]
      %v1288 = vld [vmem:[%s1258 + $0xe8] sm:$0xff]
      %v1289 = vld [vmem:[%s1258 + $0xf0] sm:$0xff]
      %v1290 = vld [vmem:[%s1258 + $0xf8] sm:$0xff]
      %v1291 = vunpack.c.l.b16 %v1253
      %v1292 = vunpack.c.h.b16 %v1253
      %v1293 = vunpack.c.l.b16 %v1257
      %v1294 = vunpack.c.h.b16 %v1257
      %v1295 = vpack.c.b16 %v1293, %v1291
      %v1296 = vpack.c.b16 %v1294, %v1292
      %v1331 = vunpack.c.l.b16 %v1259
      %v1332 = vunpack.c.h.b16 %v1259
      %v1333 = vunpack.c.l.b16 %v1260
      %v1334 = vunpack.c.h.b16 %v1260
      %v1335 = vunpack.c.l.b16 %v1261
      %v1336 = vunpack.c.h.b16 %v1261
      %v1337 = vunpack.c.l.b16 %v1262
      %v1338 = vunpack.c.h.b16 %v1262
      %v1339 = vunpack.c.l.b16 %v1263
      %v1340 = vunpack.c.h.b16 %v1263
      %v1341 = vunpack.c.l.b16 %v1264
      %v1342 = vunpack.c.h.b16 %v1264
      %v1343 = vunpack.c.l.b16 %v1265
      %v1344 = vunpack.c.h.b16 %v1265
      %v1345 = vunpack.c.l.b16 %v1266
      %v1346 = vunpack.c.h.b16 %v1266
      %v1347 = vunpack.c.l.b16 %v1267
      %v1348 = vunpack.c.h.b16 %v1267
      %v1349 = vunpack.c.l.b16 %v1268
      %v1350 = vunpack.c.h.b16 %v1268
      %v1351 = vunpack.c.l.b16 %v1269
      %v1352 = vunpack.c.h.b16 %v1269
      %v1353 = vunpack.c.l.b16 %v1270
      %v1354 = vunpack.c.h.b16 %v1270
      %v1355 = vunpack.c.l.b16 %v1271
      %v1356 = vunpack.c.h.b16 %v1271
      %v1357 = vunpack.c.l.b16 %v1272
      %v1358 = vunpack.c.h.b16 %v1272
      %v1359 = vunpack.c.l.b16 %v1273
      %v1360 = vunpack.c.h.b16 %v1273
      %v1361 = vunpack.c.l.b16 %v1274
      %v1362 = vunpack.c.h.b16 %v1274
      %v1363 = vunpack.c.l.b16 %v1275
      %v1364 = vunpack.c.h.b16 %v1275
      %v1365 = vunpack.c.l.b16 %v1276
      %v1366 = vunpack.c.h.b16 %v1276
      %v1367 = vunpack.c.l.b16 %v1277
      %v1368 = vunpack.c.h.b16 %v1277
      %v1369 = vunpack.c.l.b16 %v1278
      %v1370 = vunpack.c.h.b16 %v1278
      %v1371 = vunpack.c.l.b16 %v1279
      %v1372 = vunpack.c.h.b16 %v1279
      %v1373 = vunpack.c.l.b16 %v1280
      %v1374 = vunpack.c.h.b16 %v1280
      %v1375 = vunpack.c.l.b16 %v1281
      %v1376 = vunpack.c.h.b16 %v1281
      %v1377 = vunpack.c.l.b16 %v1282
      %v1378 = vunpack.c.h.b16 %v1282
      %v1379 = vunpack.c.l.b16 %v1283
      %v1380 = vunpack.c.h.b16 %v1283
      %v1381 = vunpack.c.l.b16 %v1284
      %v1382 = vunpack.c.h.b16 %v1284
      %v1383 = vunpack.c.l.b16 %v1285
      %v1384 = vunpack.c.h.b16 %v1285
      %v1385 = vunpack.c.l.b16 %v1286
      %v1386 = vunpack.c.h.b16 %v1286
      %v1387 = vunpack.c.l.b16 %v1287
      %v1388 = vunpack.c.h.b16 %v1287
      %v1389 = vunpack.c.l.b16 %v1288
      %v1390 = vunpack.c.h.b16 %v1288
      %v1391 = vunpack.c.l.b16 %v1289
      %v1392 = vunpack.c.h.b16 %v1289
      %v1393 = vunpack.c.l.b16 %v1290
      %v1394 = vunpack.c.h.b16 %v1290
      %v1395 = vpack.c.b16 %v1333, %v1331
      %v1396 = vpack.c.b16 %v1334, %v1332
      %v1397 = vpack.c.b16 %v1337, %v1335
      %v1398 = vpack.c.b16 %v1338, %v1336
      %v1399 = vpack.c.b16 %v1341, %v1339
      %v1400 = vpack.c.b16 %v1342, %v1340
      %v1401 = vpack.c.b16 %v1345, %v1343
      %v1402 = vpack.c.b16 %v1346, %v1344
      %v1403 = vpack.c.b16 %v1349, %v1347
      %v1404 = vpack.c.b16 %v1350, %v1348
      %v1405 = vpack.c.b16 %v1353, %v1351
      %v1406 = vpack.c.b16 %v1354, %v1352
      %v1407 = vpack.c.b16 %v1357, %v1355
      %v1408 = vpack.c.b16 %v1358, %v1356
      %v1409 = vpack.c.b16 %v1361, %v1359
      %v1410 = vpack.c.b16 %v1362, %v1360
      %v1411 = vpack.c.b16 %v1365, %v1363
      %v1412 = vpack.c.b16 %v1366, %v1364
      %v1413 = vpack.c.b16 %v1369, %v1367
      %v1414 = vpack.c.b16 %v1370, %v1368
      %v1415 = vpack.c.b16 %v1373, %v1371
      %v1416 = vpack.c.b16 %v1374, %v1372
      %v1417 = vpack.c.b16 %v1377, %v1375
      %v1418 = vpack.c.b16 %v1378, %v1376
      %v1419 = vpack.c.b16 %v1381, %v1379
      %v1420 = vpack.c.b16 %v1382, %v1380
      %v1421 = vpack.c.b16 %v1385, %v1383
      %v1422 = vpack.c.b16 %v1386, %v1384
      %v1423 = vpack.c.b16 %v1389, %v1387
      %v1424 = vpack.c.b16 %v1390, %v1388
      %v1425 = vpack.c.b16 %v1393, %v1391
      %v1426 = vpack.c.b16 %v1394, %v1392
      %1459 = vmatprep.subr.bf16.mxu0 %v1410
      %1460 = vmatpush1.bf16.msra.mxu0 %v1409
      %1461 = vmatprep.subr.bf16.mxu0 %v1408
      %1462 = vmatpush1.bf16.msra.mxu0 %v1407
      %1463 = vmatprep.subr.bf16.mxu0 %v1406
      %1464 = vmatpush1.bf16.msra.mxu0 %v1405
      %1465 = vmatprep.subr.bf16.mxu0 %v1404
      %1466 = vmatpush1.bf16.msra.mxu0 %v1403
      %1467 = vmatprep.subr.bf16.mxu0 %v1402
      %1468 = vmatpush1.bf16.msra.mxu0 %v1401
      %1469 = vmatprep.subr.bf16.mxu0 %v1400
      %1470 = vmatpush1.bf16.msra.mxu0 %v1399
      %1471 = vmatprep.subr.bf16.mxu0 %v1398
      %1472 = vmatpush1.bf16.msra.mxu0 %v1397
      %1473 = vmatprep.subr.bf16.mxu0 %v1396
      %1474 = vmatpush1.bf16.msra.mxu0 %v1395
      %1475 = vmatprep.subr.bf16.mxu0 %v1426
      %1476 = vmatpush2.bf16.msra.mxu0 %v1425
      %1477 = vmatprep.subr.bf16.mxu0 %v1424
      %1478 = vmatpush2.bf16.msra.mxu0 %v1423
      %1479 = vmatprep.subr.bf16.mxu0 %v1422
      %1480 = vmatpush2.bf16.msra.mxu0 %v1421
      %1481 = vmatprep.subr.bf16.mxu0 %v1420
      %1482 = vmatpush2.bf16.msra.mxu0 %v1419
      %1483 = vmatprep.subr.bf16.mxu0 %v1418
      %1484 = vmatpush2.bf16.msra.mxu0 %v1417
      %1485 = vmatprep.subr.bf16.mxu0 %v1416
      %1486 = vmatpush2.bf16.msra.mxu0 %v1415
      %1487 = vmatprep.subr.bf16.mxu0 %v1414
      %1488 = vmatpush2.bf16.msra.mxu0 %v1413
      %1489 = vmatprep.subr.bf16.mxu0 %v1412
      %1490 = vmatpush2.bf16.msra.mxu0 %v1411
      %1491 = vmatprep.mubr.bf16.mxu0 %v1296
      %1492 = vmatmul.mubr.bf16.gmra.mxu0 %v1295
      %v1493 = vpop.f32.mrf.mxu0
      %v1494 = vadd.f32 0.0, %v1493
      %v1495 = vpop.f32.mrf.mxu0
      %v1496 = vadd.f32 0.0, %v1495
      %v1497 = vpop.f32.mrf.mxu0
      %v1498 = vadd.f32 0.0, %v1497
      %v1499 = vpop.f32.mrf.mxu0
      %v1500 = vadd.f32 0.0, %v1499
      %1501 = vdwg.mxu0
      %v1502 = vadd.f32 %v1237, %v1494
      %v1503 = vadd.f32 %v1238, %v1496
      %v1504 = vadd.f32 %v1239, %v1498
      %v1505 = vadd.f32 %v1240, %v1500
      %v1506 = vld [vmem:[%s401] sm:$0xff]
      %s1507 = scalar_lea.vmem %s383, 24
      %v1508 = vld [vmem:[%s1507] sm:$0xff]
      %s1509 = scalar_lea.vmem %s2, 1024
      %v1510 = vld [vmem:[%s1509] sm:$0xff]
      %v1511 = vld [vmem:[%s1509 + $0x8] sm:$0xff]
      %v1512 = vld [vmem:[%s1509 + $0x10] sm:$0xff]
      %v1513 = vld [vmem:[%s1509 + $0x18] sm:$0xff]
      %v1514 = vld [vmem:[%s1509 + $0x20] sm:$0xff]
      %v1515 = vld [vmem:[%s1509 + $0x28] sm:$0xff]
      %v1516 = vld [vmem:[%s1509 + $0x30] sm:$0xff]
      %v1517 = vld [vmem:[%s1509 + $0x38] sm:$0xff]
      %v1518 = vld [vmem:[%s1509 + $0x40] sm:$0xff]
      %v1519 = vld [vmem:[%s1509 + $0x48] sm:$0xff]
      %v1520 = vld [vmem:[%s1509 + $0x50] sm:$0xff]
      %v1521 = vld [vmem:[%s1509 + $0x58] sm:$0xff]
      %v1522 = vld [vmem:[%s1509 + $0x60] sm:$0xff]
      %v1523 = vld [vmem:[%s1509 + $0x68] sm:$0xff]
      %v1524 = vld [vmem:[%s1509 + $0x70] sm:$0xff]
      %v1525 = vld [vmem:[%s1509 + $0x78] sm:$0xff]
      %v1526 = vld [vmem:[%s1509 + $0x80] sm:$0xff]
      %v1527 = vld [vmem:[%s1509 + $0x88] sm:$0xff]
      %v1528 = vld [vmem:[%s1509 + $0x90] sm:$0xff]
      %v1529 = vld [vmem:[%s1509 + $0x98] sm:$0xff]
      %v1530 = vld [vmem:[%s1509 + $0xa0] sm:$0xff]
      %v1531 = vld [vmem:[%s1509 + $0xa8] sm:$0xff]
      %v1532 = vld [vmem:[%s1509 + $0xb0] sm:$0xff]
      %v1533 = vld [vmem:[%s1509 + $0xb8] sm:$0xff]
      %v1534 = vld [vmem:[%s1509 + $0xc0] sm:$0xff]
      %v1535 = vld [vmem:[%s1509 + $0xc8] sm:$0xff]
      %v1536 = vld [vmem:[%s1509 + $0xd0] sm:$0xff]
      %v1537 = vld [vmem:[%s1509 + $0xd8] sm:$0xff]
      %v1538 = vld [vmem:[%s1509 + $0xe0] sm:$0xff]
      %v1539 = vld [vmem:[%s1509 + $0xe8] sm:$0xff]
      %v1540 = vld [vmem:[%s1509 + $0xf0] sm:$0xff]
      %v1541 = vld [vmem:[%s1509 + $0xf8] sm:$0xff]
      %v1544 = vunpack.c.l.b16 %v1508
      %v1545 = vunpack.c.h.b16 %v1508
      %v1546 = vunpack.c.l.b16 %v1506
      %v1547 = vunpack.c.h.b16 %v1506
      %v1548 = vpack.c.b16 %v1546, %v1544
      %v1549 = vpack.c.b16 %v1547, %v1545
      %v1584 = vunpack.c.l.b16 %v1510
      %v1585 = vunpack.c.h.b16 %v1510
      %v1586 = vunpack.c.l.b16 %v1511
      %v1587 = vunpack.c.h.b16 %v1511
      %v1588 = vunpack.c.l.b16 %v1512
      %v1589 = vunpack.c.h.b16 %v1512
      %v1590 = vunpack.c.l.b16 %v1513
      %v1591 = vunpack.c.h.b16 %v1513
      %v1592 = vunpack.c.l.b16 %v1514
      %v1593 = vunpack.c.h.b16 %v1514
      %v1594 = vunpack.c.l.b16 %v1515
      %v1595 = vunpack.c.h.b16 %v1515
      %v1596 = vunpack.c.l.b16 %v1516
      %v1597 = vunpack.c.h.b16 %v1516
      %v1598 = vunpack.c.l.b16 %v1517
      %v1599 = vunpack.c.h.b16 %v1517
      %v1600 = vunpack.c.l.b16 %v1518
      %v1601 = vunpack.c.h.b16 %v1518
      %v1602 = vunpack.c.l.b16 %v1519
      %v1603 = vunpack.c.h.b16 %v1519
      %v1604 = vunpack.c.l.b16 %v1520
      %v1605 = vunpack.c.h.b16 %v1520
      %v1606 = vunpack.c.l.b16 %v1521
      %v1607 = vunpack.c.h.b16 %v1521
      %v1608 = vunpack.c.l.b16 %v1522
      %v1609 = vunpack.c.h.b16 %v1522
      %v1610 = vunpack.c.l.b16 %v1523
      %v1611 = vunpack.c.h.b16 %v1523
      %v1612 = vunpack.c.l.b16 %v1524
      %v1613 = vunpack.c.h.b16 %v1524
      %v1614 = vunpack.c.l.b16 %v1525
      %v1615 = vunpack.c.h.b16 %v1525
      %v1616 = vunpack.c.l.b16 %v1526
      %v1617 = vunpack.c.h.b16 %v1526
      %v1618 = vunpack.c.l.b16 %v1527
      %v1619 = vunpack.c.h.b16 %v1527
      %v1620 = vunpack.c.l.b16 %v1528
      %v1621 = vunpack.c.h.b16 %v1528
      %v1622 = vunpack.c.l.b16 %v1529
      %v1623 = vunpack.c.h.b16 %v1529
      %v1624 = vunpack.c.l.b16 %v1530
      %v1625 = vunpack.c.h.b16 %v1530
      %v1626 = vunpack.c.l.b16 %v1531
      %v1627 = vunpack.c.h.b16 %v1531
      %v1628 = vunpack.c.l.b16 %v1532
      %v1629 = vunpack.c.h.b16 %v1532
      %v1630 = vunpack.c.l.b16 %v1533
      %v1631 = vunpack.c.h.b16 %v1533
      %v1632 = vunpack.c.l.b16 %v1534
      %v1633 = vunpack.c.h.b16 %v1534
      %v1634 = vunpack.c.l.b16 %v1535
      %v1635 = vunpack.c.h.b16 %v1535
      %v1636 = vunpack.c.l.b16 %v1536
      %v1637 = vunpack.c.h.b16 %v1536
      %v1638 = vunpack.c.l.b16 %v1537
      %v1639 = vunpack.c.h.b16 %v1537
      %v1640 = vunpack.c.l.b16 %v1538
      %v1641 = vunpack.c.h.b16 %v1538
      %v1642 = vunpack.c.l.b16 %v1539
      %v1643 = vunpack.c.h.b16 %v1539
      %v1644 = vunpack.c.l.b16 %v1540
      %v1645 = vunpack.c.h.b16 %v1540
      %v1646 = vunpack.c.l.b16 %v1541
      %v1647 = vunpack.c.h.b16 %v1541
      %v1648 = vpack.c.b16 %v1586, %v1584
      %v1649 = vpack.c.b16 %v1587, %v1585
      %v1650 = vpack.c.b16 %v1590, %v1588
      %v1651 = vpack.c.b16 %v1591, %v1589
      %v1652 = vpack.c.b16 %v1594, %v1592
      %v1653 = vpack.c.b16 %v1595, %v1593
      %v1654 = vpack.c.b16 %v1598, %v1596
      %v1655 = vpack.c.b16 %v1599, %v1597
      %v1656 = vpack.c.b16 %v1602, %v1600
      %v1657 = vpack.c.b16 %v1603, %v1601
      %v1658 = vpack.c.b16 %v1606, %v1604
      %v1659 = vpack.c.b16 %v1607, %v1605
      %v1660 = vpack.c.b16 %v1610, %v1608
      %v1661 = vpack.c.b16 %v1611, %v1609
      %v1662 = vpack.c.b16 %v1614, %v1612
      %v1663 = vpack.c.b16 %v1615, %v1613
      %v1664 = vpack.c.b16 %v1618, %v1616
      %v1665 = vpack.c.b16 %v1619, %v1617
      %v1666 = vpack.c.b16 %v1622, %v1620
      %v1667 = vpack.c.b16 %v1623, %v1621
      %v1668 = vpack.c.b16 %v1626, %v1624
      %v1669 = vpack.c.b16 %v1627, %v1625
      %v1670 = vpack.c.b16 %v1630, %v1628
      %v1671 = vpack.c.b16 %v1631, %v1629
      %v1672 = vpack.c.b16 %v1634, %v1632
      %v1673 = vpack.c.b16 %v1635, %v1633
      %v1674 = vpack.c.b16 %v1638, %v1636
      %v1675 = vpack.c.b16 %v1639, %v1637
      %v1676 = vpack.c.b16 %v1642, %v1640
      %v1677 = vpack.c.b16 %v1643, %v1641
      %v1678 = vpack.c.b16 %v1646, %v1644
      %v1679 = vpack.c.b16 %v1647, %v1645
      %1712 = vmatprep.subr.bf16.mxu0 %v1663
      %1713 = vmatpush1.bf16.msra.mxu0 %v1662
      %1714 = vmatprep.subr.bf16.mxu0 %v1661
      %1715 = vmatpush1.bf16.msra.mxu0 %v1660
      %1716 = vmatprep.subr.bf16.mxu0 %v1659
      %1717 = vmatpush1.bf16.msra.mxu0 %v1658
      %1718 = vmatprep.subr.bf16.mxu0 %v1657
      %1719 = vmatpush1.bf16.msra.mxu0 %v1656
      %1720 = vmatprep.subr.bf16.mxu0 %v1655
      %1721 = vmatpush1.bf16.msra.mxu0 %v1654
      %1722 = vmatprep.subr.bf16.mxu0 %v1653
      %1723 = vmatpush1.bf16.msra.mxu0 %v1652
      %1724 = vmatprep.subr.bf16.mxu0 %v1651
      %1725 = vmatpush1.bf16.msra.mxu0 %v1650
      %1726 = vmatprep.subr.bf16.mxu0 %v1649
      %1727 = vmatpush1.bf16.msra.mxu0 %v1648
      %1728 = vmatprep.subr.bf16.mxu0 %v1679
      %1729 = vmatpush2.bf16.msra.mxu0 %v1678
      %1730 = vmatprep.subr.bf16.mxu0 %v1677
      %1731 = vmatpush2.bf16.msra.mxu0 %v1676
      %1732 = vmatprep.subr.bf16.mxu0 %v1675
      %1733 = vmatpush2.bf16.msra.mxu0 %v1674
      %1734 = vmatprep.subr.bf16.mxu0 %v1673
      %1735 = vmatpush2.bf16.msra.mxu0 %v1672
      %1736 = vmatprep.subr.bf16.mxu0 %v1671
      %1737 = vmatpush2.bf16.msra.mxu0 %v1670
      %1738 = vmatprep.subr.bf16.mxu0 %v1669
      %1739 = vmatpush2.bf16.msra.mxu0 %v1668
      %1740 = vmatprep.subr.bf16.mxu0 %v1667
      %1741 = vmatpush2.bf16.msra.mxu0 %v1666
      %1742 = vmatprep.subr.bf16.mxu0 %v1665
      %1743 = vmatpush2.bf16.msra.mxu0 %v1664
      %1744 = vmatprep.mubr.bf16.mxu0 %v1549
      %1745 = vmatmul.mubr.bf16.gmra.mxu0 %v1548
      %v1746 = vpop.f32.mrf.mxu0
      %v1747 = vadd.f32 0.0, %v1746
      %v1748 = vpop.f32.mrf.mxu0
      %v1749 = vadd.f32 0.0, %v1748
      %v1750 = vpop.f32.mrf.mxu0
      %v1751 = vadd.f32 0.0, %v1750
      %v1752 = vpop.f32.mrf.mxu0
      %v1753 = vadd.f32 0.0, %v1752
      %1754 = vdwg.mxu0
      %v1755 = vadd.f32 %v1502, %v1747
      %v1756 = vadd.f32 %v1503, %v1749
      %v1757 = vadd.f32 %v1504, %v1751
      %v1758 = vadd.f32 %v1505, %v1753
      %v1759 = vld [vmem:[%s401] sm:$0xff]
      %v1760 = vld [vmem:[%s401 + $0x8] sm:$0x11]
      %v1761 = vld [vmem:[%s1507] sm:$0xff]
      %v1762 = vld [vmem:[%s1507 + $0x8] sm:$0x11]
      %v1764 = vshrl.u32 %v1761, 16
      %v1766 = vrot.slane %v1764, 4
      %v1767 = vshll.u32 %v1761, 16
      %v1769 = vrot.slane %v1767, 5
      %v1770 = vor.u32 %v1766, %v1769
      %v1771 = vrot.slane %v1770, 4
      %v1773 = vshll.u32 %v1762, 16
      %v1775 = vrot.slane %v1773, 5
      %v1776 = vsel %vm475, %v1771, %v1775
      %v1778 = vshrl.u32 %v1759, 16
      %v1780 = vrot.slane %v1778, 4
      %v1781 = vshll.u32 %v1759, 16
      %v1783 = vrot.slane %v1781, 5
      %v1784 = vor.u32 %v1780, %v1783
      %v1785 = vrot.slane %v1784, 4
      %v1787 = vshll.u32 %v1760, 16
      %v1789 = vrot.slane %v1787, 5
      %v1790 = vsel %vm475, %v1785, %v1789
      %s1791 = scalar_lea.vmem %s2, 1280
      %v1792 = vld [vmem:[%s1791] sm:$0xff]
      %v1793 = vld [vmem:[%s1791 + $0x8] sm:$0xff]
      %v1794 = vld [vmem:[%s1791 + $0x10] sm:$0xff]
      %v1795 = vld [vmem:[%s1791 + $0x18] sm:$0xff]
      %v1796 = vld [vmem:[%s1791 + $0x20] sm:$0xff]
      %v1797 = vld [vmem:[%s1791 + $0x28] sm:$0xff]
      %v1798 = vld [vmem:[%s1791 + $0x30] sm:$0xff]
      %v1799 = vld [vmem:[%s1791 + $0x38] sm:$0xff]
      %v1800 = vld [vmem:[%s1791 + $0x40] sm:$0xff]
      %v1801 = vld [vmem:[%s1791 + $0x48] sm:$0xff]
      %v1802 = vld [vmem:[%s1791 + $0x50] sm:$0xff]
      %v1803 = vld [vmem:[%s1791 + $0x58] sm:$0xff]
      %v1804 = vld [vmem:[%s1791 + $0x60] sm:$0xff]
      %v1805 = vld [vmem:[%s1791 + $0x68] sm:$0xff]
      %v1806 = vld [vmem:[%s1791 + $0x70] sm:$0xff]
      %v1807 = vld [vmem:[%s1791 + $0x78] sm:$0xff]
      %v1808 = vld [vmem:[%s1791 + $0x80] sm:$0xff]
      %v1809 = vld [vmem:[%s1791 + $0x88] sm:$0xff]
      %v1810 = vld [vmem:[%s1791 + $0x90] sm:$0xff]
      %v1811 = vld [vmem:[%s1791 + $0x98] sm:$0xff]
      %v1812 = vld [vmem:[%s1791 + $0xa0] sm:$0xff]
      %v1813 = vld [vmem:[%s1791 + $0xa8] sm:$0xff]
      %v1814 = vld [vmem:[%s1791 + $0xb0] sm:$0xff]
      %v1815 = vld [vmem:[%s1791 + $0xb8] sm:$0xff]
      %v1816 = vld [vmem:[%s1791 + $0xc0] sm:$0xff]
      %v1817 = vld [vmem:[%s1791 + $0xc8] sm:$0xff]
      %v1818 = vld [vmem:[%s1791 + $0xd0] sm:$0xff]
      %v1819 = vld [vmem:[%s1791 + $0xd8] sm:$0xff]
      %v1820 = vld [vmem:[%s1791 + $0xe0] sm:$0xff]
      %v1821 = vld [vmem:[%s1791 + $0xe8] sm:$0xff]
      %v1822 = vld [vmem:[%s1791 + $0xf0] sm:$0xff]
      %v1823 = vld [vmem:[%s1791 + $0xf8] sm:$0xff]
      %v1824 = vunpack.c.l.b16 %v1776
      %v1825 = vunpack.c.h.b16 %v1776
      %v1826 = vunpack.c.l.b16 %v1790
      %v1827 = vunpack.c.h.b16 %v1790
      %v1828 = vpack.c.b16 %v1826, %v1824
      %v1829 = vpack.c.b16 %v1827, %v1825
      %v1864 = vunpack.c.l.b16 %v1792
      %v1865 = vunpack.c.h.b16 %v1792
      %v1866 = vunpack.c.l.b16 %v1793
      %v1867 = vunpack.c.h.b16 %v1793
      %v1868 = vunpack.c.l.b16 %v1794
      %v1869 = vunpack.c.h.b16 %v1794
      %v1870 = vunpack.c.l.b16 %v1795
      %v1871 = vunpack.c.h.b16 %v1795
      %v1872 = vunpack.c.l.b16 %v1796
      %v1873 = vunpack.c.h.b16 %v1796
      %v1874 = vunpack.c.l.b16 %v1797
      %v1875 = vunpack.c.h.b16 %v1797
      %v1876 = vunpack.c.l.b16 %v1798
      %v1877 = vunpack.c.h.b16 %v1798
      %v1878 = vunpack.c.l.b16 %v1799
      %v1879 = vunpack.c.h.b16 %v1799
      %v1880 = vunpack.c.l.b16 %v1800
      %v1881 = vunpack.c.h.b16 %v1800
      %v1882 = vunpack.c.l.b16 %v1801
      %v1883 = vunpack.c.h.b16 %v1801
      %v1884 = vunpack.c.l.b16 %v1802
      %v1885 = vunpack.c.h.b16 %v1802
      %v1886 = vunpack.c.l.b16 %v1803
      %v1887 = vunpack.c.h.b16 %v1803
      %v1888 = vunpack.c.l.b16 %v1804
      %v1889 = vunpack.c.h.b16 %v1804
      %v1890 = vunpack.c.l.b16 %v1805
      %v1891 = vunpack.c.h.b16 %v1805
      %v1892 = vunpack.c.l.b16 %v1806
      %v1893 = vunpack.c.h.b16 %v1806
      %v1894 = vunpack.c.l.b16 %v1807
      %v1895 = vunpack.c.h.b16 %v1807
      %v1896 = vunpack.c.l.b16 %v1808
      %v1897 = vunpack.c.h.b16 %v1808
      %v1898 = vunpack.c.l.b16 %v1809
      %v1899 = vunpack.c.h.b16 %v1809
      %v1900 = vunpack.c.l.b16 %v1810
      %v1901 = vunpack.c.h.b16 %v1810
      %v1902 = vunpack.c.l.b16 %v1811
      %v1903 = vunpack.c.h.b16 %v1811
      %v1904 = vunpack.c.l.b16 %v1812
      %v1905 = vunpack.c.h.b16 %v1812
      %v1906 = vunpack.c.l.b16 %v1813
      %v1907 = vunpack.c.h.b16 %v1813
      %v1908 = vunpack.c.l.b16 %v1814
      %v1909 = vunpack.c.h.b16 %v1814
      %v1910 = vunpack.c.l.b16 %v1815
      %v1911 = vunpack.c.h.b16 %v1815
      %v1912 = vunpack.c.l.b16 %v1816
      %v1913 = vunpack.c.h.b16 %v1816
      %v1914 = vunpack.c.l.b16 %v1817
      %v1915 = vunpack.c.h.b16 %v1817
      %v1916 = vunpack.c.l.b16 %v1818
      %v1917 = vunpack.c.h.b16 %v1818
      %v1918 = vunpack.c.l.b16 %v1819
      %v1919 = vunpack.c.h.b16 %v1819
      %v1920 = vunpack.c.l.b16 %v1820
      %v1921 = vunpack.c.h.b16 %v1820
      %v1922 = vunpack.c.l.b16 %v1821
      %v1923 = vunpack.c.h.b16 %v1821
      %v1924 = vunpack.c.l.b16 %v1822
      %v1925 = vunpack.c.h.b16 %v1822
      %v1926 = vunpack.c.l.b16 %v1823
      %v1927 = vunpack.c.h.b16 %v1823
      %v1928 = vpack.c.b16 %v1866, %v1864
      %v1929 = vpack.c.b16 %v1867, %v1865
      %v1930 = vpack.c.b16 %v1870, %v1868
      %v1931 = vpack.c.b16 %v1871, %v1869
      %v1932 = vpack.c.b16 %v1874, %v1872
      %v1933 = vpack.c.b16 %v1875, %v1873
      %v1934 = vpack.c.b16 %v1878, %v1876
      %v1935 = vpack.c.b16 %v1879, %v1877
      %v1936 = vpack.c.b16 %v1882, %v1880
      %v1937 = vpack.c.b16 %v1883, %v1881
      %v1938 = vpack.c.b16 %v1886, %v1884
      %v1939 = vpack.c.b16 %v1887, %v1885
      %v1940 = vpack.c.b16 %v1890, %v1888
      %v1941 = vpack.c.b16 %v1891, %v1889
      %v1942 = vpack.c.b16 %v1894, %v1892
      %v1943 = vpack.c.b16 %v1895, %v1893
      %v1944 = vpack.c.b16 %v1898, %v1896
      %v1945 = vpack.c.b16 %v1899, %v1897
      %v1946 = vpack.c.b16 %v1902, %v1900
      %v1947 = vpack.c.b16 %v1903, %v1901
      %v1948 = vpack.c.b16 %v1906, %v1904
      %v1949 = vpack.c.b16 %v1907, %v1905
      %v1950 = vpack.c.b16 %v1910, %v1908
      %v1951 = vpack.c.b16 %v1911, %v1909
      %v1952 = vpack.c.b16 %v1914, %v1912
      %v1953 = vpack.c.b16 %v1915, %v1913
      %v1954 = vpack.c.b16 %v1918, %v1916
      %v1955 = vpack.c.b16 %v1919, %v1917
      %v1956 = vpack.c.b16 %v1922, %v1920
      %v1957 = vpack.c.b16 %v1923, %v1921
      %v1958 = vpack.c.b16 %v1926, %v1924
      %v1959 = vpack.c.b16 %v1927, %v1925
      %1992 = vmatprep.subr.bf16.mxu0 %v1943
      %1993 = vmatpush1.bf16.msra.mxu0 %v1942
      %1994 = vmatprep.subr.bf16.mxu0 %v1941
      %1995 = vmatpush1.bf16.msra.mxu0 %v1940
      %1996 = vmatprep.subr.bf16.mxu0 %v1939
      %1997 = vmatpush1.bf16.msra.mxu0 %v1938
      %1998 = vmatprep.subr.bf16.mxu0 %v1937
      %1999 = vmatpush1.bf16.msra.mxu0 %v1936
      %2000 = vmatprep.subr.bf16.mxu0 %v1935
      %2001 = vmatpush1.bf16.msra.mxu0 %v1934
      %2002 = vmatprep.subr.bf16.mxu0 %v1933
      %2003 = vmatpush1.bf16.msra.mxu0 %v1932
      %2004 = vmatprep.subr.bf16.mxu0 %v1931
      %2005 = vmatpush1.bf16.msra.mxu0 %v1930
      %2006 = vmatprep.subr.bf16.mxu0 %v1929
      %2007 = vmatpush1.bf16.msra.mxu0 %v1928
      %2008 = vmatprep.subr.bf16.mxu0 %v1959
      %2009 = vmatpush2.bf16.msra.mxu0 %v1958
      %2010 = vmatprep.subr.bf16.mxu0 %v1957
      %2011 = vmatpush2.bf16.msra.mxu0 %v1956
      %2012 = vmatprep.subr.bf16.mxu0 %v1955
      %2013 = vmatpush2.bf16.msra.mxu0 %v1954
      %2014 = vmatprep.subr.bf16.mxu0 %v1953
      %2015 = vmatpush2.bf16.msra.mxu0 %v1952
      %2016 = vmatprep.subr.bf16.mxu0 %v1951
      %2017 = vmatpush2.bf16.msra.mxu0 %v1950
      %2018 = vmatprep.subr.bf16.mxu0 %v1949
      %2019 = vmatpush2.bf16.msra.mxu0 %v1948
      %2020 = vmatprep.subr.bf16.mxu0 %v1947
      %2021 = vmatpush2.bf16.msra.mxu0 %v1946
      %2022 = vmatprep.subr.bf16.mxu0 %v1945
      %2023 = vmatpush2.bf16.msra.mxu0 %v1944
      %2024 = vmatprep.mubr.bf16.mxu0 %v1829
      %2025 = vmatmul.mubr.bf16.gmra.mxu0 %v1828
      %v2026 = vpop.f32.mrf.mxu0
      %v2027 = vadd.f32 0.0, %v2026
      %v2028 = vpop.f32.mrf.mxu0
      %v2029 = vadd.f32 0.0, %v2028
      %v2030 = vpop.f32.mrf.mxu0
      %v2031 = vadd.f32 0.0, %v2030
      %v2032 = vpop.f32.mrf.mxu0
      %v2033 = vadd.f32 0.0, %v2032
      %2034 = vdwg.mxu0
      %v2035 = vadd.f32 %v1755, %v2027
      %v2036 = vadd.f32 %v1756, %v2029
      %v2037 = vadd.f32 %v1757, %v2031
      %v2038 = vadd.f32 %v1758, %v2033
      %v2039 = vpack.c.bf16 %v2037, %v2035
      %v2040 = vpack.c.bf16 %v2038, %v2036
      %v2043 = vunpack.c.l.b16 %v2039
      %v2044 = vunpack.c.l.b16 %v2040
      %v2045 = vunpack.c.h.b16 %v2039
      %v2046 = vunpack.c.h.b16 %v2040
      %v2047 = vpack.c.b16 %v2044, %v2043
      %v2048 = vpack.c.b16 %v2046, %v2045
      %2051 = vst [vmem:[%s419] sm:$0xff] %v2047
      %2052 = vst [vmem:[%s419 + $0x8] sm:$0xff] %v2048
      %v2053 = vld [vmem:[%s408] sm:$0xff]
      %v2054 = vld [vmem:[%s408 + $0x8] sm:$0xff]
      %2056 = vset.pattern.permute.xlu0 0
      %2057 = vperm.xlu0 %2056, %v2053
      %v2058 = vpop.permute.xlu0 %2057
      %2061 = vset.pattern.permute.xlu0 0
      %2062 = vperm.xlu0 %2061, %v2054
      %v2063 = vpop.permute.xlu0 %2062
      %v2065 = vmul.f32 %v2035, %v2058
      %v2066 = vmul.f32 %v2036, %v2058
      %v2067 = vmul.f32 %v2037, %v2063
      %v2068 = vmul.f32 %v2038, %v2063
      %v2069 = vadd.f32 %v2065, %v2067
      %v2070 = vrot.slane %v2069, 4
      %v2071 = vadd.f32 %v2069, %v2070
      %v2072 = vrot.slane %v2071, 2
      %v2073 = vadd.f32 %v2071, %v2072
      %v2074 = vrot.slane %v2073, 1
      %v2075 = vadd.f32 %v2073, %v2074
      %v2076 = vadd.f32 %v2066, %v2068
      %v2077 = vrot.slane %v2076, 4
      %v2078 = vadd.f32 %v2076, %v2077
      %v2079 = vrot.slane %v2078, 2
      %v2080 = vadd.f32 %v2078, %v2079
      %v2081 = vrot.slane %v2080, 1
      %v2082 = vadd.f32 %v2080, %v2081
      %v2085 = vcombine.low %v2075, %v2082
      %v2087 = vunpack.c.l.s4 1966171168
      %v2088 = vunpack.c.0.s8 %v2087
      %v2089 = vlaneseq
      %v2090 = vshrl.u32 %v2089, 7
      %v2091 = vsub.s32 %v2088, %v2090
      %v2092 = vrot.slane %v2085, %v2091
      %v2094 = vunpack.c.l.s4 1966171168
      %v2095 = vunpack.c.0.s8 %v2094
      %v2096 = vlaneseq
      %v2097 = vshrl.u32 %v2096, 7
      %v2098 = vsub.s32 %v2095, %v2097
      %v2099 = vrot.slane %v2092, %v2098
      %v2101 = vlaneseq
      %vm2102 = vcmp.ge.s32.totalorder %v2101, 0
      %vm2103 = vcmp.lt.s32.totalorder %v2101, 256
      %vm2104 = vmand %vm2102, %vm2103
      %2105 = vst.msk [vmem:[%s428] sm:$0x3] %vm2104, %v2099
      %v2106 = vmul.f32 %v2065, %v2035
      %v2107 = vmul.f32 %v2066, %v2036
      %v2108 = vmul.f32 %v2067, %v2037
      %v2109 = vmul.f32 %v2068, %v2038
      %v2110 = vadd.f32 %v2106, %v2108
      %v2111 = vrot.slane %v2110, 4
      %v2112 = vadd.f32 %v2110, %v2111
      %v2113 = vrot.slane %v2112, 2
      %v2114 = vadd.f32 %v2112, %v2113
      %v2115 = vrot.slane %v2114, 1
      %v2116 = vadd.f32 %v2114, %v2115
      %v2117 = vadd.f32 %v2107, %v2109
      %v2118 = vrot.slane %v2117, 4
      %v2119 = vadd.f32 %v2117, %v2118
      %v2120 = vrot.slane %v2119, 2
      %v2121 = vadd.f32 %v2119, %v2120
      %v2122 = vrot.slane %v2121, 1
      %v2123 = vadd.f32 %v2121, %v2122
      %v2126 = vcombine.low %v2116, %v2123
      %v2128 = vunpack.c.l.s4 1966171168
      %v2129 = vunpack.c.0.s8 %v2128
      %v2130 = vlaneseq
      %v2131 = vshrl.u32 %v2130, 7
      %v2132 = vsub.s32 %v2129, %v2131
      %v2133 = vrot.slane %v2126, %v2132
      %v2135 = vunpack.c.l.s4 1966171168
      %v2136 = vunpack.c.0.s8 %v2135
      %v2137 = vlaneseq
      %v2138 = vshrl.u32 %v2137, 7
      %v2139 = vsub.s32 %v2136, %v2138
      %v2140 = vrot.slane %v2133, %v2139
      %2142 = vst.msk [vmem:[%s436] sm:$0x3] %vm2104, %v2140
      %s2143 = smul.u32 2, %s23
      %p2144 = scmp.lt.s32.totalorder %s22, 1
      %s2145 = scalar_select %p2144, %s22, 1
      %p2146 = scmp.lt.s32.totalorder %s2143, 1
      %s2147 = scalar_select %p2146, %s2143, 1
      %s2148 = smul.addr %s2147, 2
      %s2149 = smul.addr %s2145, 4
      %s2150 = sadd.s32 %s2148, %s2149
      %s2151 = smul.addr %s2150, 4
      %s2152 = scalar_lea.vmem %s4, %s2151
      %p2153 = scmp.lt.s32.totalorder %s22, 1
      %s2154 = scalar_select %p2153, %s22, 1
      %p2155 = scmp.lt.s32.totalorder %s23, 0
      %s2156 = scalar_select %p2155, %s23, 0
      %s2157 = smul.addr %s2156, 2
      %s2158 = smul.addr %s2154, 2
      %s2159 = sadd.s32 %s2157, %s2158
      %s2160 = scalar_lea.vmem %s5, %s2159
      %p2161 = scmp.lt.s32.totalorder %s22, 1
      %s2162 = scalar_select %p2161, %s22, 1
      %p2163 = scmp.lt.s32.totalorder %s23, 0
      %s2164 = scalar_select %p2163, %s23, 0
      %s2165 = smul.addr %s2164, 2
      %s2166 = smul.addr %s2162, 2
      %s2167 = sadd.s32 %s2165, %s2166
      %s2168 = scalar_lea.vmem %s6, %s2167
      // Predicated region
      $region37: #{spatial_path.6} parent=35 // pred_check
        %p2169 = pneg %p157
      $region38: #{spatial_path.6} parent=35 // pred_check_branch
        %2171 = sbr.rel (%p2169) target = $region40
      $region39: #{spatial_path.6} parent=35 // pred_region
        %s2172 = smul.u32 2, %s23
      $region40: #{spatial_path.6} parent=35 // pred_fallthru
        _
      // Predicated region
      $region41: #{spatial_path.6} parent=35 // pred_check
        %p2173 = pneg %p185
      $region42: #{spatial_path.6} parent=35 // pred_check_branch
        %2175 = sbr.rel (%p2173) target = $region44
      $region43: #{spatial_path.6} parent=35 // pred_region
        _
      $region44: #{spatial_path.6} parent=35 // pred_fallthru
        _
      // Predicated region
      $region45: #{spatial_path.6} parent=35 // pred_check
        %p2176 = pneg %p213
      $region46: #{spatial_path.6} parent=35 // pred_check_branch
        %2178 = sbr.rel (%p2176) target = $region48
      $region47: #{spatial_path.6} parent=35 // pred_region
        _
      $region48: #{spatial_path.6} parent=35 // pred_fallthru
        _
    $region36: #{spatial_path.6} parent=5 // pred_fallthru
      _
    %p2179 = scmp.le.s32.totalorder 2, %s13
    // Predicated region
    $region49: #{spatial_path.6} parent=5 // pred_check
      %p2180 = pneg %p2179
    $region50: #{spatial_path.6} parent=5 // pred_check_branch
      %2182 = sbr.rel (%p2180) target = $region52
    $region51: #{spatial_path.6} parent=5 // pred_region
      %s2183 = ssub.s32 %s13, 2
      // Predicated region
      $region53: #{spatial_path.6} parent=51 // pred_check
        %p2184 = pneg %p163
      $region54: #{spatial_path.6} parent=51 // pred_check_branch
        %2186 = sbr.rel (%p2184) target = $region56
      $region55: #{spatial_path.6} parent=51 // pred_region
        %s2187 = smul.u32 2, %s25
        %p2188 = scmp.lt.s32.totalorder %s24, 1
        %s2189 = scalar_select %p2188, %s24, 1
        %p2190 = scmp.lt.s32.totalorder %s2187, 1
        %s2191 = scalar_select %p2190, %s2187, 1
        %s2192 = smul.addr %s2191, 2
        %s2193 = smul.addr %s2189, 4
        %s2194 = sadd.s32 %s2192, %s2193
        %s2195 = smul.addr %s2194, 4
        %s2196 = scalar_lea.vmem %s4, %s2195
      $region56: #{spatial_path.6} parent=51 // pred_fallthru
        _
      // Predicated region
      $region57: #{spatial_path.6} parent=51 // pred_check
        %p2197 = pneg %p191
      $region58: #{spatial_path.6} parent=51 // pred_check_branch
        %2199 = sbr.rel (%p2197) target = $region60
      $region59: #{spatial_path.6} parent=51 // pred_region
        %p2200 = scmp.lt.s32.totalorder %s24, 1
        %s2201 = scalar_select %p2200, %s24, 1
        %p2202 = scmp.lt.s32.totalorder %s25, 0
        %s2203 = scalar_select %p2202, %s25, 0
        %s2204 = smul.addr %s2203, 2
        %s2205 = smul.addr %s2201, 2
        %s2206 = sadd.s32 %s2204, %s2205
        %s2207 = scalar_lea.vmem %s5, %s2206
      $region60: #{spatial_path.6} parent=51 // pred_fallthru
        _
      // Predicated region
      $region61: #{spatial_path.6} parent=51 // pred_check
        %p2208 = pneg %p219
      $region62: #{spatial_path.6} parent=51 // pred_check_branch
        %2210 = sbr.rel (%p2208) target = $region64
      $region63: #{spatial_path.6} parent=51 // pred_region
        %p2211 = scmp.lt.s32.totalorder %s24, 1
        %s2212 = scalar_select %p2211, %s24, 1
        %p2213 = scmp.lt.s32.totalorder %s25, 0
        %s2214 = scalar_select %p2213, %s25, 0
        %s2215 = smul.addr %s2214, 2
        %s2216 = smul.addr %s2212, 2
        %s2217 = sadd.s32 %s2215, %s2216
        %s2218 = scalar_lea.vmem %s6, %s2217
      $region64: #{spatial_path.6} parent=51 // pred_fallthru
        _
    $region52: #{spatial_path.6} parent=5 // pred_fallthru
      _
  $region6: #{spatial_path.6} parent=0 // loop_footer
    %s17 = sadd.s32 1, %s13
  $region7: #{spatial_path.6} parent=0 // loop_footer_branch
    %12 = sbr.rel target = $region3
  $region8: #{spatial_path.6} parent=0 // loop_exit
    _

</llo_original>
